<compile_context>
chip_gen: v6e
topology: v6e:2x2x1
jax: 0.10.0
libtpu: 0.0.40
codegen_flags: <defaults>
</compile_context>

<pallas_src>
import functools

import jax
import jax.numpy as jnp
from jax import lax
from jax.experimental import pallas as pl
from jax.experimental.pallas import tpu as pltpu

EPS = 1e-5


def _round_up(x, m):
    return (x + m - 1) // m * m


def _vmem_capacity_bytes():
    """Physical VMEM per TensorCore; conservative fallback if query fails."""
    try:
        info = pltpu.get_tpu_info()
        cap = getattr(info, "vmem_capacity_bytes", None)
        if cap:
            return int(cap)
    except Exception:
        pass
    return 64 << 20  # safe on every generation (v7x has 64 MiB / TC)


def _downsample_kernel(x_ref, w_ref, g_ref, b_ref, o_ref, *, inv_count):
    # x_ref: (Nb, 4, Hop, Wop, Cinp)  bf16 polyphase input,
    #        x_ref[s, 2*rp+cp, i, j, :] == x_padded[s, 2*i+rp, 2*j+cp, :]
    # w_ref: (9*Cinp, Coutp)          bf16 conv weight, row = (kh*3+kw)*Cinp + ci
    # g_ref, b_ref: (1, Coutp)        f32 GroupNorm gamma / beta (zero padded)
    # o_ref: (Nb, HW, Coutp)          output block for this grid step
    nb, _, hop, wop, cinp = x_ref.shape
    ho, wo = hop - 1, wop - 1
    hw = ho * wo

    # Grid-invariant operands: load once, reuse for all samples in the block.
    w = w_ref[...]                       # [9*Cinp, Coutp]
    g = g_ref[...]                       # [1, Coutp]
    b = b_ref[...]                       # [1, Coutp]

    for s in range(nb):
        xv = x_ref[s]                    # [4, Hop, Wop, Cinp]

        # In-VMEM im2col: 9 shifted polyphase taps -> one lane-dense
        # [HW, 9*Cinp] LHS (each 128-aligned chunk is a plain lane-tile copy).
        taps = []
        for kh in range(3):
            for kw in range(3):
                p = (kh % 2) * 2 + (kw % 2)
                dh, dw = kh // 2, kw // 2
                tap = xv[p, dh:dh + ho, dw:dw + wo, :]      # [Ho, Wo, Cinp]
                taps.append(tap.reshape(hw, cinp))
        lhs = jnp.concatenate(taps, axis=-1)                # [HW, 9*Cinp]

        # Conv2d(k=3, s=2, p=1) as a single K = 9*Cinp GEMM on the MXU,
        # f32 accumulation inside the MXU.
        y = jnp.dot(lhs, w, preferred_element_type=jnp.float32)  # [HW, Coutp]

        # GroupNorm(num_groups=1): per-sample one-pass stats in f32.  Padded
        # output channels of y are exactly zero (zero weight columns), so we
        # divide by the true element count HW * Cout.
        s1 = jnp.sum(y)
        s2 = jnp.sum(y * y)
        mean = s1 * inv_count
        var = s2 * inv_count - mean * mean
        inv = lax.rsqrt(var + EPS)

        # Fused affine epilogue; padded channels get scale = shift = 0.
        scale = g * inv                      # [1, Coutp]
        shift = b - mean * scale             # [1, Coutp]
        o_ref[s] = (y * scale + shift).astype(o_ref.dtype)


def downsample_layer(x_nchw, conv_w, gamma, beta, *, compute_dtype=jnp.bfloat16):
    """x_nchw: [N, C, H, W]; conv_w: [2C, C, 3, 3]; gamma/beta: [2C].
    Returns [N, 2C, Ho, Wo] matching the PyTorch DownsampleLayer forward."""
    N, C, H, W = x_nchw.shape
    Cout = conv_w.shape[0]
    Ho = (H + 2 - 3) // 2 + 1
    Wo = (W + 2 - 3) // 2 + 1
    Hop, Wop = Ho + 1, Wo + 1
    HW = Ho * Wo
    Cinp = _round_up(C, 128)
    Coutp = _round_up(Cout, 128)

    # ---- polyphase, zero-padded input (one HBM copy; no 9x im2col in HBM) --
    # TODO(synk): pass padded NHWC directly and do the stride-2 polyphase
    # extraction in-kernel (pl.ds with stride=2) to drop this wrapper copy,
    # and keep NHWC/channel-padded output downstream to drop the final
    # transpose; kept here to preserve the module's NCHW interface exactly.
    x_nhwc = jnp.transpose(x_nchw, (0, 2, 3, 1))
    xpad = jnp.pad(x_nhwc, ((0, 0),
                            (1, 2 * Hop - 1 - H),    # conv pad=1 top, zeros below
                            (1, 2 * Wop - 1 - W),    # conv pad=1 left, zeros right
                            (0, Cinp - C)))          # lane-dense Cin padding
    # xph[n, 2*rp + cp, i, j, c] == xpad[n, 2*i + rp, 2*j + cp, c]
    xph = xpad.reshape(N, Hop, 2, Wop, 2, Cinp).transpose(0, 2, 4, 1, 3, 5)
    xph = xph.reshape(N, 4, Hop, Wop, Cinp).astype(compute_dtype)

    # ---- weight reshaped for the folded K = 9*Cinp GEMM; affine params -----
    w9 = jnp.transpose(conv_w, (2, 3, 1, 0))                     # [3,3,Cin,Cout]
    w9 = jnp.pad(w9, ((0, 0), (0, 0), (0, Cinp - C), (0, Coutp - Cout)))
    wk = w9.reshape(9 * Cinp, Coutp).astype(compute_dtype)       # row = t*Cinp+ci
    g2 = jnp.pad(gamma, (0, Coutp - Cout)).reshape(1, Coutp).astype(jnp.float32)
    b2 = jnp.pad(beta, (0, Coutp - Cout)).reshape(1, Coutp).astype(jnp.float32)

    out_dtype = x_nchw.dtype
    out_isz = jnp.dtype(out_dtype).itemsize

    # ---- generation-aware VMEM budget, tile-padded block-size estimate -----
    sub8 = lambda v: _round_up(v, 8)
    in_blk = 4 * Hop * sub8(Wop) * Cinp * 2          # per sample, bf16
    out_blk = sub8(HW) * Coutp * out_isz             # per sample
    w_blk = sub8(9 * Cinp) * Coutp * 2
    gb_blk = 2 * 8 * Coutp * 4
    lhs_blk = sub8(HW) * 9 * Cinp * 2                # in-kernel im2col LHS
    acc_blk = sub8(HW) * Coutp * 4                   # f32 conv result

    vmem_budget = int(0.8 * _vmem_capacity_bytes())

    def est(nb):
        return (2 * nb * (in_blk + out_blk) + 2 * w_blk + 2 * gb_blk
                + lhs_blk + acc_blk + (6 << 20))

    # Largest divisor of N whose blocks fit the budget (amortizes the
    # ~0.35 us/step overhead and produces bigger, more efficient DMAs).
    Nb = 1
    for nb in range(1, min(N, 16) + 1):
        if N % nb == 0 and est(nb) <= vmem_budget:
            Nb = nb
    vmem_limit = int(min(max(est(Nb), 32 << 20), vmem_budget))

    kernel = functools.partial(_downsample_kernel, inv_count=1.0 / (HW * Cout))

    # TODO(synk): on v7x with N == 1 add a second "parallel" grid axis (HW
    # split with a two-phase GroupNorm: accumulate per-half s1/s2, combine,
    # then normalize) so both TensorCores get work; the same HW tiling also
    # covers detection-scale shapes whose per-sample blocks exceed VMEM.

    def build(single_buffer_invariants):
        pkw = ({"pipeline_mode": pl.Buffered(buffer_count=1)}
               if single_buffer_invariants else {})
        return pl.pallas_call(
            kernel,
            out_shape=jax.ShapeDtypeStruct((N, HW, Coutp), out_dtype),
            grid_spec=pltpu.PrefetchScalarGridSpec(
                num_scalar_prefetch=0,
                grid=(N // Nb,),
                in_specs=[
                    pl.BlockSpec((Nb, 4, Hop, Wop, Cinp),
                                 lambda n: (n, 0, 0, 0, 0)),
                    pl.BlockSpec((9 * Cinp, Coutp), lambda n: (0, 0), **pkw),
                    pl.BlockSpec((1, Coutp), lambda n: (0, 0), **pkw),
                    pl.BlockSpec((1, Coutp), lambda n: (0, 0), **pkw),
                ],
                out_specs=pl.BlockSpec((Nb, HW, Coutp), lambda n: (n, 0, 0)),
            ),
            compiler_params=pltpu.CompilerParams(
                dimension_semantics=("parallel",),
                vmem_limit_bytes=vmem_limit,
            ),
        )

    try:
        out = build(True)(xph, wk, g2, b2)
        out.block_until_ready()
    except Exception:
        # Installed JAX rejected single-buffered invariant operands: fall back
        # to default (double) buffering; correctness is identical.
        out = build(False)(xph, wk, g2, b2)

    out = out[:, :, :Cout].reshape(N, Ho, Wo, Cout)
    return jnp.transpose(out, (0, 3, 1, 2))


def _reference(x_nchw, conv_w, gamma, beta):
    """Pure-JAX f32 reference (lax conv + GroupNorm with 1 group)."""
    y = lax.conv_general_dilated(
        x_nchw, conv_w, window_strides=(2, 2), padding=((1, 1), (1, 1)),
        dimension_numbers=("NCHW", "OIHW", "NCHW"))
    N = y.shape[0]
    yf = y.reshape(N, -1)
    mean = yf.mean(axis=1, keepdims=True)
    var = ((yf - mean) ** 2).mean(axis=1, keepdims=True)
    yhat = ((yf - mean) / jnp.sqrt(var + EPS)).reshape(y.shape)
    return yhat * gamma.reshape(1, -1, 1, 1) + beta.reshape(1, -1, 1, 1)


if __name__ == "__main__":
    key = jax.random.PRNGKey(0)
    k_x, k_w, k_g, k_b = jax.random.split(key, 4)

    N, C, H, W = 2, 4, 16, 16
    Cout = 2 * C

    x = jax.random.normal(k_x, (N, C, H, W), dtype=jnp.float32)
    conv_w = 0.1 * jax.random.normal(k_w, (Cout, C, 3, 3), dtype=jnp.float32)
    gamma = 1.0 + 0.1 * jax.random.normal(k_g, (Cout,), dtype=jnp.float32)
    beta = 0.1 * jax.random.normal(k_b, (Cout,), dtype=jnp.float32)

    out = downsample_layer(x, conv_w, gamma, beta)
    jax.block_until_ready(out)

    ref = _reference(x, conv_w, gamma, beta)
    assert out.shape == (N, Cout, H // 2, W // 2), out.shape
    # bf16 MXU operands with f32 accumulation -> bf16-appropriate tolerance
    # against the pure-f32 reference.
    assert jnp.allclose(out, ref, atol=5e-2, rtol=5e-2), float(jnp.abs(out - ref).max())

    print("KERNEL_OK")
</pallas_src>

<mosaic_0001>
module attributes {stable_mosaic.version = 11 : i64} {
  func.func @_downsample_kernel(%arg0: i32, %arg1: memref<2x4x9x9x128xbf16, #tpu.memory_space<vmem>>, %arg2: memref<1152x128xbf16, #tpu.memory_space<vmem>>, %arg3: memref<1x128xf32, #tpu.memory_space<vmem>>, %arg4: memref<1x128xf32, #tpu.memory_space<vmem>>, %arg5: memref<2x64x128xf32, #tpu.memory_space<vmem>>) attributes {dimension_semantics = [#tpu.dimension_semantics<parallel>], iteration_bounds = array<i64: 1>, scalar_prefetch = 0 : i64, scratch_operands = 0 : i64, tpu.core_type = #tpu.core_type<tc>, window_params = [{transform_indices = @transform_0, window_bounds = array<i64: 2, 4, 9, 9, 128>}, {pipeline_mode = #tpu.pipeline_mode<synchronous>, transform_indices = @transform_1, window_bounds = array<i64: 1152, 128>}, {pipeline_mode = #tpu.pipeline_mode<synchronous>, transform_indices = @transform_2, window_bounds = array<i64: 1, 128>}, {pipeline_mode = #tpu.pipeline_mode<synchronous>, transform_indices = @transform_3, window_bounds = array<i64: 1, 128>}, {transform_indices = @transform_4, window_bounds = array<i64: 2, 64, 128>}]} {
    %c0 = arith.constant 0 : index
    %c0_0 = arith.constant 0 : index
    %0 = vector.load %arg2[%c0, %c0_0] : memref<1152x128xbf16, #tpu.memory_space<vmem>>, vector<1152x128xbf16>
    %c0_1 = arith.constant 0 : index
    %c0_2 = arith.constant 0 : index
    %1 = vector.load %arg3[%c0_1, %c0_2] : memref<1x128xf32, #tpu.memory_space<vmem>>, vector<1x128xf32>
    %c0_3 = arith.constant 0 : index
    %c0_4 = arith.constant 0 : index
    %2 = vector.load %arg4[%c0_3, %c0_4] : memref<1x128xf32, #tpu.memory_space<vmem>>, vector<1x128xf32>
    %c0_5 = arith.constant 0 : index
    %c0_6 = arith.constant 0 : index
    %c0_7 = arith.constant 0 : index
    %c0_8 = arith.constant 0 : index
    %c0_9 = arith.constant 0 : index
    %3 = vector.load %arg1[%c0_5, %c0_6, %c0_7, %c0_8, %c0_9] : memref<2x4x9x9x128xbf16, #tpu.memory_space<vmem>>, vector<1x4x9x9x128xbf16>
    %4 = vector.shape_cast %3 : vector<1x4x9x9x128xbf16> to vector<4x9x9x128xbf16>
    %5 = vector.extract_strided_slice %4 {offsets = [0, 0, 0, 0], sizes = [1, 8, 8, 128], strides = [1, 1, 1, 1]} : vector<4x9x9x128xbf16> to vector<1x8x8x128xbf16>
    %6 = vector.shape_cast %5 : vector<1x8x8x128xbf16> to vector<8x8x128xbf16>
    %7 = vector.shape_cast %6 : vector<8x8x128xbf16> to vector<64x128xbf16>
    %8 = vector.extract_strided_slice %4 {offsets = [1, 0, 0, 0], sizes = [1, 8, 8, 128], strides = [1, 1, 1, 1]} : vector<4x9x9x128xbf16> to vector<1x8x8x128xbf16>
    %9 = vector.shape_cast %8 : vector<1x8x8x128xbf16> to vector<8x8x128xbf16>
    %10 = vector.shape_cast %9 : vector<8x8x128xbf16> to vector<64x128xbf16>
    %11 = vector.extract_strided_slice %4 {offsets = [0, 0, 1, 0], sizes = [1, 8, 8, 128], strides = [1, 1, 1, 1]} : vector<4x9x9x128xbf16> to vector<1x8x8x128xbf16>
    %12 = vector.shape_cast %11 : vector<1x8x8x128xbf16> to vector<8x8x128xbf16>
    %13 = vector.shape_cast %12 : vector<8x8x128xbf16> to vector<64x128xbf16>
    %14 = vector.extract_strided_slice %4 {offsets = [2, 0, 0, 0], sizes = [1, 8, 8, 128], strides = [1, 1, 1, 1]} : vector<4x9x9x128xbf16> to vector<1x8x8x128xbf16>
    %15 = vector.shape_cast %14 : vector<1x8x8x128xbf16> to vector<8x8x128xbf16>
    %16 = vector.shape_cast %15 : vector<8x8x128xbf16> to vector<64x128xbf16>
    %17 = vector.extract_strided_slice %4 {offsets = [3, 0, 0, 0], sizes = [1, 8, 8, 128], strides = [1, 1, 1, 1]} : vector<4x9x9x128xbf16> to vector<1x8x8x128xbf16>
    %18 = vector.shape_cast %17 : vector<1x8x8x128xbf16> to vector<8x8x128xbf16>
    %19 = vector.shape_cast %18 : vector<8x8x128xbf16> to vector<64x128xbf16>
    %20 = vector.extract_strided_slice %4 {offsets = [2, 0, 1, 0], sizes = [1, 8, 8, 128], strides = [1, 1, 1, 1]} : vector<4x9x9x128xbf16> to vector<1x8x8x128xbf16>
    %21 = vector.shape_cast %20 : vector<1x8x8x128xbf16> to vector<8x8x128xbf16>
    %22 = vector.shape_cast %21 : vector<8x8x128xbf16> to vector<64x128xbf16>
    %23 = vector.extract_strided_slice %4 {offsets = [0, 1, 0, 0], sizes = [1, 8, 8, 128], strides = [1, 1, 1, 1]} : vector<4x9x9x128xbf16> to vector<1x8x8x128xbf16>
    %24 = vector.shape_cast %23 : vector<1x8x8x128xbf16> to vector<8x8x128xbf16>
    %25 = vector.shape_cast %24 : vector<8x8x128xbf16> to vector<64x128xbf16>
    %26 = vector.extract_strided_slice %4 {offsets = [1, 1, 0, 0], sizes = [1, 8, 8, 128], strides = [1, 1, 1, 1]} : vector<4x9x9x128xbf16> to vector<1x8x8x128xbf16>
    %27 = vector.shape_cast %26 : vector<1x8x8x128xbf16> to vector<8x8x128xbf16>
    %28 = vector.shape_cast %27 : vector<8x8x128xbf16> to vector<64x128xbf16>
    %29 = vector.extract_strided_slice %4 {offsets = [0, 1, 1, 0], sizes = [1, 8, 8, 128], strides = [1, 1, 1, 1]} : vector<4x9x9x128xbf16> to vector<1x8x8x128xbf16>
    %30 = vector.shape_cast %29 : vector<1x8x8x128xbf16> to vector<8x8x128xbf16>
    %31 = vector.shape_cast %30 : vector<8x8x128xbf16> to vector<64x128xbf16>
    %32 = tpu.concatenate %7, %10, %13, %16, %19, %22, %25, %28, %31 in 1 : vector<64x128xbf16>, vector<64x128xbf16>, vector<64x128xbf16>, vector<64x128xbf16>, vector<64x128xbf16>, vector<64x128xbf16>, vector<64x128xbf16>, vector<64x128xbf16>, vector<64x128xbf16> -> vector<64x1152xbf16>
    %cst = arith.constant dense<0.000000e+00> : vector<64x128xf32>
    %33 = tpu.matmul %32, %0, %cst {dimension_numbers = #tpu.dot_dimension_numbers<[1], [0], [0], [1], [0, 0, 1, 1], [], []>} : vector<64x1152xbf16>, vector<1152x128xbf16>, vector<64x128xf32> -> vector<64x128xf32>
    %34 = vector.shape_cast %33 : vector<64x128xf32> to vector<1x64x128xf32>
    %cst_10 = arith.constant dense<0.000000e+00> : vector<1xf32>
    %35 = vector.multi_reduction <add>, %34, %cst_10 [1, 2] : vector<1x64x128xf32> to vector<1xf32>
    %36 = vector.shape_cast %35 : vector<1xf32> to vector<1x1x1xf32>
    %37 = vector.extract %36[0, 0, 0] : f32 from vector<1x1x1xf32>
    %38 = arith.mulf %33, %33 : vector<64x128xf32>
    %39 = vector.shape_cast %38 : vector<64x128xf32> to vector<1x64x128xf32>
    %cst_11 = arith.constant dense<0.000000e+00> : vector<1xf32>
    %40 = vector.multi_reduction <add>, %39, %cst_11 [1, 2] : vector<1x64x128xf32> to vector<1xf32>
    %41 = vector.shape_cast %40 : vector<1xf32> to vector<1x1x1xf32>
    %42 = vector.extract %41[0, 0, 0] : f32 from vector<1x1x1xf32>
    %cst_12 = arith.constant 0.001953125 : f32
    %43 = arith.mulf %37, %cst_12 : f32
    %cst_13 = arith.constant 0.001953125 : f32
    %44 = arith.mulf %42, %cst_13 : f32
    %45 = arith.mulf %43, %43 : f32
    %46 = arith.subf %44, %45 : f32
    %cst_14 = arith.constant 9.99999974E-6 : f32
    %47 = arith.addf %46, %cst_14 : f32
    %48 = math.rsqrt %47 : f32
    %49 = vector.broadcast %48 : f32 to vector<1x128xf32>
    %50 = arith.mulf %1, %49 : vector<1x128xf32>
    %51 = vector.broadcast %43 : f32 to vector<1x128xf32>
    %52 = arith.mulf %51, %50 : vector<1x128xf32>
    %53 = arith.subf %2, %52 : vector<1x128xf32>
    %54 = vector.broadcast %50 : vector<1x128xf32> to vector<64x128xf32>
    %55 = arith.mulf %33, %54 : vector<64x128xf32>
    %56 = vector.broadcast %53 : vector<1x128xf32> to vector<64x128xf32>
    %57 = arith.addf %55, %56 : vector<64x128xf32>
    %c0_15 = arith.constant 0 : index
    %c0_16 = arith.constant 0 : index
    %c0_17 = arith.constant 0 : index
    %58 = vector.load %arg5[%c0_15, %c0_16, %c0_17] : memref<2x64x128xf32, #tpu.memory_space<vmem>>, vector<1x64x128xf32>
    %59 = vector.shape_cast %58 : vector<1x64x128xf32> to vector<64x128xf32>
    %60 = vector.shape_cast %57 : vector<64x128xf32> to vector<1x64x128xf32>
    tpu.vector_store %arg5[%c0_15, %c0_16, %c0_17], %60 {strides = array<i32>} : memref<2x64x128xf32, #tpu.memory_space<vmem>>, vector<1x64x128xf32>,
    %c1 = arith.constant 1 : index
    %c0_18 = arith.constant 0 : index
    %c0_19 = arith.constant 0 : index
    %c0_20 = arith.constant 0 : index
    %c0_21 = arith.constant 0 : index
    %61 = vector.load %arg1[%c1, %c0_18, %c0_19, %c0_20, %c0_21] : memref<2x4x9x9x128xbf16, #tpu.memory_space<vmem>>, vector<1x4x9x9x128xbf16>
    %62 = vector.shape_cast %61 : vector<1x4x9x9x128xbf16> to vector<4x9x9x128xbf16>
    %63 = vector.extract_strided_slice %62 {offsets = [0, 0, 0, 0], sizes = [1, 8, 8, 128], strides = [1, 1, 1, 1]} : vector<4x9x9x128xbf16> to vector<1x8x8x128xbf16>
    %64 = vector.shape_cast %63 : vector<1x8x8x128xbf16> to vector<8x8x128xbf16>
    %65 = vector.shape_cast %64 : vector<8x8x128xbf16> to vector<64x128xbf16>
    %66 = vector.extract_strided_slice %62 {offsets = [1, 0, 0, 0], sizes = [1, 8, 8, 128], strides = [1, 1, 1, 1]} : vector<4x9x9x128xbf16> to vector<1x8x8x128xbf16>
    %67 = vector.shape_cast %66 : vector<1x8x8x128xbf16> to vector<8x8x128xbf16>
    %68 = vector.shape_cast %67 : vector<8x8x128xbf16> to vector<64x128xbf16>
    %69 = vector.extract_strided_slice %62 {offsets = [0, 0, 1, 0], sizes = [1, 8, 8, 128], strides = [1, 1, 1, 1]} : vector<4x9x9x128xbf16> to vector<1x8x8x128xbf16>
    %70 = vector.shape_cast %69 : vector<1x8x8x128xbf16> to vector<8x8x128xbf16>
    %71 = vector.shape_cast %70 : vector<8x8x128xbf16> to vector<64x128xbf16>
    %72 = vector.extract_strided_slice %62 {offsets = [2, 0, 0, 0], sizes = [1, 8, 8, 128], strides = [1, 1, 1, 1]} : vector<4x9x9x128xbf16> to vector<1x8x8x128xbf16>
    %73 = vector.shape_cast %72 : vector<1x8x8x128xbf16> to vector<8x8x128xbf16>
    %74 = vector.shape_cast %73 : vector<8x8x128xbf16> to vector<64x128xbf16>
    %75 = vector.extract_strided_slice %62 {offsets = [3, 0, 0, 0], sizes = [1, 8, 8, 128], strides = [1, 1, 1, 1]} : vector<4x9x9x128xbf16> to vector<1x8x8x128xbf16>
    %76 = vector.shape_cast %75 : vector<1x8x8x128xbf16> to vector<8x8x128xbf16>
    %77 = vector.shape_cast %76 : vector<8x8x128xbf16> to vector<64x128xbf16>
    %78 = vector.extract_strided_slice %62 {offsets = [2, 0, 1, 0], sizes = [1, 8, 8, 128], strides = [1, 1, 1, 1]} : vector<4x9x9x128xbf16> to vector<1x8x8x128xbf16>
    %79 = vector.shape_cast %78 : vector<1x8x8x128xbf16> to vector<8x8x128xbf16>
    %80 = vector.shape_cast %79 : vector<8x8x128xbf16> to vector<64x128xbf16>
    %81 = vector.extract_strided_slice %62 {offsets = [0, 1, 0, 0], sizes = [1, 8, 8, 128], strides = [1, 1, 1, 1]} : vector<4x9x9x128xbf16> to vector<1x8x8x128xbf16>
    %82 = vector.shape_cast %81 : vector<1x8x8x128xbf16> to vector<8x8x128xbf16>
    %83 = vector.shape_cast %82 : vector<8x8x128xbf16> to vector<64x128xbf16>
    %84 = vector.extract_strided_slice %62 {offsets = [1, 1, 0, 0], sizes = [1, 8, 8, 128], strides = [1, 1, 1, 1]} : vector<4x9x9x128xbf16> to vector<1x8x8x128xbf16>
    %85 = vector.shape_cast %84 : vector<1x8x8x128xbf16> to vector<8x8x128xbf16>
    %86 = vector.shape_cast %85 : vector<8x8x128xbf16> to vector<64x128xbf16>
    %87 = vector.extract_strided_slice %62 {offsets = [0, 1, 1, 0], sizes = [1, 8, 8, 128], strides = [1, 1, 1, 1]} : vector<4x9x9x128xbf16> to vector<1x8x8x128xbf16>
    %88 = vector.shape_cast %87 : vector<1x8x8x128xbf16> to vector<8x8x128xbf16>
    %89 = vector.shape_cast %88 : vector<8x8x128xbf16> to vector<64x128xbf16>
    %90 = tpu.concatenate %65, %68, %71, %74, %77, %80, %83, %86, %89 in 1 : vector<64x128xbf16>, vector<64x128xbf16>, vector<64x128xbf16>, vector<64x128xbf16>, vector<64x128xbf16>, vector<64x128xbf16>, vector<64x128xbf16>, vector<64x128xbf16>, vector<64x128xbf16> -> vector<64x1152xbf16>
    %cst_22 = arith.constant dense<0.000000e+00> : vector<64x128xf32>
    %91 = tpu.matmul %90, %0, %cst_22 {dimension_numbers = #tpu.dot_dimension_numbers<[1], [0], [0], [1], [0, 0, 1, 1], [], []>} : vector<64x1152xbf16>, vector<1152x128xbf16>, vector<64x128xf32> -> vector<64x128xf32>
    %92 = vector.shape_cast %91 : vector<64x128xf32> to vector<1x64x128xf32>
    %cst_23 = arith.constant dense<0.000000e+00> : vector<1xf32>
    %93 = vector.multi_reduction <add>, %92, %cst_23 [1, 2] : vector<1x64x128xf32> to vector<1xf32>
    %94 = vector.shape_cast %93 : vector<1xf32> to vector<1x1x1xf32>
    %95 = vector.extract %94[0, 0, 0] : f32 from vector<1x1x1xf32>
    %96 = arith.mulf %91, %91 : vector<64x128xf32>
    %97 = vector.shape_cast %96 : vector<64x128xf32> to vector<1x64x128xf32>
    %cst_24 = arith.constant dense<0.000000e+00> : vector<1xf32>
    %98 = vector.multi_reduction <add>, %97, %cst_24 [1, 2] : vector<1x64x128xf32> to vector<1xf32>
    %99 = vector.shape_cast %98 : vector<1xf32> to vector<1x1x1xf32>
    %100 = vector.extract %99[0, 0, 0] : f32 from vector<1x1x1xf32>
    %cst_25 = arith.constant 0.001953125 : f32
    %101 = arith.mulf %95, %cst_25 : f32
    %cst_26 = arith.constant 0.001953125 : f32
    %102 = arith.mulf %100, %cst_26 : f32
    %103 = arith.mulf %101, %101 : f32
    %104 = arith.subf %102, %103 : f32
    %cst_27 = arith.constant 9.99999974E-6 : f32
    %105 = arith.addf %104, %cst_27 : f32
    %106 = math.rsqrt %105 : f32
    %107 = vector.broadcast %106 : f32 to vector<1x128xf32>
    %108 = arith.mulf %1, %107 : vector<1x128xf32>
    %109 = vector.broadcast %101 : f32 to vector<1x128xf32>
    %110 = arith.mulf %109, %108 : vector<1x128xf32>
    %111 = arith.subf %2, %110 : vector<1x128xf32>
    %112 = vector.broadcast %108 : vector<1x128xf32> to vector<64x128xf32>
    %113 = arith.mulf %91, %112 : vector<64x128xf32>
    %114 = vector.broadcast %111 : vector<1x128xf32> to vector<64x128xf32>
    %115 = arith.addf %113, %114 : vector<64x128xf32>
    %c1_28 = arith.constant 1 : index
    %c0_29 = arith.constant 0 : index
    %c0_30 = arith.constant 0 : index
    %116 = vector.load %arg5[%c1_28, %c0_29, %c0_30] : memref<2x64x128xf32, #tpu.memory_space<vmem>>, vector<1x64x128xf32>
    %117 = vector.shape_cast %116 : vector<1x64x128xf32> to vector<64x128xf32>
    %118 = vector.shape_cast %115 : vector<64x128xf32> to vector<1x64x128xf32>
    tpu.vector_store %arg5[%c1_28, %c0_29, %c0_30], %118 {strides = array<i32>} : memref<2x64x128xf32, #tpu.memory_space<vmem>>, vector<1x64x128xf32>,
    return
  }
  func.func @transform_0(%arg0: i32) -> (i32, i32, i32, i32, i32) {
    %c0_i32 = arith.constant 0 : i32
    %c0_i32_0 = arith.constant 0 : i32
    %c0_i32_1 = arith.constant 0 : i32
    %c0_i32_2 = arith.constant 0 : i32
    %c0_i32_3 = arith.constant 0 : i32
    return %arg0, %c0_i32, %c0_i32_0, %c0_i32_1, %c0_i32_2 : i32, i32, i32, i32, i32
  }
  func.func @transform_1(%arg0: i32) -> (i32, i32) {
    %c0_i32 = arith.constant 0 : i32
    %c0_i32_0 = arith.constant 0 : i32
    %c0_i32_1 = arith.constant 0 : i32
    return %c0_i32, %c0_i32_0 : i32, i32
  }
  func.func @transform_2(%arg0: i32) -> (i32, i32) {
    %c0_i32 = arith.constant 0 : i32
    %c0_i32_0 = arith.constant 0 : i32
    %c0_i32_1 = arith.constant 0 : i32
    return %c0_i32, %c0_i32_0 : i32, i32
  }
  func.func @transform_3(%arg0: i32) -> (i32, i32) {
    %c0_i32 = arith.constant 0 : i32
    %c0_i32_0 = arith.constant 0 : i32
    %c0_i32_1 = arith.constant 0 : i32
    return %c0_i32, %c0_i32_0 : i32, i32
  }
  func.func @transform_4(%arg0: i32) -> (i32, i32, i32) {
    %c0_i32 = arith.constant 0 : i32
    %c0_i32_0 = arith.constant 0 : i32
    %c0_i32_1 = arith.constant 0 : i32
    return %arg0, %c0_i32, %c0_i32_0 : i32, i32, i32
  }
}

module attributes {stable_mosaic.version = 11 : i64} {
  func.func @_downsample_kernel(%arg0: i32, %arg1: memref<2x4x9x9x128xbf16, #tpu.memory_space<vmem>>, %arg2: memref<1152x128xbf16, #tpu.memory_space<vmem>>, %arg3: memref<1x128xf32, #tpu.memory_space<vmem>>, %arg4: memref<1x128xf32, #tpu.memory_space<vmem>>, %arg5: memref<2x64x128xf32, #tpu.memory_space<vmem>>) attributes {dimension_semantics = [#tpu.dimension_semantics<parallel>], iteration_bounds = array<i64: 1>, scalar_prefetch = 0 : i64, scratch_operands = 0 : i64, tpu.core_type = #tpu.core_type<tc>, window_params = [{transform_indices = @transform_0, window_bounds = array<i64: 2, 4, 9, 9, 128>}, {pipeline_mode = #tpu.pipeline_mode<synchronous>, transform_indices = @transform_1, window_bounds = array<i64: 1152, 128>}, {pipeline_mode = #tpu.pipeline_mode<synchronous>, transform_indices = @transform_2, window_bounds = array<i64: 1, 128>}, {pipeline_mode = #tpu.pipeline_mode<synchronous>, transform_indices = @transform_3, window_bounds = array<i64: 1, 128>}, {transform_indices = @transform_4, window_bounds = array<i64: 2, 64, 128>}]} {
    %c0 = arith.constant 0 : index
    %c0_0 = arith.constant 0 : index
    %0 = vector.load %arg2[%c0, %c0_0] : memref<1152x128xbf16, #tpu.memory_space<vmem>>, vector<1152x128xbf16>
    %c0_1 = arith.constant 0 : index
    %c0_2 = arith.constant 0 : index
    %1 = vector.load %arg3[%c0_1, %c0_2] : memref<1x128xf32, #tpu.memory_space<vmem>>, vector<1x128xf32>
    %c0_3 = arith.constant 0 : index
    %c0_4 = arith.constant 0 : index
    %2 = vector.load %arg4[%c0_3, %c0_4] : memref<1x128xf32, #tpu.memory_space<vmem>>, vector<1x128xf32>
    %c0_5 = arith.constant 0 : index
    %c0_6 = arith.constant 0 : index
    %c0_7 = arith.constant 0 : index
    %c0_8 = arith.constant 0 : index
    %c0_9 = arith.constant 0 : index
    %3 = vector.load %arg1[%c0_5, %c0_6, %c0_7, %c0_8, %c0_9] : memref<2x4x9x9x128xbf16, #tpu.memory_space<vmem>>, vector<1x4x9x9x128xbf16>
    %4 = vector.shape_cast %3 : vector<1x4x9x9x128xbf16> to vector<4x9x9x128xbf16>
    %5 = vector.extract_strided_slice %4 {offsets = [0, 0, 0, 0], sizes = [1, 8, 8, 128], strides = [1, 1, 1, 1]} : vector<4x9x9x128xbf16> to vector<1x8x8x128xbf16>
    %6 = vector.shape_cast %5 : vector<1x8x8x128xbf16> to vector<8x8x128xbf16>
    %7 = vector.shape_cast %6 : vector<8x8x128xbf16> to vector<64x128xbf16>
    %8 = vector.extract_strided_slice %4 {offsets = [1, 0, 0, 0], sizes = [1, 8, 8, 128], strides = [1, 1, 1, 1]} : vector<4x9x9x128xbf16> to vector<1x8x8x128xbf16>
    %9 = vector.shape_cast %8 : vector<1x8x8x128xbf16> to vector<8x8x128xbf16>
    %10 = vector.shape_cast %9 : vector<8x8x128xbf16> to vector<64x128xbf16>
    %11 = vector.extract_strided_slice %4 {offsets = [0, 0, 1, 0], sizes = [1, 8, 8, 128], strides = [1, 1, 1, 1]} : vector<4x9x9x128xbf16> to vector<1x8x8x128xbf16>
    %12 = vector.shape_cast %11 : vector<1x8x8x128xbf16> to vector<8x8x128xbf16>
    %13 = vector.shape_cast %12 : vector<8x8x128xbf16> to vector<64x128xbf16>
    %14 = vector.extract_strided_slice %4 {offsets = [2, 0, 0, 0], sizes = [1, 8, 8, 128], strides = [1, 1, 1, 1]} : vector<4x9x9x128xbf16> to vector<1x8x8x128xbf16>
    %15 = vector.shape_cast %14 : vector<1x8x8x128xbf16> to vector<8x8x128xbf16>
    %16 = vector.shape_cast %15 : vector<8x8x128xbf16> to vector<64x128xbf16>
    %17 = vector.extract_strided_slice %4 {offsets = [3, 0, 0, 0], sizes = [1, 8, 8, 128], strides = [1, 1, 1, 1]} : vector<4x9x9x128xbf16> to vector<1x8x8x128xbf16>
    %18 = vector.shape_cast %17 : vector<1x8x8x128xbf16> to vector<8x8x128xbf16>
    %19 = vector.shape_cast %18 : vector<8x8x128xbf16> to vector<64x128xbf16>
    %20 = vector.extract_strided_slice %4 {offsets = [2, 0, 1, 0], sizes = [1, 8, 8, 128], strides = [1, 1, 1, 1]} : vector<4x9x9x128xbf16> to vector<1x8x8x128xbf16>
    %21 = vector.shape_cast %20 : vector<1x8x8x128xbf16> to vector<8x8x128xbf16>
    %22 = vector.shape_cast %21 : vector<8x8x128xbf16> to vector<64x128xbf16>
    %23 = vector.extract_strided_slice %4 {offsets = [0, 1, 0, 0], sizes = [1, 8, 8, 128], strides = [1, 1, 1, 1]} : vector<4x9x9x128xbf16> to vector<1x8x8x128xbf16>
    %24 = vector.shape_cast %23 : vector<1x8x8x128xbf16> to vector<8x8x128xbf16>
    %25 = vector.shape_cast %24 : vector<8x8x128xbf16> to vector<64x128xbf16>
    %26 = vector.extract_strided_slice %4 {offsets = [1, 1, 0, 0], sizes = [1, 8, 8, 128], strides = [1, 1, 1, 1]} : vector<4x9x9x128xbf16> to vector<1x8x8x128xbf16>
    %27 = vector.shape_cast %26 : vector<1x8x8x128xbf16> to vector<8x8x128xbf16>
    %28 = vector.shape_cast %27 : vector<8x8x128xbf16> to vector<64x128xbf16>
    %29 = vector.extract_strided_slice %4 {offsets = [0, 1, 1, 0], sizes = [1, 8, 8, 128], strides = [1, 1, 1, 1]} : vector<4x9x9x128xbf16> to vector<1x8x8x128xbf16>
    %30 = vector.shape_cast %29 : vector<1x8x8x128xbf16> to vector<8x8x128xbf16>
    %31 = vector.shape_cast %30 : vector<8x8x128xbf16> to vector<64x128xbf16>
    %32 = tpu.concatenate %7, %10, %13, %16, %19, %22, %25, %28, %31 in 1 : vector<64x128xbf16>, vector<64x128xbf16>, vector<64x128xbf16>, vector<64x128xbf16>, vector<64x128xbf16>, vector<64x128xbf16>, vector<64x128xbf16>, vector<64x128xbf16>, vector<64x128xbf16> -> vector<64x1152xbf16>
    %cst = arith.constant dense<0.000000e+00> : vector<64x128xf32>
    %33 = tpu.matmul %32, %0, %cst {dimension_numbers = #tpu.dot_dimension_numbers<[1], [0], [0], [1], [0, 0, 1, 1], [], []>} : vector<64x1152xbf16>, vector<1152x128xbf16>, vector<64x128xf32> -> vector<64x128xf32>
    %34 = vector.shape_cast %33 : vector<64x128xf32> to vector<1x64x128xf32>
    %cst_10 = arith.constant dense<0.000000e+00> : vector<1xf32>
    %35 = vector.multi_reduction <add>, %34, %cst_10 [1, 2] : vector<1x64x128xf32> to vector<1xf32>
    %36 = vector.shape_cast %35 : vector<1xf32> to vector<1x1x1xf32>
    %37 = vector.extract %36[0, 0, 0] : f32 from vector<1x1x1xf32>
    %38 = arith.mulf %33, %33 : vector<64x128xf32>
    %39 = vector.shape_cast %38 : vector<64x128xf32> to vector<1x64x128xf32>
    %cst_11 = arith.constant dense<0.000000e+00> : vector<1xf32>
    %40 = vector.multi_reduction <add>, %39, %cst_11 [1, 2] : vector<1x64x128xf32> to vector<1xf32>
    %41 = vector.shape_cast %40 : vector<1xf32> to vector<1x1x1xf32>
    %42 = vector.extract %41[0, 0, 0] : f32 from vector<1x1x1xf32>
    %cst_12 = arith.constant 0.001953125 : f32
    %43 = arith.mulf %37, %cst_12 : f32
    %cst_13 = arith.constant 0.001953125 : f32
    %44 = arith.mulf %42, %cst_13 : f32
    %45 = arith.mulf %43, %43 : f32
    %46 = arith.subf %44, %45 : f32
    %cst_14 = arith.constant 9.99999974E-6 : f32
    %47 = arith.addf %46, %cst_14 : f32
    %48 = math.rsqrt %47 : f32
    %49 = vector.broadcast %48 : f32 to vector<1x128xf32>
    %50 = arith.mulf %1, %49 : vector<1x128xf32>
    %51 = vector.broadcast %43 : f32 to vector<1x128xf32>
    %52 = arith.mulf %51, %50 : vector<1x128xf32>
    %53 = arith.subf %2, %52 : vector<1x128xf32>
    %54 = vector.broadcast %50 : vector<1x128xf32> to vector<64x128xf32>
    %55 = arith.mulf %33, %54 : vector<64x128xf32>
    %56 = vector.broadcast %53 : vector<1x128xf32> to vector<64x128xf32>
    %57 = arith.addf %55, %56 : vector<64x128xf32>
    %c0_15 = arith.constant 0 : index
    %c0_16 = arith.constant 0 : index
    %c0_17 = arith.constant 0 : index
    %58 = vector.load %arg5[%c0_15, %c0_16, %c0_17] : memref<2x64x128xf32, #tpu.memory_space<vmem>>, vector<1x64x128xf32>
    %59 = vector.shape_cast %58 : vector<1x64x128xf32> to vector<64x128xf32>
    %60 = vector.shape_cast %57 : vector<64x128xf32> to vector<1x64x128xf32>
    tpu.vector_store %arg5[%c0_15, %c0_16, %c0_17], %60 {strides = array<i32>} : memref<2x64x128xf32, #tpu.memory_space<vmem>>, vector<1x64x128xf32>,
    %c1 = arith.constant 1 : index
    %c0_18 = arith.constant 0 : index
    %c0_19 = arith.constant 0 : index
    %c0_20 = arith.constant 0 : index
    %c0_21 = arith.constant 0 : index
    %61 = vector.load %arg1[%c1, %c0_18, %c0_19, %c0_20, %c0_21] : memref<2x4x9x9x128xbf16, #tpu.memory_space<vmem>>, vector<1x4x9x9x128xbf16>
    %62 = vector.shape_cast %61 : vector<1x4x9x9x128xbf16> to vector<4x9x9x128xbf16>
    %63 = vector.extract_strided_slice %62 {offsets = [0, 0, 0, 0], sizes = [1, 8, 8, 128], strides = [1, 1, 1, 1]} : vector<4x9x9x128xbf16> to vector<1x8x8x128xbf16>
    %64 = vector.shape_cast %63 : vector<1x8x8x128xbf16> to vector<8x8x128xbf16>
    %65 = vector.shape_cast %64 : vector<8x8x128xbf16> to vector<64x128xbf16>
    %66 = vector.extract_strided_slice %62 {offsets = [1, 0, 0, 0], sizes = [1, 8, 8, 128], strides = [1, 1, 1, 1]} : vector<4x9x9x128xbf16> to vector<1x8x8x128xbf16>
    %67 = vector.shape_cast %66 : vector<1x8x8x128xbf16> to vector<8x8x128xbf16>
    %68 = vector.shape_cast %67 : vector<8x8x128xbf16> to vector<64x128xbf16>
    %69 = vector.extract_strided_slice %62 {offsets = [0, 0, 1, 0], sizes = [1, 8, 8, 128], strides = [1, 1, 1, 1]} : vector<4x9x9x128xbf16> to vector<1x8x8x128xbf16>
    %70 = vector.shape_cast %69 : vector<1x8x8x128xbf16> to vector<8x8x128xbf16>
    %71 = vector.shape_cast %70 : vector<8x8x128xbf16> to vector<64x128xbf16>
    %72 = vector.extract_strided_slice %62 {offsets = [2, 0, 0, 0], sizes = [1, 8, 8, 128], strides = [1, 1, 1, 1]} : vector<4x9x9x128xbf16> to vector<1x8x8x128xbf16>
    %73 = vector.shape_cast %72 : vector<1x8x8x128xbf16> to vector<8x8x128xbf16>
    %74 = vector.shape_cast %73 : vector<8x8x128xbf16> to vector<64x128xbf16>
    %75 = vector.extract_strided_slice %62 {offsets = [3, 0, 0, 0], sizes = [1, 8, 8, 128], strides = [1, 1, 1, 1]} : vector<4x9x9x128xbf16> to vector<1x8x8x128xbf16>
    %76 = vector.shape_cast %75 : vector<1x8x8x128xbf16> to vector<8x8x128xbf16>
    %77 = vector.shape_cast %76 : vector<8x8x128xbf16> to vector<64x128xbf16>
    %78 = vector.extract_strided_slice %62 {offsets = [2, 0, 1, 0], sizes = [1, 8, 8, 128], strides = [1, 1, 1, 1]} : vector<4x9x9x128xbf16> to vector<1x8x8x128xbf16>
    %79 = vector.shape_cast %78 : vector<1x8x8x128xbf16> to vector<8x8x128xbf16>
    %80 = vector.shape_cast %79 : vector<8x8x128xbf16> to vector<64x128xbf16>
    %81 = vector.extract_strided_slice %62 {offsets = [0, 1, 0, 0], sizes = [1, 8, 8, 128], strides = [1, 1, 1, 1]} : vector<4x9x9x128xbf16> to vector<1x8x8x128xbf16>
    %82 = vector.shape_cast %81 : vector<1x8x8x128xbf16> to vector<8x8x128xbf16>
    %83 = vector.shape_cast %82 : vector<8x8x128xbf16> to vector<64x128xbf16>
    %84 = vector.extract_strided_slice %62 {offsets = [1, 1, 0, 0], sizes = [1, 8, 8, 128], strides = [1, 1, 1, 1]} : vector<4x9x9x128xbf16> to vector<1x8x8x128xbf16>
    %85 = vector.shape_cast %84 : vector<1x8x8x128xbf16> to vector<8x8x128xbf16>
    %86 = vector.shape_cast %85 : vector<8x8x128xbf16> to vector<64x128xbf16>
    %87 = vector.extract_strided_slice %62 {offsets = [0, 1, 1, 0], sizes = [1, 8, 8, 128], strides = [1, 1, 1, 1]} : vector<4x9x9x128xbf16> to vector<1x8x8x128xbf16>
    %88 = vector.shape_cast %87 : vector<1x8x8x128xbf16> to vector<8x8x128xbf16>
    %89 = vector.shape_cast %88 : vector<8x8x128xbf16> to vector<64x128xbf16>
    %90 = tpu.concatenate %65, %68, %71, %74, %77, %80, %83, %86, %89 in 1 : vector<64x128xbf16>, vector<64x128xbf16>, vector<64x128xbf16>, vector<64x128xbf16>, vector<64x128xbf16>, vector<64x128xbf16>, vector<64x128xbf16>, vector<64x128xbf16>, vector<64x128xbf16> -> vector<64x1152xbf16>
    %cst_22 = arith.constant dense<0.000000e+00> : vector<64x128xf32>
    %91 = tpu.matmul %90, %0, %cst_22 {dimension_numbers = #tpu.dot_dimension_numbers<[1], [0], [0], [1], [0, 0, 1, 1], [], []>} : vector<64x1152xbf16>, vector<1152x128xbf16>, vector<64x128xf32> -> vector<64x128xf32>
    %92 = vector.shape_cast %91 : vector<64x128xf32> to vector<1x64x128xf32>
    %cst_23 = arith.constant dense<0.000000e+00> : vector<1xf32>
    %93 = vector.multi_reduction <add>, %92, %cst_23 [1, 2] : vector<1x64x128xf32> to vector<1xf32>
    %94 = vector.shape_cast %93 : vector<1xf32> to vector<1x1x1xf32>
    %95 = vector.extract %94[0, 0, 0] : f32 from vector<1x1x1xf32>
    %96 = arith.mulf %91, %91 : vector<64x128xf32>
    %97 = vector.shape_cast %96 : vector<64x128xf32> to vector<1x64x128xf32>
    %cst_24 = arith.constant dense<0.000000e+00> : vector<1xf32>
    %98 = vector.multi_reduction <add>, %97, %cst_24 [1, 2] : vector<1x64x128xf32> to vector<1xf32>
    %99 = vector.shape_cast %98 : vector<1xf32> to vector<1x1x1xf32>
    %100 = vector.extract %99[0, 0, 0] : f32 from vector<1x1x1xf32>
    %cst_25 = arith.constant 0.001953125 : f32
    %101 = arith.mulf %95, %cst_25 : f32
    %cst_26 = arith.constant 0.001953125 : f32
    %102 = arith.mulf %100, %cst_26 : f32
    %103 = arith.mulf %101, %101 : f32
    %104 = arith.subf %102, %103 : f32
    %cst_27 = arith.constant 9.99999974E-6 : f32
    %105 = arith.addf %104, %cst_27 : f32
    %106 = math.rsqrt %105 : f32
    %107 = vector.broadcast %106 : f32 to vector<1x128xf32>
    %108 = arith.mulf %1, %107 : vector<1x128xf32>
    %109 = vector.broadcast %101 : f32 to vector<1x128xf32>
    %110 = arith.mulf %109, %108 : vector<1x128xf32>
    %111 = arith.subf %2, %110 : vector<1x128xf32>
    %112 = vector.broadcast %108 : vector<1x128xf32> to vector<64x128xf32>
    %113 = arith.mulf %91, %112 : vector<64x128xf32>
    %114 = vector.broadcast %111 : vector<1x128xf32> to vector<64x128xf32>
    %115 = arith.addf %113, %114 : vector<64x128xf32>
    %c1_28 = arith.constant 1 : index
    %c0_29 = arith.constant 0 : index
    %c0_30 = arith.constant 0 : index
    %116 = vector.load %arg5[%c1_28, %c0_29, %c0_30] : memref<2x64x128xf32, #tpu.memory_space<vmem>>, vector<1x64x128xf32>
    %117 = vector.shape_cast %116 : vector<1x64x128xf32> to vector<64x128xf32>
    %118 = vector.shape_cast %115 : vector<64x128xf32> to vector<1x64x128xf32>
    tpu.vector_store %arg5[%c1_28, %c0_29, %c0_30], %118 {strides = array<i32>} : memref<2x64x128xf32, #tpu.memory_space<vmem>>, vector<1x64x128xf32>,
    return
  }
  func.func @transform_0(%arg0: i32) -> (i32, i32, i32, i32, i32) {
    %c0_i32 = arith.constant 0 : i32
    %c0_i32_0 = arith.constant 0 : i32
    %c0_i32_1 = arith.constant 0 : i32
    %c0_i32_2 = arith.constant 0 : i32
    %c0_i32_3 = arith.constant 0 : i32
    return %arg0, %c0_i32, %c0_i32_0, %c0_i32_1, %c0_i32_2 : i32, i32, i32, i32, i32
  }
  func.func @transform_1(%arg0: i32) -> (i32, i32) {
    %c0_i32 = arith.constant 0 : i32
    %c0_i32_0 = arith.constant 0 : i32
    %c0_i32_1 = arith.constant 0 : i32
    return %c0_i32, %c0_i32_0 : i32, i32
  }
  func.func @transform_2(%arg0: i32) -> (i32, i32) {
    %c0_i32 = arith.constant 0 : i32
    %c0_i32_0 = arith.constant 0 : i32
    %c0_i32_1 = arith.constant 0 : i32
    return %c0_i32, %c0_i32_0 : i32, i32
  }
  func.func @transform_3(%arg0: i32) -> (i32, i32) {
    %c0_i32 = arith.constant 0 : i32
    %c0_i32_0 = arith.constant 0 : i32
    %c0_i32_1 = arith.constant 0 : i32
    return %c0_i32, %c0_i32_0 : i32, i32
  }
  func.func @transform_4(%arg0: i32) -> (i32, i32, i32) {
    %c0_i32 = arith.constant 0 : i32
    %c0_i32_0 = arith.constant 0 : i32
    %c0_i32_1 = arith.constant 0 : i32
    return %arg0, %c0_i32, %c0_i32_0 : i32, i32, i32
  }
}

</mosaic_0001>

<llo_original>
// kernel: tpu_custom_call.1
$region0: #{tpu_custom_call.1}
  #allocation0 [shape = 'u32[]', space=smem, size = 0x4, offset = 0x4, fixed_abs, tag = 'smem constant byte address 0x4 - core index']
  #allocation1 [shape = 'u32[144,128]{1,0:T(1,128)}', space=vmem, size = 0x12000, scoped, tag = 'internal scratch']
  %s0 = inlined_call_operand.vmem [shape: bf16[2,4,9,9,128], index: 0, kind: input, shape index: {}]
  %s1 = inlined_call_operand.vmem [shape: bf16[1152,128], index: 1, kind: input, shape index: {}]
  %s2 = inlined_call_operand.vmem [shape: f32[1,128], index: 2, kind: input, shape index: {}]
  %s3 = inlined_call_operand.vmem [shape: f32[1,128], index: 3, kind: input, shape index: {}]
  %s4 = inlined_call_operand.hbm [shape: f32[2,64,128], index: 4, kind: output, shape index: {}]
  %s5 = sld [smem:[#allocation0]]
  $region26: #{tpu_custom_call.1} parent=0
    _
  %s7 = ssub.s32 1, %s5
  %s8 = scalar_select 0, %s7, %s5
  $region1: #{tpu_custom_call.1} parent=0
    #allocation2 [shape = 'u8[65536]{0}', space=vmem, size = 0x10000, scoped, tag = 'output window, operand 0, single buffered']
    #allocation3 [shape = 's32[1]{0}', space=sflag, size = 0x4, scoped, tag = 'scoped memory for tpu_custom_call.1']
    %9 = vsyncpa [#allocation3], 0
    // Predicated region
    $region2: #{tpu_custom_call.1} parent=1 // pred_check
      _
    $region3: #{tpu_custom_call.1} parent=1 // pred_check_branch
      %11 = sbr.rel (0) target = $region5
    $region4: #{tpu_custom_call.1} parent=1 // pred_region
      _
    $region5: #{tpu_custom_call.1} parent=1 // pred_fallthru
      _
    // Predicated region
    $region6: #{tpu_custom_call.1} parent=1 // pred_check
      _
    $region7: #{tpu_custom_call.1} parent=1 // pred_check_branch
      %13 = sbr.rel (0) target = $region9
    $region8: #{tpu_custom_call.1} parent=1 // pred_region
      _
    $region9: #{tpu_custom_call.1} parent=1 // pred_fallthru
      _
    // Predicated region
    $region10: #{tpu_custom_call.1} parent=1 // pred_check
      _
    $region11: #{tpu_custom_call.1} parent=1 // pred_check_branch
      %15 = sbr.rel (0) target = $region13
    $region12: #{tpu_custom_call.1} parent=1 // pred_region
      _
    $region13: #{tpu_custom_call.1} parent=1 // pred_fallthru
      _
    // Predicated region
    $region14: #{tpu_custom_call.1} parent=1 // pred_check
      _
    $region15: #{tpu_custom_call.1} parent=1 // pred_check_branch
      %17 = sbr.rel (0) target = $region17
    $region16: #{tpu_custom_call.1} parent=1 // pred_region
      _
    $region17: #{tpu_custom_call.1} parent=1 // pred_fallthru
      _
    %v19 = vld [vmem:[%s1] sm:$0xf]
    %v20 = vld [vmem:[%s1 + $0x4] sm:$0xf]
    %v21 = vld [vmem:[%s1 + $0x8] sm:$0xf]
    %v22 = vld [vmem:[%s1 + $0xc] sm:$0xf]
    %v23 = vld [vmem:[%s1 + $0x10] sm:$0xf]
    %v24 = vld [vmem:[%s1 + $0x14] sm:$0xf]
    %v25 = vld [vmem:[%s1 + $0x18] sm:$0xf]
    %v26 = vld [vmem:[%s1 + $0x1c] sm:$0xf]
    %v27 = vld [vmem:[%s1 + $0x20] sm:$0xf]
    %v28 = vld [vmem:[%s1 + $0x24] sm:$0xf]
    %v29 = vld [vmem:[%s1 + $0x28] sm:$0xf]
    %v30 = vld [vmem:[%s1 + $0x2c] sm:$0xf]
    %v31 = vld [vmem:[%s1 + $0x30] sm:$0xf]
    %v32 = vld [vmem:[%s1 + $0x34] sm:$0xf]
    %v33 = vld [vmem:[%s1 + $0x38] sm:$0xf]
    %v34 = vld [vmem:[%s1 + $0x3c] sm:$0xf]
    %v35 = vld [vmem:[%s1 + $0x40] sm:$0xf]
    %v36 = vld [vmem:[%s1 + $0x44] sm:$0xf]
    %v37 = vld [vmem:[%s1 + $0x48] sm:$0xf]
    %v38 = vld [vmem:[%s1 + $0x4c] sm:$0xf]
    %v39 = vld [vmem:[%s1 + $0x50] sm:$0xf]
    %v40 = vld [vmem:[%s1 + $0x54] sm:$0xf]
    %v41 = vld [vmem:[%s1 + $0x58] sm:$0xf]
    %v42 = vld [vmem:[%s1 + $0x5c] sm:$0xf]
    %v43 = vld [vmem:[%s1 + $0x60] sm:$0xf]
    %v44 = vld [vmem:[%s1 + $0x64] sm:$0xf]
    %v45 = vld [vmem:[%s1 + $0x68] sm:$0xf]
    %v46 = vld [vmem:[%s1 + $0x6c] sm:$0xf]
    %v47 = vld [vmem:[%s1 + $0x70] sm:$0xf]
    %v48 = vld [vmem:[%s1 + $0x74] sm:$0xf]
    %v49 = vld [vmem:[%s1 + $0x78] sm:$0xf]
    %v50 = vld [vmem:[%s1 + $0x7c] sm:$0xf]
    %v51 = vld [vmem:[%s1 + $0x80] sm:$0xf]
    %v52 = vld [vmem:[%s1 + $0x84] sm:$0xf]
    %v53 = vld [vmem:[%s1 + $0x88] sm:$0xf]
    %v54 = vld [vmem:[%s1 + $0x8c] sm:$0xf]
    %v55 = vld [vmem:[%s1 + $0x90] sm:$0xf]
    %v56 = vld [vmem:[%s1 + $0x94] sm:$0xf]
    %v57 = vld [vmem:[%s1 + $0x98] sm:$0xf]
    %v58 = vld [vmem:[%s1 + $0x9c] sm:$0xf]
    %v59 = vld [vmem:[%s1 + $0xa0] sm:$0xf]
    %v60 = vld [vmem:[%s1 + $0xa4] sm:$0xf]
    %v61 = vld [vmem:[%s1 + $0xa8] sm:$0xf]
    %v62 = vld [vmem:[%s1 + $0xac] sm:$0xf]
    %v63 = vld [vmem:[%s1 + $0xb0] sm:$0xf]
    %v64 = vld [vmem:[%s1 + $0xb4] sm:$0xf]
    %v65 = vld [vmem:[%s1 + $0xb8] sm:$0xf]
    %v66 = vld [vmem:[%s1 + $0xbc] sm:$0xf]
    %v67 = vld [vmem:[%s1 + $0xc0] sm:$0xf]
    %v68 = vld [vmem:[%s1 + $0xc4] sm:$0xf]
    %v69 = vld [vmem:[%s1 + $0xc8] sm:$0xf]
    %v70 = vld [vmem:[%s1 + $0xcc] sm:$0xf]
    %v71 = vld [vmem:[%s1 + $0xd0] sm:$0xf]
    %v72 = vld [vmem:[%s1 + $0xd4] sm:$0xf]
    %v73 = vld [vmem:[%s1 + $0xd8] sm:$0xf]
    %v74 = vld [vmem:[%s1 + $0xdc] sm:$0xf]
    %v75 = vld [vmem:[%s1 + $0xe0] sm:$0xf]
    %v76 = vld [vmem:[%s1 + $0xe4] sm:$0xf]
    %v77 = vld [vmem:[%s1 + $0xe8] sm:$0xf]
    %v78 = vld [vmem:[%s1 + $0xec] sm:$0xf]
    %v79 = vld [vmem:[%s1 + $0xf0] sm:$0xf]
    %v80 = vld [vmem:[%s1 + $0xf4] sm:$0xf]
    %v81 = vld [vmem:[%s1 + $0xf8] sm:$0xf]
    %v82 = vld [vmem:[%s1 + $0xfc] sm:$0xf]
    %v83 = vld [vmem:[%s1 + $0x100] sm:$0xf]
    %v84 = vld [vmem:[%s1 + $0x104] sm:$0xf]
    %v85 = vld [vmem:[%s1 + $0x108] sm:$0xf]
    %v86 = vld [vmem:[%s1 + $0x10c] sm:$0xf]
    %v87 = vld [vmem:[%s1 + $0x110] sm:$0xf]
    %v88 = vld [vmem:[%s1 + $0x114] sm:$0xf]
    %v89 = vld [vmem:[%s1 + $0x118] sm:$0xf]
    %v90 = vld [vmem:[%s1 + $0x11c] sm:$0xf]
    %v91 = vld [vmem:[%s1 + $0x120] sm:$0xf]
    %v92 = vld [vmem:[%s1 + $0x124] sm:$0xf]
    %v93 = vld [vmem:[%s1 + $0x128] sm:$0xf]
    %v94 = vld [vmem:[%s1 + $0x12c] sm:$0xf]
    %v95 = vld [vmem:[%s1 + $0x130] sm:$0xf]
    %v96 = vld [vmem:[%s1 + $0x134] sm:$0xf]
    %v97 = vld [vmem:[%s1 + $0x138] sm:$0xf]
    %v98 = vld [vmem:[%s1 + $0x13c] sm:$0xf]
    %v99 = vld [vmem:[%s1 + $0x140] sm:$0xf]
    %v100 = vld [vmem:[%s1 + $0x144] sm:$0xf]
    %v101 = vld [vmem:[%s1 + $0x148] sm:$0xf]
    %v102 = vld [vmem:[%s1 + $0x14c] sm:$0xf]
    %v103 = vld [vmem:[%s1 + $0x150] sm:$0xf]
    %v104 = vld [vmem:[%s1 + $0x154] sm:$0xf]
    %v105 = vld [vmem:[%s1 + $0x158] sm:$0xf]
    %v106 = vld [vmem:[%s1 + $0x15c] sm:$0xf]
    %v107 = vld [vmem:[%s1 + $0x160] sm:$0xf]
    %v108 = vld [vmem:[%s1 + $0x164] sm:$0xf]
    %v109 = vld [vmem:[%s1 + $0x168] sm:$0xf]
    %v110 = vld [vmem:[%s1 + $0x16c] sm:$0xf]
    %v111 = vld [vmem:[%s1 + $0x170] sm:$0xf]
    %v112 = vld [vmem:[%s1 + $0x174] sm:$0xf]
    %v113 = vld [vmem:[%s1 + $0x178] sm:$0xf]
    %v114 = vld [vmem:[%s1 + $0x17c] sm:$0xf]
    %v115 = vld [vmem:[%s1 + $0x180] sm:$0xf]
    %v116 = vld [vmem:[%s1 + $0x184] sm:$0xf]
    %v117 = vld [vmem:[%s1 + $0x188] sm:$0xf]
    %v118 = vld [vmem:[%s1 + $0x18c] sm:$0xf]
    %v119 = vld [vmem:[%s1 + $0x190] sm:$0xf]
    %v120 = vld [vmem:[%s1 + $0x194] sm:$0xf]
    %v121 = vld [vmem:[%s1 + $0x198] sm:$0xf]
    %v122 = vld [vmem:[%s1 + $0x19c] sm:$0xf]
    %v123 = vld [vmem:[%s1 + $0x1a0] sm:$0xf]
    %v124 = vld [vmem:[%s1 + $0x1a4] sm:$0xf]
    %v125 = vld [vmem:[%s1 + $0x1a8] sm:$0xf]
    %v126 = vld [vmem:[%s1 + $0x1ac] sm:$0xf]
    %v127 = vld [vmem:[%s1 + $0x1b0] sm:$0xf]
    %v128 = vld [vmem:[%s1 + $0x1b4] sm:$0xf]
    %v129 = vld [vmem:[%s1 + $0x1b8] sm:$0xf]
    %v130 = vld [vmem:[%s1 + $0x1bc] sm:$0xf]
    %v131 = vld [vmem:[%s1 + $0x1c0] sm:$0xf]
    %v132 = vld [vmem:[%s1 + $0x1c4] sm:$0xf]
    %v133 = vld [vmem:[%s1 + $0x1c8] sm:$0xf]
    %v134 = vld [vmem:[%s1 + $0x1cc] sm:$0xf]
    %v135 = vld [vmem:[%s1 + $0x1d0] sm:$0xf]
    %v136 = vld [vmem:[%s1 + $0x1d4] sm:$0xf]
    %v137 = vld [vmem:[%s1 + $0x1d8] sm:$0xf]
    %v138 = vld [vmem:[%s1 + $0x1dc] sm:$0xf]
    %v139 = vld [vmem:[%s1 + $0x1e0] sm:$0xf]
    %v140 = vld [vmem:[%s1 + $0x1e4] sm:$0xf]
    %v141 = vld [vmem:[%s1 + $0x1e8] sm:$0xf]
    %v142 = vld [vmem:[%s1 + $0x1ec] sm:$0xf]
    %v143 = vld [vmem:[%s1 + $0x1f0] sm:$0xf]
    %v144 = vld [vmem:[%s1 + $0x1f4] sm:$0xf]
    %v145 = vld [vmem:[%s1 + $0x1f8] sm:$0xf]
    %v146 = vld [vmem:[%s1 + $0x1fc] sm:$0xf]
    %v147 = vld [vmem:[%s1 + $0x200] sm:$0xf]
    %v148 = vld [vmem:[%s1 + $0x204] sm:$0xf]
    %v149 = vld [vmem:[%s1 + $0x208] sm:$0xf]
    %v150 = vld [vmem:[%s1 + $0x20c] sm:$0xf]
    %v151 = vld [vmem:[%s1 + $0x210] sm:$0xf]
    %v152 = vld [vmem:[%s1 + $0x214] sm:$0xf]
    %v153 = vld [vmem:[%s1 + $0x218] sm:$0xf]
    %v154 = vld [vmem:[%s1 + $0x21c] sm:$0xf]
    %v155 = vld [vmem:[%s1 + $0x220] sm:$0xf]
    %v156 = vld [vmem:[%s1 + $0x224] sm:$0xf]
    %v157 = vld [vmem:[%s1 + $0x228] sm:$0xf]
    %v158 = vld [vmem:[%s1 + $0x22c] sm:$0xf]
    %v159 = vld [vmem:[%s1 + $0x230] sm:$0xf]
    %v160 = vld [vmem:[%s1 + $0x234] sm:$0xf]
    %v161 = vld [vmem:[%s1 + $0x238] sm:$0xf]
    %v162 = vld [vmem:[%s1 + $0x23c] sm:$0xf]
    %v163 = vld [vmem:[%s2] sm:$0x1]
    %v164 = vld [vmem:[%s3] sm:$0x1]
    %v165 = vld [vmem:[%s0] sm:$0xf]
    %v166 = vld [vmem:[%s0 + $0x4] sm:$0x1]
    %v167 = vld [vmem:[%s0 + $0x8] sm:$0xf]
    %v168 = vld [vmem:[%s0 + $0xc] sm:$0x1]
    %v169 = vld [vmem:[%s0 + $0x10] sm:$0xf]
    %v170 = vld [vmem:[%s0 + $0x14] sm:$0x1]
    %v171 = vld [vmem:[%s0 + $0x18] sm:$0xf]
    %v172 = vld [vmem:[%s0 + $0x1c] sm:$0x1]
    %v173 = vld [vmem:[%s0 + $0x20] sm:$0xf]
    %v174 = vld [vmem:[%s0 + $0x24] sm:$0x1]
    %v175 = vld [vmem:[%s0 + $0x28] sm:$0xf]
    %v176 = vld [vmem:[%s0 + $0x2c] sm:$0x1]
    %v177 = vld [vmem:[%s0 + $0x30] sm:$0xf]
    %v178 = vld [vmem:[%s0 + $0x34] sm:$0x1]
    %v179 = vld [vmem:[%s0 + $0x38] sm:$0xf]
    %v180 = vld [vmem:[%s0 + $0x3c] sm:$0x1]
    %v181 = vld [vmem:[%s0 + $0x40] sm:$0xf]
    %v182 = vld [vmem:[%s0 + $0x44] sm:$0x1]
    %v183 = vld [vmem:[%s0 + $0x48] sm:$0xf]
    %v184 = vld [vmem:[%s0 + $0x50] sm:$0xf]
    %v185 = vld [vmem:[%s0 + $0x58] sm:$0xf]
    %v186 = vld [vmem:[%s0 + $0x60] sm:$0xf]
    %v187 = vld [vmem:[%s0 + $0x68] sm:$0xf]
    %v188 = vld [vmem:[%s0 + $0x70] sm:$0xf]
    %v189 = vld [vmem:[%s0 + $0x78] sm:$0xf]
    %v190 = vld [vmem:[%s0 + $0x80] sm:$0xf]
    %v191 = vld [vmem:[%s0 + $0x88] sm:$0xf]
    %v192 = vld [vmem:[%s0 + $0x90] sm:$0xf]
    %v193 = vld [vmem:[%s0 + $0x94] sm:$0x1]
    %v194 = vld [vmem:[%s0 + $0x98] sm:$0xf]
    %v195 = vld [vmem:[%s0 + $0x9c] sm:$0x1]
    %v196 = vld [vmem:[%s0 + $0xa0] sm:$0xf]
    %v197 = vld [vmem:[%s0 + $0xa4] sm:$0x1]
    %v198 = vld [vmem:[%s0 + $0xa8] sm:$0xf]
    %v199 = vld [vmem:[%s0 + $0xac] sm:$0x1]
    %v200 = vld [vmem:[%s0 + $0xb0] sm:$0xf]
    %v201 = vld [vmem:[%s0 + $0xb4] sm:$0x1]
    %v202 = vld [vmem:[%s0 + $0xb8] sm:$0xf]
    %v203 = vld [vmem:[%s0 + $0xbc] sm:$0x1]
    %v204 = vld [vmem:[%s0 + $0xc0] sm:$0xf]
    %v205 = vld [vmem:[%s0 + $0xc4] sm:$0x1]
    %v206 = vld [vmem:[%s0 + $0xc8] sm:$0xf]
    %v207 = vld [vmem:[%s0 + $0xcc] sm:$0x1]
    %v208 = vld [vmem:[%s0 + $0xd8] sm:$0xf]
    %v209 = vld [vmem:[%s0 + $0xe0] sm:$0xf]
    %v210 = vld [vmem:[%s0 + $0xe8] sm:$0xf]
    %v211 = vld [vmem:[%s0 + $0xf0] sm:$0xf]
    %v212 = vld [vmem:[%s0 + $0xf8] sm:$0xf]
    %v213 = vld [vmem:[%s0 + $0x100] sm:$0xf]
    %v214 = vld [vmem:[%s0 + $0x108] sm:$0xf]
    %v215 = vld [vmem:[%s0 + $0x110] sm:$0xf]
    %vm216 = vsmask.f32 3328
    %vm217 = vsmask.f32 7440
    %vm218 = vmor %vm216, %vm217
    %v220 = vshrl.u32 %v165, 16
    %v222 = vrot.slane %v220, 4
    %v223 = vshll.u32 %v165, 16
    %v225 = vrot.slane %v223, 5
    %v226 = vor.u32 %v222, %v225
    %v227 = vrot.slane %v226, 4
    %v229 = vshll.u32 %v166, 16
    %v231 = vrot.slane %v229, 5
    %v232 = vsel %vm218, %v227, %v231
    %v234 = vshrl.u32 %v167, 16
    %v236 = vrot.slane %v234, 4
    %v237 = vshll.u32 %v167, 16
    %v239 = vrot.slane %v237, 5
    %v240 = vor.u32 %v236, %v239
    %v241 = vrot.slane %v240, 4
    %v243 = vshll.u32 %v168, 16
    %v245 = vrot.slane %v243, 5
    %v246 = vsel %vm218, %v241, %v245
    %v248 = vshrl.u32 %v169, 16
    %v250 = vrot.slane %v248, 4
    %v251 = vshll.u32 %v169, 16
    %v253 = vrot.slane %v251, 5
    %v254 = vor.u32 %v250, %v253
    %v255 = vrot.slane %v254, 4
    %v257 = vshll.u32 %v170, 16
    %v259 = vrot.slane %v257, 5
    %v260 = vsel %vm218, %v255, %v259
    %v262 = vshrl.u32 %v171, 16
    %v264 = vrot.slane %v262, 4
    %v265 = vshll.u32 %v171, 16
    %v267 = vrot.slane %v265, 5
    %v268 = vor.u32 %v264, %v267
    %v269 = vrot.slane %v268, 4
    %v271 = vshll.u32 %v172, 16
    %v273 = vrot.slane %v271, 5
    %v274 = vsel %vm218, %v269, %v273
    %v276 = vshrl.u32 %v173, 16
    %v278 = vrot.slane %v276, 4
    %v279 = vshll.u32 %v173, 16
    %v281 = vrot.slane %v279, 5
    %v282 = vor.u32 %v278, %v281
    %v283 = vrot.slane %v282, 4
    %v285 = vshll.u32 %v174, 16
    %v287 = vrot.slane %v285, 5
    %v288 = vsel %vm218, %v283, %v287
    %v290 = vshrl.u32 %v175, 16
    %v292 = vrot.slane %v290, 4
    %v293 = vshll.u32 %v175, 16
    %v295 = vrot.slane %v293, 5
    %v296 = vor.u32 %v292, %v295
    %v297 = vrot.slane %v296, 4
    %v299 = vshll.u32 %v176, 16
    %v301 = vrot.slane %v299, 5
    %v302 = vsel %vm218, %v297, %v301
    %v304 = vshrl.u32 %v177, 16
    %v306 = vrot.slane %v304, 4
    %v307 = vshll.u32 %v177, 16
    %v309 = vrot.slane %v307, 5
    %v310 = vor.u32 %v306, %v309
    %v311 = vrot.slane %v310, 4
    %v313 = vshll.u32 %v178, 16
    %v315 = vrot.slane %v313, 5
    %v316 = vsel %vm218, %v311, %v315
    %v318 = vshrl.u32 %v179, 16
    %v320 = vrot.slane %v318, 4
    %v321 = vshll.u32 %v179, 16
    %v323 = vrot.slane %v321, 5
    %v324 = vor.u32 %v320, %v323
    %v325 = vrot.slane %v324, 4
    %v327 = vshll.u32 %v180, 16
    %v329 = vrot.slane %v327, 5
    %v330 = vsel %vm218, %v325, %v329
    %v332 = vshrl.u32 %v192, 16
    %v334 = vrot.slane %v332, 4
    %v335 = vshll.u32 %v192, 16
    %v337 = vrot.slane %v335, 5
    %v338 = vor.u32 %v334, %v337
    %v339 = vrot.slane %v338, 4
    %v341 = vshll.u32 %v193, 16
    %v343 = vrot.slane %v341, 5
    %v344 = vsel %vm218, %v339, %v343
    %v346 = vshrl.u32 %v194, 16
    %v348 = vrot.slane %v346, 4
    %v349 = vshll.u32 %v194, 16
    %v351 = vrot.slane %v349, 5
    %v352 = vor.u32 %v348, %v351
    %v353 = vrot.slane %v352, 4
    %v355 = vshll.u32 %v195, 16
    %v357 = vrot.slane %v355, 5
    %v358 = vsel %vm218, %v353, %v357
    %v360 = vshrl.u32 %v196, 16
    %v362 = vrot.slane %v360, 4
    %v363 = vshll.u32 %v196, 16
    %v365 = vrot.slane %v363, 5
    %v366 = vor.u32 %v362, %v365
    %v367 = vrot.slane %v366, 4
    %v369 = vshll.u32 %v197, 16
    %v371 = vrot.slane %v369, 5
    %v372 = vsel %vm218, %v367, %v371
    %v374 = vshrl.u32 %v198, 16
    %v376 = vrot.slane %v374, 4
    %v377 = vshll.u32 %v198, 16
    %v379 = vrot.slane %v377, 5
    %v380 = vor.u32 %v376, %v379
    %v381 = vrot.slane %v380, 4
    %v383 = vshll.u32 %v199, 16
    %v385 = vrot.slane %v383, 5
    %v386 = vsel %vm218, %v381, %v385
    %v388 = vshrl.u32 %v200, 16
    %v390 = vrot.slane %v388, 4
    %v391 = vshll.u32 %v200, 16
    %v393 = vrot.slane %v391, 5
    %v394 = vor.u32 %v390, %v393
    %v395 = vrot.slane %v394, 4
    %v397 = vshll.u32 %v201, 16
    %v399 = vrot.slane %v397, 5
    %v400 = vsel %vm218, %v395, %v399
    %v402 = vshrl.u32 %v202, 16
    %v404 = vrot.slane %v402, 4
    %v405 = vshll.u32 %v202, 16
    %v407 = vrot.slane %v405, 5
    %v408 = vor.u32 %v404, %v407
    %v409 = vrot.slane %v408, 4
    %v411 = vshll.u32 %v203, 16
    %v413 = vrot.slane %v411, 5
    %v414 = vsel %vm218, %v409, %v413
    %v416 = vshrl.u32 %v204, 16
    %v418 = vrot.slane %v416, 4
    %v419 = vshll.u32 %v204, 16
    %v421 = vrot.slane %v419, 5
    %v422 = vor.u32 %v418, %v421
    %v423 = vrot.slane %v422, 4
    %v425 = vshll.u32 %v205, 16
    %v427 = vrot.slane %v425, 5
    %v428 = vsel %vm218, %v423, %v427
    %v430 = vshrl.u32 %v206, 16
    %v432 = vrot.slane %v430, 4
    %v433 = vshll.u32 %v206, 16
    %v435 = vrot.slane %v433, 5
    %v436 = vor.u32 %v432, %v435
    %v437 = vrot.slane %v436, 4
    %v439 = vshll.u32 %v207, 16
    %v441 = vrot.slane %v439, 5
    %v442 = vsel %vm218, %v437, %v441
    %v444 = vshrl.u32 %v181, 16
    %v446 = vrot.slane %v444, 4
    %v447 = vshll.u32 %v181, 16
    %v449 = vrot.slane %v447, 5
    %v450 = vor.u32 %v446, %v449
    %v451 = vrot.slane %v450, 4
    %v453 = vshll.u32 %v182, 16
    %v455 = vrot.slane %v453, 5
    %v456 = vsel %vm218, %v451, %v455
    %v465 = vunpack.c.l.b16 %v165
    %v466 = vunpack.c.l.b16 %v167
    %v467 = vunpack.c.l.b16 %v169
    %v468 = vunpack.c.l.b16 %v171
    %v469 = vunpack.c.l.b16 %v173
    %v470 = vunpack.c.l.b16 %v175
    %v471 = vunpack.c.l.b16 %v177
    %v472 = vunpack.c.l.b16 %v179
    %v473 = vpack.c.b16 %v466, %v465
    %v474 = vpack.c.b16 %v468, %v467
    %v475 = vpack.c.b16 %v470, %v469
    %v476 = vpack.c.b16 %v472, %v471
    %v489 = vunpack.c.l.b16 %v183
    %v490 = vunpack.c.l.b16 %v184
    %v491 = vunpack.c.l.b16 %v185
    %v492 = vunpack.c.l.b16 %v186
    %v493 = vunpack.c.l.b16 %v187
    %v494 = vunpack.c.l.b16 %v188
    %v495 = vunpack.c.l.b16 %v189
    %v496 = vunpack.c.l.b16 %v190
    %v497 = vpack.c.b16 %v490, %v489
    %v498 = vpack.c.b16 %v492, %v491
    %v499 = vpack.c.b16 %v494, %v493
    %v500 = vpack.c.b16 %v496, %v495
    %v505 = vunpack.c.l.b16 %v232
    %v506 = vunpack.c.l.b16 %v246
    %v507 = vunpack.c.l.b16 %v260
    %v508 = vunpack.c.l.b16 %v274
    %v509 = vunpack.c.l.b16 %v288
    %v510 = vunpack.c.l.b16 %v302
    %v511 = vunpack.c.l.b16 %v316
    %v512 = vunpack.c.l.b16 %v330
    %v513 = vpack.c.b16 %v506, %v505
    %v514 = vpack.c.b16 %v508, %v507
    %v515 = vpack.c.b16 %v510, %v509
    %v516 = vpack.c.b16 %v512, %v511
    %v529 = vunpack.c.l.b16 %v192
    %v530 = vunpack.c.l.b16 %v194
    %v531 = vunpack.c.l.b16 %v196
    %v532 = vunpack.c.l.b16 %v198
    %v533 = vunpack.c.l.b16 %v200
    %v534 = vunpack.c.l.b16 %v202
    %v535 = vunpack.c.l.b16 %v204
    %v536 = vunpack.c.l.b16 %v206
    %v537 = vpack.c.b16 %v530, %v529
    %v538 = vpack.c.b16 %v532, %v531
    %v539 = vpack.c.b16 %v534, %v533
    %v540 = vpack.c.b16 %v536, %v535
    %v553 = vunpack.c.l.b16 %v208
    %v554 = vunpack.c.l.b16 %v209
    %v555 = vunpack.c.l.b16 %v210
    %v556 = vunpack.c.l.b16 %v211
    %v557 = vunpack.c.l.b16 %v212
    %v558 = vunpack.c.l.b16 %v213
    %v559 = vunpack.c.l.b16 %v214
    %v560 = vunpack.c.l.b16 %v215
    %v561 = vpack.c.b16 %v554, %v553
    %v562 = vpack.c.b16 %v556, %v555
    %v563 = vpack.c.b16 %v558, %v557
    %v564 = vpack.c.b16 %v560, %v559
    %v569 = vunpack.c.l.b16 %v344
    %v570 = vunpack.c.l.b16 %v358
    %v571 = vunpack.c.l.b16 %v372
    %v572 = vunpack.c.l.b16 %v386
    %v573 = vunpack.c.l.b16 %v400
    %v574 = vunpack.c.l.b16 %v414
    %v575 = vunpack.c.l.b16 %v428
    %v576 = vunpack.c.l.b16 %v442
    %v577 = vpack.c.b16 %v570, %v569
    %v578 = vpack.c.b16 %v572, %v571
    %v579 = vpack.c.b16 %v574, %v573
    %v580 = vpack.c.b16 %v576, %v575
    %v586 = vunpack.c.l.b16 %v181
    %v587 = vpack.c.b16 %v467, %v466
    %v588 = vpack.c.b16 %v469, %v468
    %v589 = vpack.c.b16 %v471, %v470
    %v590 = vpack.c.b16 %v586, %v472
    %v596 = vunpack.c.l.b16 %v191
    %v597 = vpack.c.b16 %v491, %v490
    %v598 = vpack.c.b16 %v493, %v492
    %v599 = vpack.c.b16 %v495, %v494
    %v600 = vpack.c.b16 %v596, %v496
    %v605 = vunpack.c.l.b16 %v456
    %v606 = vpack.c.b16 %v507, %v506
    %v607 = vpack.c.b16 %v509, %v508
    %v608 = vpack.c.b16 %v511, %v510
    %v609 = vpack.c.b16 %v605, %v512
    %v758 = vunpack.c.l.b16 %v19
    %v759 = vunpack.c.l.b16 %v20
    %v760 = vunpack.c.l.b16 %v21
    %v761 = vunpack.c.l.b16 %v22
    %v762 = vunpack.c.l.b16 %v23
    %v763 = vunpack.c.l.b16 %v24
    %v764 = vunpack.c.l.b16 %v25
    %v765 = vunpack.c.l.b16 %v26
    %v766 = vunpack.c.l.b16 %v27
    %v767 = vunpack.c.l.b16 %v28
    %v768 = vunpack.c.l.b16 %v29
    %v769 = vunpack.c.l.b16 %v30
    %v770 = vunpack.c.l.b16 %v31
    %v771 = vunpack.c.l.b16 %v32
    %v772 = vunpack.c.l.b16 %v33
    %v773 = vunpack.c.l.b16 %v34
    %v774 = vunpack.c.l.b16 %v35
    %v775 = vunpack.c.l.b16 %v36
    %v776 = vunpack.c.l.b16 %v37
    %v777 = vunpack.c.l.b16 %v38
    %v778 = vunpack.c.l.b16 %v39
    %v779 = vunpack.c.l.b16 %v40
    %v780 = vunpack.c.l.b16 %v41
    %v781 = vunpack.c.l.b16 %v42
    %v782 = vunpack.c.l.b16 %v43
    %v783 = vunpack.c.l.b16 %v44
    %v784 = vunpack.c.l.b16 %v45
    %v785 = vunpack.c.l.b16 %v46
    %v786 = vunpack.c.l.b16 %v47
    %v787 = vunpack.c.l.b16 %v48
    %v788 = vunpack.c.l.b16 %v49
    %v789 = vunpack.c.l.b16 %v50
    %v790 = vunpack.c.l.b16 %v51
    %v791 = vunpack.c.l.b16 %v52
    %v792 = vunpack.c.l.b16 %v53
    %v793 = vunpack.c.l.b16 %v54
    %v794 = vunpack.c.l.b16 %v55
    %v795 = vunpack.c.l.b16 %v56
    %v796 = vunpack.c.l.b16 %v57
    %v797 = vunpack.c.l.b16 %v58
    %v798 = vunpack.c.l.b16 %v59
    %v799 = vunpack.c.l.b16 %v60
    %v800 = vunpack.c.l.b16 %v61
    %v801 = vunpack.c.l.b16 %v62
    %v802 = vunpack.c.l.b16 %v63
    %v803 = vunpack.c.l.b16 %v64
    %v804 = vunpack.c.l.b16 %v65
    %v805 = vunpack.c.l.b16 %v66
    %v806 = vunpack.c.l.b16 %v67
    %v807 = vunpack.c.l.b16 %v68
    %v808 = vunpack.c.l.b16 %v69
    %v809 = vunpack.c.l.b16 %v70
    %v810 = vunpack.c.l.b16 %v71
    %v811 = vunpack.c.l.b16 %v72
    %v812 = vunpack.c.l.b16 %v73
    %v813 = vunpack.c.l.b16 %v74
    %v814 = vunpack.c.l.b16 %v75
    %v815 = vunpack.c.l.b16 %v76
    %v816 = vunpack.c.l.b16 %v77
    %v817 = vunpack.c.l.b16 %v78
    %v818 = vunpack.c.l.b16 %v79
    %v819 = vunpack.c.l.b16 %v80
    %v820 = vunpack.c.l.b16 %v81
    %v821 = vunpack.c.l.b16 %v82
    %v822 = vunpack.c.l.b16 %v83
    %v823 = vunpack.c.l.b16 %v84
    %v824 = vunpack.c.l.b16 %v85
    %v825 = vunpack.c.l.b16 %v86
    %v826 = vunpack.c.l.b16 %v87
    %v827 = vunpack.c.l.b16 %v88
    %v828 = vunpack.c.l.b16 %v89
    %v829 = vunpack.c.l.b16 %v90
    %v830 = vunpack.c.l.b16 %v91
    %v831 = vunpack.c.l.b16 %v92
    %v832 = vunpack.c.l.b16 %v93
    %v833 = vunpack.c.l.b16 %v94
    %v834 = vunpack.c.l.b16 %v95
    %v835 = vunpack.c.l.b16 %v96
    %v836 = vunpack.c.l.b16 %v97
    %v837 = vunpack.c.l.b16 %v98
    %v838 = vunpack.c.l.b16 %v99
    %v839 = vunpack.c.l.b16 %v100
    %v840 = vunpack.c.l.b16 %v101
    %v841 = vunpack.c.l.b16 %v102
    %v842 = vunpack.c.l.b16 %v103
    %v843 = vunpack.c.l.b16 %v104
    %v844 = vunpack.c.l.b16 %v105
    %v845 = vunpack.c.l.b16 %v106
    %v846 = vunpack.c.l.b16 %v107
    %v847 = vunpack.c.l.b16 %v108
    %v848 = vunpack.c.l.b16 %v109
    %v849 = vunpack.c.l.b16 %v110
    %v850 = vunpack.c.l.b16 %v111
    %v851 = vunpack.c.l.b16 %v112
    %v852 = vunpack.c.l.b16 %v113
    %v853 = vunpack.c.l.b16 %v114
    %v854 = vunpack.c.l.b16 %v115
    %v855 = vunpack.c.l.b16 %v116
    %v856 = vunpack.c.l.b16 %v117
    %v857 = vunpack.c.l.b16 %v118
    %v858 = vunpack.c.l.b16 %v119
    %v859 = vunpack.c.l.b16 %v120
    %v860 = vunpack.c.l.b16 %v121
    %v861 = vunpack.c.l.b16 %v122
    %v862 = vunpack.c.l.b16 %v123
    %v863 = vunpack.c.l.b16 %v124
    %v864 = vunpack.c.l.b16 %v125
    %v865 = vunpack.c.l.b16 %v126
    %v866 = vunpack.c.l.b16 %v127
    %v867 = vunpack.c.l.b16 %v128
    %v868 = vunpack.c.l.b16 %v129
    %v869 = vunpack.c.l.b16 %v130
    %v870 = vunpack.c.l.b16 %v131
    %v871 = vunpack.c.l.b16 %v132
    %v872 = vunpack.c.l.b16 %v133
    %v873 = vunpack.c.l.b16 %v134
    %v874 = vunpack.c.l.b16 %v135
    %v875 = vunpack.c.l.b16 %v136
    %v876 = vunpack.c.l.b16 %v137
    %v877 = vunpack.c.l.b16 %v138
    %v878 = vunpack.c.l.b16 %v139
    %v879 = vunpack.c.l.b16 %v140
    %v880 = vunpack.c.l.b16 %v141
    %v881 = vunpack.c.l.b16 %v142
    %v882 = vunpack.c.l.b16 %v143
    %v883 = vunpack.c.l.b16 %v144
    %v884 = vunpack.c.l.b16 %v145
    %v885 = vunpack.c.l.b16 %v146
    %v886 = vunpack.c.l.b16 %v147
    %v887 = vunpack.c.l.b16 %v148
    %v888 = vunpack.c.l.b16 %v149
    %v889 = vunpack.c.l.b16 %v150
    %v890 = vunpack.c.l.b16 %v151
    %v891 = vunpack.c.l.b16 %v152
    %v892 = vunpack.c.l.b16 %v153
    %v893 = vunpack.c.l.b16 %v154
    %v894 = vunpack.c.l.b16 %v155
    %v895 = vunpack.c.l.b16 %v156
    %v896 = vunpack.c.l.b16 %v157
    %v897 = vunpack.c.l.b16 %v158
    %v898 = vunpack.c.l.b16 %v159
    %v899 = vunpack.c.l.b16 %v160
    %v900 = vunpack.c.l.b16 %v161
    %v901 = vunpack.c.l.b16 %v162
    %v902 = vpack.c.b16 %v759, %v758
    %v903 = vpack.c.b16 %v761, %v760
    %v904 = vpack.c.b16 %v763, %v762
    %v905 = vpack.c.b16 %v765, %v764
    %v906 = vpack.c.b16 %v767, %v766
    %v907 = vpack.c.b16 %v769, %v768
    %v908 = vpack.c.b16 %v771, %v770
    %v909 = vpack.c.b16 %v773, %v772
    %v910 = vpack.c.b16 %v775, %v774
    %v911 = vpack.c.b16 %v777, %v776
    %v912 = vpack.c.b16 %v779, %v778
    %v913 = vpack.c.b16 %v781, %v780
    %v914 = vpack.c.b16 %v783, %v782
    %v915 = vpack.c.b16 %v785, %v784
    %v916 = vpack.c.b16 %v787, %v786
    %v917 = vpack.c.b16 %v789, %v788
    %v918 = vpack.c.b16 %v791, %v790
    %v919 = vpack.c.b16 %v793, %v792
    %v920 = vpack.c.b16 %v795, %v794
    %v921 = vpack.c.b16 %v797, %v796
    %v922 = vpack.c.b16 %v799, %v798
    %v923 = vpack.c.b16 %v801, %v800
    %v924 = vpack.c.b16 %v803, %v802
    %v925 = vpack.c.b16 %v805, %v804
    %v926 = vpack.c.b16 %v807, %v806
    %v927 = vpack.c.b16 %v809, %v808
    %v928 = vpack.c.b16 %v811, %v810
    %v929 = vpack.c.b16 %v813, %v812
    %v930 = vpack.c.b16 %v815, %v814
    %v931 = vpack.c.b16 %v817, %v816
    %v932 = vpack.c.b16 %v819, %v818
    %v933 = vpack.c.b16 %v821, %v820
    %v934 = vpack.c.b16 %v823, %v822
    %v935 = vpack.c.b16 %v825, %v824
    %v936 = vpack.c.b16 %v827, %v826
    %v937 = vpack.c.b16 %v829, %v828
    %v938 = vpack.c.b16 %v831, %v830
    %v939 = vpack.c.b16 %v833, %v832
    %v940 = vpack.c.b16 %v835, %v834
    %v941 = vpack.c.b16 %v837, %v836
    %v942 = vpack.c.b16 %v839, %v838
    %v943 = vpack.c.b16 %v841, %v840
    %v944 = vpack.c.b16 %v843, %v842
    %v945 = vpack.c.b16 %v845, %v844
    %v946 = vpack.c.b16 %v847, %v846
    %v947 = vpack.c.b16 %v849, %v848
    %v948 = vpack.c.b16 %v851, %v850
    %v949 = vpack.c.b16 %v853, %v852
    %v950 = vpack.c.b16 %v855, %v854
    %v951 = vpack.c.b16 %v857, %v856
    %v952 = vpack.c.b16 %v859, %v858
    %v953 = vpack.c.b16 %v861, %v860
    %v954 = vpack.c.b16 %v863, %v862
    %v955 = vpack.c.b16 %v865, %v864
    %v956 = vpack.c.b16 %v867, %v866
    %v957 = vpack.c.b16 %v869, %v868
    %v958 = vpack.c.b16 %v871, %v870
    %v959 = vpack.c.b16 %v873, %v872
    %v960 = vpack.c.b16 %v875, %v874
    %v961 = vpack.c.b16 %v877, %v876
    %v962 = vpack.c.b16 %v879, %v878
    %v963 = vpack.c.b16 %v881, %v880
    %v964 = vpack.c.b16 %v883, %v882
    %v965 = vpack.c.b16 %v885, %v884
    %v966 = vpack.c.b16 %v887, %v886
    %v967 = vpack.c.b16 %v889, %v888
    %v968 = vpack.c.b16 %v891, %v890
    %v969 = vpack.c.b16 %v893, %v892
    %v970 = vpack.c.b16 %v895, %v894
    %v971 = vpack.c.b16 %v897, %v896
    %v972 = vpack.c.b16 %v899, %v898
    %v973 = vpack.c.b16 %v901, %v900
    %1046 = vmatprep.subr.bf16.mxu0 0
    %1047 = vmatpush1.bf16.msra.mxu0 %v909
    %1048 = vmatprep.subr.bf16.mxu0 0
    %1049 = vmatpush1.bf16.msra.mxu0 %v908
    %1050 = vmatprep.subr.bf16.mxu0 0
    %1051 = vmatpush1.bf16.msra.mxu0 %v907
    %1052 = vmatprep.subr.bf16.mxu0 0
    %1053 = vmatpush1.bf16.msra.mxu0 %v906
    %1054 = vmatprep.subr.bf16.mxu0 0
    %1055 = vmatpush1.bf16.msra.mxu0 %v905
    %1056 = vmatprep.subr.bf16.mxu0 0
    %1057 = vmatpush1.bf16.msra.mxu0 %v904
    %1058 = vmatprep.subr.bf16.mxu0 0
    %1059 = vmatpush1.bf16.msra.mxu0 %v903
    %1060 = vmatprep.subr.bf16.mxu0 0
    %1061 = vmatpush1.bf16.msra.mxu0 %v902
    %1062 = vmatprep.subr.bf16.mxu0 0
    %1063 = vmatpush2.bf16.msra.mxu0 %v917
    %1064 = vmatprep.subr.bf16.mxu0 0
    %1065 = vmatpush2.bf16.msra.mxu0 %v916
    %1066 = vmatprep.subr.bf16.mxu0 0
    %1067 = vmatpush2.bf16.msra.mxu0 %v915
    %1068 = vmatprep.subr.bf16.mxu0 0
    %1069 = vmatpush2.bf16.msra.mxu0 %v914
    %1070 = vmatprep.subr.bf16.mxu0 0
    %1071 = vmatpush2.bf16.msra.mxu0 %v913
    %1072 = vmatprep.subr.bf16.mxu0 0
    %1073 = vmatpush2.bf16.msra.mxu0 %v912
    %1074 = vmatprep.subr.bf16.mxu0 0
    %1075 = vmatpush2.bf16.msra.mxu0 %v911
    %1076 = vmatprep.subr.bf16.mxu0 0
    %1077 = vmatpush2.bf16.msra.mxu0 %v910
    %1078 = vmatprep.mubr.bf16.mxu0 %v497
    %1079 = vmatmul.mubr.bf16.gmra.mxu0 %v473
    %v1080 = vpop.f32.mrf.mxu0
    %v1081 = vadd.f32 0.0, %v1080
    %v1082 = vpop.f32.mrf.mxu0
    %v1083 = vpop.f32.mrf.mxu0
    %v1084 = vadd.f32 0.0, %v1083
    %v1085 = vpop.f32.mrf.mxu0
    %1086 = vmatprep.mubr.bf16.mxu0 %v498
    %1087 = vmatmul.mubr.bf16.gmra.mxu0 %v474
    %v1088 = vpop.f32.mrf.mxu0
    %v1089 = vadd.f32 0.0, %v1088
    %v1090 = vpop.f32.mrf.mxu0
    %v1091 = vpop.f32.mrf.mxu0
    %v1092 = vadd.f32 0.0, %v1091
    %v1093 = vpop.f32.mrf.mxu0
    %1094 = vmatprep.mubr.bf16.mxu0 %v499
    %1095 = vmatmul.mubr.bf16.gmra.mxu0 %v475
    %v1096 = vpop.f32.mrf.mxu0
    %v1097 = vadd.f32 0.0, %v1096
    %v1098 = vpop.f32.mrf.mxu0
    %v1099 = vpop.f32.mrf.mxu0
    %v1100 = vadd.f32 0.0, %v1099
    %v1101 = vpop.f32.mrf.mxu0
    %1102 = vmatprep.mubr.bf16.mxu0 %v500
    %1103 = vmatmul.mubr.bf16.gmra.mxu0 %v476
    %v1104 = vpop.f32.mrf.mxu0
    %v1105 = vadd.f32 0.0, %v1104
    %v1106 = vpop.f32.mrf.mxu0
    %v1107 = vpop.f32.mrf.mxu0
    %v1108 = vadd.f32 0.0, %v1107
    %v1109 = vpop.f32.mrf.mxu0
    %1110 = vdwg.mxu0
    %1111 = vmatprep.subr.bf16.mxu0 0
    %1112 = vmatpush1.bf16.msra.mxu0 %v925
    %1113 = vmatprep.subr.bf16.mxu0 0
    %1114 = vmatpush1.bf16.msra.mxu0 %v924
    %1115 = vmatprep.subr.bf16.mxu0 0
    %1116 = vmatpush1.bf16.msra.mxu0 %v923
    %1117 = vmatprep.subr.bf16.mxu0 0
    %1118 = vmatpush1.bf16.msra.mxu0 %v922
    %1119 = vmatprep.subr.bf16.mxu0 0
    %1120 = vmatpush1.bf16.msra.mxu0 %v921
    %1121 = vmatprep.subr.bf16.mxu0 0
    %1122 = vmatpush1.bf16.msra.mxu0 %v920
    %1123 = vmatprep.subr.bf16.mxu0 0
    %1124 = vmatpush1.bf16.msra.mxu0 %v919
    %1125 = vmatprep.subr.bf16.mxu0 0
    %1126 = vmatpush1.bf16.msra.mxu0 %v918
    %1127 = vmatprep.subr.bf16.mxu0 0
    %1128 = vmatpush2.bf16.msra.mxu0 %v933
    %1129 = vmatprep.subr.bf16.mxu0 0
    %1130 = vmatpush2.bf16.msra.mxu0 %v932
    %1131 = vmatprep.subr.bf16.mxu0 0
    %1132 = vmatpush2.bf16.msra.mxu0 %v931
    %1133 = vmatprep.subr.bf16.mxu0 0
    %1134 = vmatpush2.bf16.msra.mxu0 %v930
    %1135 = vmatprep.subr.bf16.mxu0 0
    %1136 = vmatpush2.bf16.msra.mxu0 %v929
    %1137 = vmatprep.subr.bf16.mxu0 0
    %1138 = vmatpush2.bf16.msra.mxu0 %v928
    %1139 = vmatprep.subr.bf16.mxu0 0
    %1140 = vmatpush2.bf16.msra.mxu0 %v927
    %1141 = vmatprep.subr.bf16.mxu0 0
    %1142 = vmatpush2.bf16.msra.mxu0 %v926
    %1143 = vmatprep.mubr.bf16.mxu0 %v537
    %1144 = vmatmul.mubr.bf16.gmra.mxu0 %v513
    %v1145 = vpop.f32.mrf.mxu0
    %v1146 = vadd.f32 %v1081, %v1145
    %v1147 = vpop.f32.mrf.mxu0
    %v1148 = vpop.f32.mrf.mxu0
    %v1149 = vadd.f32 %v1084, %v1148
    %v1150 = vpop.f32.mrf.mxu0
    %1151 = vmatprep.mubr.bf16.mxu0 %v538
    %1152 = vmatmul.mubr.bf16.gmra.mxu0 %v514
    %v1153 = vpop.f32.mrf.mxu0
    %v1154 = vadd.f32 %v1089, %v1153
    %v1155 = vpop.f32.mrf.mxu0
    %v1156 = vpop.f32.mrf.mxu0
    %v1157 = vadd.f32 %v1092, %v1156
    %v1158 = vpop.f32.mrf.mxu0
    %1159 = vmatprep.mubr.bf16.mxu0 %v539
    %1160 = vmatmul.mubr.bf16.gmra.mxu0 %v515
    %v1161 = vpop.f32.mrf.mxu0
    %v1162 = vadd.f32 %v1097, %v1161
    %v1163 = vpop.f32.mrf.mxu0
    %v1164 = vpop.f32.mrf.mxu0
    %v1165 = vadd.f32 %v1100, %v1164
    %v1166 = vpop.f32.mrf.mxu0
    %1167 = vmatprep.mubr.bf16.mxu0 %v540
    %1168 = vmatmul.mubr.bf16.gmra.mxu0 %v516
    %v1169 = vpop.f32.mrf.mxu0
    %v1170 = vadd.f32 %v1105, %v1169
    %v1171 = vpop.f32.mrf.mxu0
    %v1172 = vpop.f32.mrf.mxu0
    %v1173 = vadd.f32 %v1108, %v1172
    %v1174 = vpop.f32.mrf.mxu0
    %1175 = vdwg.mxu0
    %1176 = vmatprep.subr.bf16.mxu0 0
    %1177 = vmatpush1.bf16.msra.mxu0 %v941
    %1178 = vmatprep.subr.bf16.mxu0 0
    %1179 = vmatpush1.bf16.msra.mxu0 %v940
    %1180 = vmatprep.subr.bf16.mxu0 0
    %1181 = vmatpush1.bf16.msra.mxu0 %v939
    %1182 = vmatprep.subr.bf16.mxu0 0
    %1183 = vmatpush1.bf16.msra.mxu0 %v938
    %1184 = vmatprep.subr.bf16.mxu0 0
    %1185 = vmatpush1.bf16.msra.mxu0 %v937
    %1186 = vmatprep.subr.bf16.mxu0 0
    %1187 = vmatpush1.bf16.msra.mxu0 %v936
    %1188 = vmatprep.subr.bf16.mxu0 0
    %1189 = vmatpush1.bf16.msra.mxu0 %v935
    %1190 = vmatprep.subr.bf16.mxu0 0
    %1191 = vmatpush1.bf16.msra.mxu0 %v934
    %1192 = vmatprep.subr.bf16.mxu0 0
    %1193 = vmatpush2.bf16.msra.mxu0 %v949
    %1194 = vmatprep.subr.bf16.mxu0 0
    %1195 = vmatpush2.bf16.msra.mxu0 %v948
    %1196 = vmatprep.subr.bf16.mxu0 0
    %1197 = vmatpush2.bf16.msra.mxu0 %v947
    %1198 = vmatprep.subr.bf16.mxu0 0
    %1199 = vmatpush2.bf16.msra.mxu0 %v946
    %1200 = vmatprep.subr.bf16.mxu0 0
    %1201 = vmatpush2.bf16.msra.mxu0 %v945
    %1202 = vmatprep.subr.bf16.mxu0 0
    %1203 = vmatpush2.bf16.msra.mxu0 %v944
    %1204 = vmatprep.subr.bf16.mxu0 0
    %1205 = vmatpush2.bf16.msra.mxu0 %v943
    %1206 = vmatprep.subr.bf16.mxu0 0
    %1207 = vmatpush2.bf16.msra.mxu0 %v942
    %1208 = vmatprep.mubr.bf16.mxu0 %v577
    %1209 = vmatmul.mubr.bf16.gmra.mxu0 %v561
    %v1210 = vpop.f32.mrf.mxu0
    %v1211 = vadd.f32 %v1146, %v1210
    %v1212 = vpop.f32.mrf.mxu0
    %v1213 = vpop.f32.mrf.mxu0
    %v1214 = vadd.f32 %v1149, %v1213
    %v1215 = vpop.f32.mrf.mxu0
    %1216 = vmatprep.mubr.bf16.mxu0 %v578
    %1217 = vmatmul.mubr.bf16.gmra.mxu0 %v562
    %v1218 = vpop.f32.mrf.mxu0
    %v1219 = vadd.f32 %v1154, %v1218
    %v1220 = vpop.f32.mrf.mxu0
    %v1221 = vpop.f32.mrf.mxu0
    %v1222 = vadd.f32 %v1157, %v1221
    %v1223 = vpop.f32.mrf.mxu0
    %1224 = vmatprep.mubr.bf16.mxu0 %v579
    %1225 = vmatmul.mubr.bf16.gmra.mxu0 %v563
    %v1226 = vpop.f32.mrf.mxu0
    %v1227 = vadd.f32 %v1162, %v1226
    %v1228 = vpop.f32.mrf.mxu0
    %v1229 = vpop.f32.mrf.mxu0
    %v1230 = vadd.f32 %v1165, %v1229
    %v1231 = vpop.f32.mrf.mxu0
    %1232 = vmatprep.mubr.bf16.mxu0 %v580
    %1233 = vmatmul.mubr.bf16.gmra.mxu0 %v564
    %v1234 = vpop.f32.mrf.mxu0
    %v1235 = vadd.f32 %v1170, %v1234
    %v1236 = vpop.f32.mrf.mxu0
    %v1237 = vpop.f32.mrf.mxu0
    %v1238 = vadd.f32 %v1173, %v1237
    %v1239 = vpop.f32.mrf.mxu0
    %1240 = vdwg.mxu0
    %1241 = vmatprep.subr.bf16.mxu0 0
    %1242 = vmatpush1.bf16.msra.mxu0 %v957
    %1243 = vmatprep.subr.bf16.mxu0 0
    %1244 = vmatpush1.bf16.msra.mxu0 %v956
    %1245 = vmatprep.subr.bf16.mxu0 0
    %1246 = vmatpush1.bf16.msra.mxu0 %v955
    %1247 = vmatprep.subr.bf16.mxu0 0
    %1248 = vmatpush1.bf16.msra.mxu0 %v954
    %1249 = vmatprep.subr.bf16.mxu0 0
    %1250 = vmatpush1.bf16.msra.mxu0 %v953
    %1251 = vmatprep.subr.bf16.mxu0 0
    %1252 = vmatpush1.bf16.msra.mxu0 %v952
    %1253 = vmatprep.subr.bf16.mxu0 0
    %1254 = vmatpush1.bf16.msra.mxu0 %v951
    %1255 = vmatprep.subr.bf16.mxu0 0
    %1256 = vmatpush1.bf16.msra.mxu0 %v950
    %1257 = vmatprep.subr.bf16.mxu0 0
    %1258 = vmatpush2.bf16.msra.mxu0 %v965
    %1259 = vmatprep.subr.bf16.mxu0 0
    %1260 = vmatpush2.bf16.msra.mxu0 %v964
    %1261 = vmatprep.subr.bf16.mxu0 0
    %1262 = vmatpush2.bf16.msra.mxu0 %v963
    %1263 = vmatprep.subr.bf16.mxu0 0
    %1264 = vmatpush2.bf16.msra.mxu0 %v962
    %1265 = vmatprep.subr.bf16.mxu0 0
    %1266 = vmatpush2.bf16.msra.mxu0 %v961
    %1267 = vmatprep.subr.bf16.mxu0 0
    %1268 = vmatpush2.bf16.msra.mxu0 %v960
    %1269 = vmatprep.subr.bf16.mxu0 0
    %1270 = vmatpush2.bf16.msra.mxu0 %v959
    %1271 = vmatprep.subr.bf16.mxu0 0
    %1272 = vmatpush2.bf16.msra.mxu0 %v958
    %1273 = vmatprep.mubr.bf16.mxu0 %v597
    %1274 = vmatmul.mubr.bf16.gmra.mxu0 %v587
    %v1275 = vpop.f32.mrf.mxu0
    %v1276 = vadd.f32 %v1211, %v1275
    %v1277 = vpop.f32.mrf.mxu0
    %v1278 = vpop.f32.mrf.mxu0
    %v1279 = vadd.f32 %v1214, %v1278
    %v1280 = vpop.f32.mrf.mxu0
    %1281 = vmatprep.mubr.bf16.mxu0 %v598
    %1282 = vmatmul.mubr.bf16.gmra.mxu0 %v588
    %v1283 = vpop.f32.mrf.mxu0
    %v1284 = vadd.f32 %v1219, %v1283
    %v1285 = vpop.f32.mrf.mxu0
    %v1286 = vpop.f32.mrf.mxu0
    %v1287 = vadd.f32 %v1222, %v1286
    %v1288 = vpop.f32.mrf.mxu0
    %1289 = vmatprep.mubr.bf16.mxu0 %v599
    %1290 = vmatmul.mubr.bf16.gmra.mxu0 %v589
    %v1291 = vpop.f32.mrf.mxu0
    %v1292 = vadd.f32 %v1227, %v1291
    %v1293 = vpop.f32.mrf.mxu0
    %v1294 = vpop.f32.mrf.mxu0
    %v1295 = vadd.f32 %v1230, %v1294
    %v1296 = vpop.f32.mrf.mxu0
    %1297 = vmatprep.mubr.bf16.mxu0 %v600
    %1298 = vmatmul.mubr.bf16.gmra.mxu0 %v590
    %v1299 = vpop.f32.mrf.mxu0
    %v1300 = vadd.f32 %v1235, %v1299
    %v1301 = vpop.f32.mrf.mxu0
    %v1302 = vpop.f32.mrf.mxu0
    %v1303 = vadd.f32 %v1238, %v1302
    %v1304 = vpop.f32.mrf.mxu0
    %1305 = vdwg.mxu0
    %1306 = vmatprep.subr.bf16.mxu0 0
    %1307 = vmatpush1.bf16.msra.mxu0 %v973
    %1308 = vmatprep.subr.bf16.mxu0 0
    %1309 = vmatpush1.bf16.msra.mxu0 %v972
    %1310 = vmatprep.subr.bf16.mxu0 0
    %1311 = vmatpush1.bf16.msra.mxu0 %v971
    %1312 = vmatprep.subr.bf16.mxu0 0
    %1313 = vmatpush1.bf16.msra.mxu0 %v970
    %1314 = vmatprep.subr.bf16.mxu0 0
    %1315 = vmatpush1.bf16.msra.mxu0 %v969
    %1316 = vmatprep.subr.bf16.mxu0 0
    %1317 = vmatpush1.bf16.msra.mxu0 %v968
    %1318 = vmatprep.subr.bf16.mxu0 0
    %1319 = vmatpush1.bf16.msra.mxu0 %v967
    %1320 = vmatprep.subr.bf16.mxu0 0
    %1321 = vmatpush1.bf16.msra.mxu0 %v966
    %1322 = vmatprep.subr.bf16.mxu0 0
    %1323 = vmatpush2.bf16.msra.mxu0 0
    %1324 = vmatprep.subr.bf16.mxu0 0
    %1325 = vmatpush2.bf16.msra.mxu0 0
    %1326 = vmatprep.subr.bf16.mxu0 0
    %1327 = vmatpush2.bf16.msra.mxu0 0
    %1328 = vmatprep.subr.bf16.mxu0 0
    %1329 = vmatpush2.bf16.msra.mxu0 0
    %1330 = vmatprep.subr.bf16.mxu0 0
    %1331 = vmatpush2.bf16.msra.mxu0 0
    %1332 = vmatprep.subr.bf16.mxu0 0
    %1333 = vmatpush2.bf16.msra.mxu0 0
    %1334 = vmatprep.subr.bf16.mxu0 0
    %1335 = vmatpush2.bf16.msra.mxu0 0
    %1336 = vmatprep.subr.bf16.mxu0 0
    %1337 = vmatpush2.bf16.msra.mxu0 0
    %1338 = vmatprep.mubr.bf16.mxu0 0
    %1339 = vmatmul.mubr.bf16.gmra.mxu0 %v606
    %v1340 = vpop.f32.mrf.mxu0
    %v1341 = vadd.f32 %v1276, %v1340
    %v1342 = vpop.f32.mrf.mxu0
    %v1343 = vpop.f32.mrf.mxu0
    %v1344 = vadd.f32 %v1279, %v1343
    %v1345 = vpop.f32.mrf.mxu0
    %1346 = vmatprep.mubr.bf16.mxu0 0
    %1347 = vmatmul.mubr.bf16.gmra.mxu0 %v607
    %v1348 = vpop.f32.mrf.mxu0
    %v1349 = vadd.f32 %v1284, %v1348
    %v1350 = vpop.f32.mrf.mxu0
    %v1351 = vpop.f32.mrf.mxu0
    %v1352 = vadd.f32 %v1287, %v1351
    %v1353 = vpop.f32.mrf.mxu0
    %1354 = vmatprep.mubr.bf16.mxu0 0
    %1355 = vmatmul.mubr.bf16.gmra.mxu0 %v608
    %v1356 = vpop.f32.mrf.mxu0
    %v1357 = vadd.f32 %v1292, %v1356
    %v1358 = vpop.f32.mrf.mxu0
    %v1359 = vpop.f32.mrf.mxu0
    %v1360 = vadd.f32 %v1295, %v1359
    %v1361 = vpop.f32.mrf.mxu0
    %1362 = vmatprep.mubr.bf16.mxu0 0
    %1363 = vmatmul.mubr.bf16.gmra.mxu0 %v609
    %v1364 = vpop.f32.mrf.mxu0
    %v1365 = vadd.f32 %v1300, %v1364
    %v1366 = vpop.f32.mrf.mxu0
    %v1367 = vpop.f32.mrf.mxu0
    %v1368 = vadd.f32 %v1303, %v1367
    %v1369 = vpop.f32.mrf.mxu0
    %1370 = vdwg.mxu0
    %v1371 = vadd.f32 %v1341, %v1344
    %v1372 = vadd.f32 %v1371, %v1349
    %v1373 = vadd.f32 %v1372, %v1352
    %v1374 = vadd.f32 %v1373, %v1357
    %v1375 = vadd.f32 %v1374, %v1360
    %v1376 = vadd.f32 %v1375, %v1365
    %v1377 = vadd.f32 %v1376, %v1368
    %1378 = vadd.xlane.f32.xlu0 %v1377
    %v1379 = vpop.xlane.xlu0 %1378
    %v1380 = vrot.slane %v1379, 4
    %v1381 = vadd.f32 %v1379, %v1380
    %v1382 = vrot.slane %v1381, 2
    %v1383 = vadd.f32 %v1381, %v1382
    %v1384 = vrot.slane %v1383, 1
    %v1385 = vadd.f32 %v1383, %v1384
    %s1386 = vtos %v1385
    %v1387 = vmul.f32 %v1341, %v1341
    %v1388 = vmul.f32 %v1344, %v1344
    %v1389 = vmul.f32 %v1349, %v1349
    %v1390 = vmul.f32 %v1352, %v1352
    %v1391 = vmul.f32 %v1357, %v1357
    %v1392 = vmul.f32 %v1360, %v1360
    %v1393 = vmul.f32 %v1365, %v1365
    %v1394 = vmul.f32 %v1368, %v1368
    %v1395 = vadd.f32 %v1387, %v1388
    %v1396 = vadd.f32 %v1395, %v1389
    %v1397 = vadd.f32 %v1396, %v1390
    %v1398 = vadd.f32 %v1397, %v1391
    %v1399 = vadd.f32 %v1398, %v1392
    %v1400 = vadd.f32 %v1399, %v1393
    %v1401 = vadd.f32 %v1400, %v1394
    %1402 = vadd.xlane.f32.xlu0 %v1401
    %v1403 = vpop.xlane.xlu0 %1402
    %v1404 = vrot.slane %v1403, 4
    %v1405 = vadd.f32 %v1403, %v1404
    %v1406 = vrot.slane %v1405, 2
    %v1407 = vadd.f32 %v1405, %v1406
    %v1408 = vrot.slane %v1407, 1
    %v1409 = vadd.f32 %v1407, %v1408
    %s1410 = vtos %v1409
    %s1411 = smul.f32 %s1386, 0.001953125
    %s1412 = smul.f32 %s1410, 0.001953125
    %s1413 = smul.f32 %s1411, %s1411
    %s1414 = ssub.f32 %s1412, %s1413
    %s1415 = sadd.f32 %s1414, 1e-05
    %v1416 = vstv %s1415
    %v1417 = vrsqrt.pop %v1416
    %s1418 = vtos %v1417
    %v1419 = vstv %s1418
    %v1420 = vmul.f32 %v163, %v1419
    %v1421 = vstv %s1411
    %v1422 = vmul.f32 %v1421, %v1420
    %v1423 = vsub.f32 %v164, %v1422
    %v1425 = vlaneseq
    %v1426 = vshrl.u32 %v1425, 7
    %v1427 = vsub.s32 0, %v1426
    %v1428 = vrot.slane %v1420, %v1427
    %v1430 = vmul.f32 %v1341, %v1428
    %v1431 = vmul.f32 %v1344, %v1428
    %v1432 = vmul.f32 %v1349, %v1428
    %v1433 = vmul.f32 %v1352, %v1428
    %v1434 = vmul.f32 %v1357, %v1428
    %v1435 = vmul.f32 %v1360, %v1428
    %v1436 = vmul.f32 %v1365, %v1428
    %v1437 = vmul.f32 %v1368, %v1428
    %v1439 = vlaneseq
    %v1440 = vshrl.u32 %v1439, 7
    %v1441 = vsub.s32 0, %v1440
    %v1442 = vrot.slane %v1423, %v1441
    %v1444 = vadd.f32 %v1430, %v1442
    %v1445 = vadd.f32 %v1431, %v1442
    %v1446 = vadd.f32 %v1432, %v1442
    %v1447 = vadd.f32 %v1433, %v1442
    %v1448 = vadd.f32 %v1434, %v1442
    %v1449 = vadd.f32 %v1435, %v1442
    %v1450 = vadd.f32 %v1436, %v1442
    %v1451 = vadd.f32 %v1437, %v1442
    %1452 = vst [vmem:[#allocation2] sm:$0xff] %v1444
    %1453 = vst [vmem:[#allocation2 + $0x8] sm:$0xff] %v1445
    %1454 = vst [vmem:[#allocation2 + $0x10] sm:$0xff] %v1446
    %1455 = vst [vmem:[#allocation2 + $0x18] sm:$0xff] %v1447
    %1456 = vst [vmem:[#allocation2 + $0x20] sm:$0xff] %v1448
    %1457 = vst [vmem:[#allocation2 + $0x28] sm:$0xff] %v1449
    %1458 = vst [vmem:[#allocation2 + $0x30] sm:$0xff] %v1450
    %1459 = vst [vmem:[#allocation2 + $0x38] sm:$0xff] %v1451
    %s1460 = scalar_lea.vmem %s0, 288
    %v1461 = vld [vmem:[%s1460] sm:$0xf]
    %v1462 = vld [vmem:[%s1460 + $0x4] sm:$0x1]
    %v1463 = vld [vmem:[%s1460 + $0x8] sm:$0xf]
    %v1464 = vld [vmem:[%s1460 + $0xc] sm:$0x1]
    %v1465 = vld [vmem:[%s1460 + $0x10] sm:$0xf]
    %v1466 = vld [vmem:[%s1460 + $0x14] sm:$0x1]
    %v1467 = vld [vmem:[%s1460 + $0x18] sm:$0xf]
    %v1468 = vld [vmem:[%s1460 + $0x1c] sm:$0x1]
    %v1469 = vld [vmem:[%s1460 + $0x20] sm:$0xf]
    %v1470 = vld [vmem:[%s1460 + $0x24] sm:$0x1]
    %v1471 = vld [vmem:[%s1460 + $0x28] sm:$0xf]
    %v1472 = vld [vmem:[%s1460 + $0x2c] sm:$0x1]
    %v1473 = vld [vmem:[%s1460 + $0x30] sm:$0xf]
    %v1474 = vld [vmem:[%s1460 + $0x34] sm:$0x1]
    %v1475 = vld [vmem:[%s1460 + $0x38] sm:$0xf]
    %v1476 = vld [vmem:[%s1460 + $0x3c] sm:$0x1]
    %v1477 = vld [vmem:[%s1460 + $0x40] sm:$0xf]
    %v1478 = vld [vmem:[%s1460 + $0x44] sm:$0x1]
    %v1479 = vld [vmem:[%s1460 + $0x48] sm:$0xf]
    %v1480 = vld [vmem:[%s1460 + $0x50] sm:$0xf]
    %v1481 = vld [vmem:[%s1460 + $0x58] sm:$0xf]
    %v1482 = vld [vmem:[%s1460 + $0x60] sm:$0xf]
    %v1483 = vld [vmem:[%s1460 + $0x68] sm:$0xf]
    %v1484 = vld [vmem:[%s1460 + $0x70] sm:$0xf]
    %v1485 = vld [vmem:[%s1460 + $0x78] sm:$0xf]
    %v1486 = vld [vmem:[%s1460 + $0x80] sm:$0xf]
    %v1487 = vld [vmem:[%s1460 + $0x88] sm:$0xf]
    %v1488 = vld [vmem:[%s1460 + $0x90] sm:$0xf]
    %v1489 = vld [vmem:[%s1460 + $0x94] sm:$0x1]
    %v1490 = vld [vmem:[%s1460 + $0x98] sm:$0xf]
    %v1491 = vld [vmem:[%s1460 + $0x9c] sm:$0x1]
    %v1492 = vld [vmem:[%s1460 + $0xa0] sm:$0xf]
    %v1493 = vld [vmem:[%s1460 + $0xa4] sm:$0x1]
    %v1494 = vld [vmem:[%s1460 + $0xa8] sm:$0xf]
    %v1495 = vld [vmem:[%s1460 + $0xac] sm:$0x1]
    %v1496 = vld [vmem:[%s1460 + $0xb0] sm:$0xf]
    %v1497 = vld [vmem:[%s1460 + $0xb4] sm:$0x1]
    %v1498 = vld [vmem:[%s1460 + $0xb8] sm:$0xf]
    %v1499 = vld [vmem:[%s1460 + $0xbc] sm:$0x1]
    %v1500 = vld [vmem:[%s1460 + $0xc0] sm:$0xf]
    %v1501 = vld [vmem:[%s1460 + $0xc4] sm:$0x1]
    %v1502 = vld [vmem:[%s1460 + $0xc8] sm:$0xf]
    %v1503 = vld [vmem:[%s1460 + $0xcc] sm:$0x1]
    %v1504 = vld [vmem:[%s1460 + $0xd8] sm:$0xf]
    %v1505 = vld [vmem:[%s1460 + $0xe0] sm:$0xf]
    %v1506 = vld [vmem:[%s1460 + $0xe8] sm:$0xf]
    %v1507 = vld [vmem:[%s1460 + $0xf0] sm:$0xf]
    %v1508 = vld [vmem:[%s1460 + $0xf8] sm:$0xf]
    %v1509 = vld [vmem:[%s1460 + $0x100] sm:$0xf]
    %v1510 = vld [vmem:[%s1460 + $0x108] sm:$0xf]
    %v1511 = vld [vmem:[%s1460 + $0x110] sm:$0xf]
    %v1513 = vshrl.u32 %v1461, 16
    %v1515 = vrot.slane %v1513, 4
    %v1516 = vshll.u32 %v1461, 16
    %v1518 = vrot.slane %v1516, 5
    %v1519 = vor.u32 %v1515, %v1518
    %v1520 = vrot.slane %v1519, 4
    %v1522 = vshll.u32 %v1462, 16
    %v1524 = vrot.slane %v1522, 5
    %v1525 = vsel %vm218, %v1520, %v1524
    %v1527 = vshrl.u32 %v1463, 16
    %v1529 = vrot.slane %v1527, 4
    %v1530 = vshll.u32 %v1463, 16
    %v1532 = vrot.slane %v1530, 5
    %v1533 = vor.u32 %v1529, %v1532
    %v1534 = vrot.slane %v1533, 4
    %v1536 = vshll.u32 %v1464, 16
    %v1538 = vrot.slane %v1536, 5
    %v1539 = vsel %vm218, %v1534, %v1538
    %v1541 = vshrl.u32 %v1465, 16
    %v1543 = vrot.slane %v1541, 4
    %v1544 = vshll.u32 %v1465, 16
    %v1546 = vrot.slane %v1544, 5
    %v1547 = vor.u32 %v1543, %v1546
    %v1548 = vrot.slane %v1547, 4
    %v1550 = vshll.u32 %v1466, 16
    %v1552 = vrot.slane %v1550, 5
    %v1553 = vsel %vm218, %v1548, %v1552
    %v1555 = vshrl.u32 %v1467, 16
    %v1557 = vrot.slane %v1555, 4
    %v1558 = vshll.u32 %v1467, 16
    %v1560 = vrot.slane %v1558, 5
    %v1561 = vor.u32 %v1557, %v1560
    %v1562 = vrot.slane %v1561, 4
    %v1564 = vshll.u32 %v1468, 16
    %v1566 = vrot.slane %v1564, 5
    %v1567 = vsel %vm218, %v1562, %v1566
    %v1569 = vshrl.u32 %v1469, 16
    %v1571 = vrot.slane %v1569, 4
    %v1572 = vshll.u32 %v1469, 16
    %v1574 = vrot.slane %v1572, 5
    %v1575 = vor.u32 %v1571, %v1574
    %v1576 = vrot.slane %v1575, 4
    %v1578 = vshll.u32 %v1470, 16
    %v1580 = vrot.slane %v1578, 5
    %v1581 = vsel %vm218, %v1576, %v1580
    %v1583 = vshrl.u32 %v1471, 16
    %v1585 = vrot.slane %v1583, 4
    %v1586 = vshll.u32 %v1471, 16
    %v1588 = vrot.slane %v1586, 5
    %v1589 = vor.u32 %v1585, %v1588
    %v1590 = vrot.slane %v1589, 4
    %v1592 = vshll.u32 %v1472, 16
    %v1594 = vrot.slane %v1592, 5
    %v1595 = vsel %vm218, %v1590, %v1594
    %v1597 = vshrl.u32 %v1473, 16
    %v1599 = vrot.slane %v1597, 4
    %v1600 = vshll.u32 %v1473, 16
    %v1602 = vrot.slane %v1600, 5
    %v1603 = vor.u32 %v1599, %v1602
    %v1604 = vrot.slane %v1603, 4
    %v1606 = vshll.u32 %v1474, 16
    %v1608 = vrot.slane %v1606, 5
    %v1609 = vsel %vm218, %v1604, %v1608
    %v1611 = vshrl.u32 %v1475, 16
    %v1613 = vrot.slane %v1611, 4
    %v1614 = vshll.u32 %v1475, 16
    %v1616 = vrot.slane %v1614, 5
    %v1617 = vor.u32 %v1613, %v1616
    %v1618 = vrot.slane %v1617, 4
    %v1620 = vshll.u32 %v1476, 16
    %v1622 = vrot.slane %v1620, 5
    %v1623 = vsel %vm218, %v1618, %v1622
    %v1625 = vshrl.u32 %v1488, 16
    %v1627 = vrot.slane %v1625, 4
    %v1628 = vshll.u32 %v1488, 16
    %v1630 = vrot.slane %v1628, 5
    %v1631 = vor.u32 %v1627, %v1630
    %v1632 = vrot.slane %v1631, 4
    %v1634 = vshll.u32 %v1489, 16
    %v1636 = vrot.slane %v1634, 5
    %v1637 = vsel %vm218, %v1632, %v1636
    %v1639 = vshrl.u32 %v1490, 16
    %v1641 = vrot.slane %v1639, 4
    %v1642 = vshll.u32 %v1490, 16
    %v1644 = vrot.slane %v1642, 5
    %v1645 = vor.u32 %v1641, %v1644
    %v1646 = vrot.slane %v1645, 4
    %v1648 = vshll.u32 %v1491, 16
    %v1650 = vrot.slane %v1648, 5
    %v1651 = vsel %vm218, %v1646, %v1650
    %v1653 = vshrl.u32 %v1492, 16
    %v1655 = vrot.slane %v1653, 4
    %v1656 = vshll.u32 %v1492, 16
    %v1658 = vrot.slane %v1656, 5
    %v1659 = vor.u32 %v1655, %v1658
    %v1660 = vrot.slane %v1659, 4
    %v1662 = vshll.u32 %v1493, 16
    %v1664 = vrot.slane %v1662, 5
    %v1665 = vsel %vm218, %v1660, %v1664
    %v1667 = vshrl.u32 %v1494, 16
    %v1669 = vrot.slane %v1667, 4
    %v1670 = vshll.u32 %v1494, 16
    %v1672 = vrot.slane %v1670, 5
    %v1673 = vor.u32 %v1669, %v1672
    %v1674 = vrot.slane %v1673, 4
    %v1676 = vshll.u32 %v1495, 16
    %v1678 = vrot.slane %v1676, 5
    %v1679 = vsel %vm218, %v1674, %v1678
    %v1681 = vshrl.u32 %v1496, 16
    %v1683 = vrot.slane %v1681, 4
    %v1684 = vshll.u32 %v1496, 16
    %v1686 = vrot.slane %v1684, 5
    %v1687 = vor.u32 %v1683, %v1686
    %v1688 = vrot.slane %v1687, 4
    %v1690 = vshll.u32 %v1497, 16
    %v1692 = vrot.slane %v1690, 5
    %v1693 = vsel %vm218, %v1688, %v1692
    %v1695 = vshrl.u32 %v1498, 16
    %v1697 = vrot.slane %v1695, 4
    %v1698 = vshll.u32 %v1498, 16
    %v1700 = vrot.slane %v1698, 5
    %v1701 = vor.u32 %v1697, %v1700
    %v1702 = vrot.slane %v1701, 4
    %v1704 = vshll.u32 %v1499, 16
    %v1706 = vrot.slane %v1704, 5
    %v1707 = vsel %vm218, %v1702, %v1706
    %v1709 = vshrl.u32 %v1500, 16
    %v1711 = vrot.slane %v1709, 4
    %v1712 = vshll.u32 %v1500, 16
    %v1714 = vrot.slane %v1712, 5
    %v1715 = vor.u32 %v1711, %v1714
    %v1716 = vrot.slane %v1715, 4
    %v1718 = vshll.u32 %v1501, 16
    %v1720 = vrot.slane %v1718, 5
    %v1721 = vsel %vm218, %v1716, %v1720
    %v1723 = vshrl.u32 %v1502, 16
    %v1725 = vrot.slane %v1723, 4
    %v1726 = vshll.u32 %v1502, 16
    %v1728 = vrot.slane %v1726, 5
    %v1729 = vor.u32 %v1725, %v1728
    %v1730 = vrot.slane %v1729, 4
    %v1732 = vshll.u32 %v1503, 16
    %v1734 = vrot.slane %v1732, 5
    %v1735 = vsel %vm218, %v1730, %v1734
    %v1737 = vshrl.u32 %v1477, 16
    %v1739 = vrot.slane %v1737, 4
    %v1740 = vshll.u32 %v1477, 16
    %v1742 = vrot.slane %v1740, 5
    %v1743 = vor.u32 %v1739, %v1742
    %v1744 = vrot.slane %v1743, 4
    %v1746 = vshll.u32 %v1478, 16
    %v1748 = vrot.slane %v1746, 5
    %v1749 = vsel %vm218, %v1744, %v1748
    %v1758 = vunpack.c.l.b16 %v1461
    %v1759 = vunpack.c.l.b16 %v1463
    %v1760 = vunpack.c.l.b16 %v1465
    %v1761 = vunpack.c.l.b16 %v1467
    %v1762 = vunpack.c.l.b16 %v1469
    %v1763 = vunpack.c.l.b16 %v1471
    %v1764 = vunpack.c.l.b16 %v1473
    %v1765 = vunpack.c.l.b16 %v1475
    %v1766 = vpack.c.b16 %v1759, %v1758
    %v1767 = vpack.c.b16 %v1761, %v1760
    %v1768 = vpack.c.b16 %v1763, %v1762
    %v1769 = vpack.c.b16 %v1765, %v1764
    %v1782 = vunpack.c.l.b16 %v1479
    %v1783 = vunpack.c.l.b16 %v1480
    %v1784 = vunpack.c.l.b16 %v1481
    %v1785 = vunpack.c.l.b16 %v1482
    %v1786 = vunpack.c.l.b16 %v1483
    %v1787 = vunpack.c.l.b16 %v1484
    %v1788 = vunpack.c.l.b16 %v1485
    %v1789 = vunpack.c.l.b16 %v1486
    %v1790 = vpack.c.b16 %v1783, %v1782
    %v1791 = vpack.c.b16 %v1785, %v1784
    %v1792 = vpack.c.b16 %v1787, %v1786
    %v1793 = vpack.c.b16 %v1789, %v1788
    %v1798 = vunpack.c.l.b16 %v1525
    %v1799 = vunpack.c.l.b16 %v1539
    %v1800 = vunpack.c.l.b16 %v1553
    %v1801 = vunpack.c.l.b16 %v1567
    %v1802 = vunpack.c.l.b16 %v1581
    %v1803 = vunpack.c.l.b16 %v1595
    %v1804 = vunpack.c.l.b16 %v1609
    %v1805 = vunpack.c.l.b16 %v1623
    %v1806 = vpack.c.b16 %v1799, %v1798
    %v1807 = vpack.c.b16 %v1801, %v1800
    %v1808 = vpack.c.b16 %v1803, %v1802
    %v1809 = vpack.c.b16 %v1805, %v1804
    %v1822 = vunpack.c.l.b16 %v1488
    %v1823 = vunpack.c.l.b16 %v1490
    %v1824 = vunpack.c.l.b16 %v1492
    %v1825 = vunpack.c.l.b16 %v1494
    %v1826 = vunpack.c.l.b16 %v1496
    %v1827 = vunpack.c.l.b16 %v1498
    %v1828 = vunpack.c.l.b16 %v1500
    %v1829 = vunpack.c.l.b16 %v1502
    %v1830 = vpack.c.b16 %v1823, %v1822
    %v1831 = vpack.c.b16 %v1825, %v1824
    %v1832 = vpack.c.b16 %v1827, %v1826
    %v1833 = vpack.c.b16 %v1829, %v1828
    %v1846 = vunpack.c.l.b16 %v1504
    %v1847 = vunpack.c.l.b16 %v1505
    %v1848 = vunpack.c.l.b16 %v1506
    %v1849 = vunpack.c.l.b16 %v1507
    %v1850 = vunpack.c.l.b16 %v1508
    %v1851 = vunpack.c.l.b16 %v1509
    %v1852 = vunpack.c.l.b16 %v1510
    %v1853 = vunpack.c.l.b16 %v1511
    %v1854 = vpack.c.b16 %v1847, %v1846
    %v1855 = vpack.c.b16 %v1849, %v1848
    %v1856 = vpack.c.b16 %v1851, %v1850
    %v1857 = vpack.c.b16 %v1853, %v1852
    %v1862 = vunpack.c.l.b16 %v1637
    %v1863 = vunpack.c.l.b16 %v1651
    %v1864 = vunpack.c.l.b16 %v1665
    %v1865 = vunpack.c.l.b16 %v1679
    %v1866 = vunpack.c.l.b16 %v1693
    %v1867 = vunpack.c.l.b16 %v1707
    %v1868 = vunpack.c.l.b16 %v1721
    %v1869 = vunpack.c.l.b16 %v1735
    %v1870 = vpack.c.b16 %v1863, %v1862
    %v1871 = vpack.c.b16 %v1865, %v1864
    %v1872 = vpack.c.b16 %v1867, %v1866
    %v1873 = vpack.c.b16 %v1869, %v1868
    %v1879 = vunpack.c.l.b16 %v1477
    %v1880 = vpack.c.b16 %v1760, %v1759
    %v1881 = vpack.c.b16 %v1762, %v1761
    %v1882 = vpack.c.b16 %v1764, %v1763
    %v1883 = vpack.c.b16 %v1879, %v1765
    %v1889 = vunpack.c.l.b16 %v1487
    %v1890 = vpack.c.b16 %v1784, %v1783
    %v1891 = vpack.c.b16 %v1786, %v1785
    %v1892 = vpack.c.b16 %v1788, %v1787
    %v1893 = vpack.c.b16 %v1889, %v1789
    %v1898 = vunpack.c.l.b16 %v1749
    %v1899 = vpack.c.b16 %v1800, %v1799
    %v1900 = vpack.c.b16 %v1802, %v1801
    %v1901 = vpack.c.b16 %v1804, %v1803
    %v1902 = vpack.c.b16 %v1898, %v1805
    %1907 = vmatprep.subr.bf16.mxu0 0
    %1908 = vmatpush1.bf16.msra.mxu0 %v909
    %1909 = vmatprep.subr.bf16.mxu0 0
    %1910 = vmatpush1.bf16.msra.mxu0 %v908
    %1911 = vmatprep.subr.bf16.mxu0 0
    %1912 = vmatpush1.bf16.msra.mxu0 %v907
    %1913 = vmatprep.subr.bf16.mxu0 0
    %1914 = vmatpush1.bf16.msra.mxu0 %v906
    %1915 = vmatprep.subr.bf16.mxu0 0
    %1916 = vmatpush1.bf16.msra.mxu0 %v905
    %1917 = vmatprep.subr.bf16.mxu0 0
    %1918 = vmatpush1.bf16.msra.mxu0 %v904
    %1919 = vmatprep.subr.bf16.mxu0 0
    %1920 = vmatpush1.bf16.msra.mxu0 %v903
    %1921 = vmatprep.subr.bf16.mxu0 0
    %1922 = vmatpush1.bf16.msra.mxu0 %v902
    %1923 = vmatprep.subr.bf16.mxu0 0
    %1924 = vmatpush2.bf16.msra.mxu0 %v917
    %1925 = vmatprep.subr.bf16.mxu0 0
    %1926 = vmatpush2.bf16.msra.mxu0 %v916
    %1927 = vmatprep.subr.bf16.mxu0 0
    %1928 = vmatpush2.bf16.msra.mxu0 %v915
    %1929 = vmatprep.subr.bf16.mxu0 0
    %1930 = vmatpush2.bf16.msra.mxu0 %v914
    %1931 = vmatprep.subr.bf16.mxu0 0
    %1932 = vmatpush2.bf16.msra.mxu0 %v913
    %1933 = vmatprep.subr.bf16.mxu0 0
    %1934 = vmatpush2.bf16.msra.mxu0 %v912
    %1935 = vmatprep.subr.bf16.mxu0 0
    %1936 = vmatpush2.bf16.msra.mxu0 %v911
    %1937 = vmatprep.subr.bf16.mxu0 0
    %1938 = vmatpush2.bf16.msra.mxu0 %v910
    %1939 = vmatprep.mubr.bf16.mxu0 %v1790
    %1940 = vmatmul.mubr.bf16.gmra.mxu0 %v1766
    %v1941 = vpop.f32.mrf.mxu0
    %v1942 = vadd.f32 0.0, %v1941
    %v1943 = vpop.f32.mrf.mxu0
    %v1944 = vpop.f32.mrf.mxu0
    %v1945 = vadd.f32 0.0, %v1944
    %v1946 = vpop.f32.mrf.mxu0
    %1947 = vmatprep.mubr.bf16.mxu0 %v1791
    %1948 = vmatmul.mubr.bf16.gmra.mxu0 %v1767
    %v1949 = vpop.f32.mrf.mxu0
    %v1950 = vadd.f32 0.0, %v1949
    %v1951 = vpop.f32.mrf.mxu0
    %v1952 = vpop.f32.mrf.mxu0
    %v1953 = vadd.f32 0.0, %v1952
    %v1954 = vpop.f32.mrf.mxu0
    %1955 = vmatprep.mubr.bf16.mxu0 %v1792
    %1956 = vmatmul.mubr.bf16.gmra.mxu0 %v1768
    %v1957 = vpop.f32.mrf.mxu0
    %v1958 = vadd.f32 0.0, %v1957
    %v1959 = vpop.f32.mrf.mxu0
    %v1960 = vpop.f32.mrf.mxu0
    %v1961 = vadd.f32 0.0, %v1960
    %v1962 = vpop.f32.mrf.mxu0
    %1963 = vmatprep.mubr.bf16.mxu0 %v1793
    %1964 = vmatmul.mubr.bf16.gmra.mxu0 %v1769
    %v1965 = vpop.f32.mrf.mxu0
    %v1966 = vadd.f32 0.0, %v1965
    %v1967 = vpop.f32.mrf.mxu0
    %v1968 = vpop.f32.mrf.mxu0
    %v1969 = vadd.f32 0.0, %v1968
    %v1970 = vpop.f32.mrf.mxu0
    %1971 = vdwg.mxu0
    %1972 = vmatprep.subr.bf16.mxu0 0
    %1973 = vmatpush1.bf16.msra.mxu0 %v925
    %1974 = vmatprep.subr.bf16.mxu0 0
    %1975 = vmatpush1.bf16.msra.mxu0 %v924
    %1976 = vmatprep.subr.bf16.mxu0 0
    %1977 = vmatpush1.bf16.msra.mxu0 %v923
    %1978 = vmatprep.subr.bf16.mxu0 0
    %1979 = vmatpush1.bf16.msra.mxu0 %v922
    %1980 = vmatprep.subr.bf16.mxu0 0
    %1981 = vmatpush1.bf16.msra.mxu0 %v921
    %1982 = vmatprep.subr.bf16.mxu0 0
    %1983 = vmatpush1.bf16.msra.mxu0 %v920
    %1984 = vmatprep.subr.bf16.mxu0 0
    %1985 = vmatpush1.bf16.msra.mxu0 %v919
    %1986 = vmatprep.subr.bf16.mxu0 0
    %1987 = vmatpush1.bf16.msra.mxu0 %v918
    %1988 = vmatprep.subr.bf16.mxu0 0
    %1989 = vmatpush2.bf16.msra.mxu0 %v933
    %1990 = vmatprep.subr.bf16.mxu0 0
    %1991 = vmatpush2.bf16.msra.mxu0 %v932
    %1992 = vmatprep.subr.bf16.mxu0 0
    %1993 = vmatpush2.bf16.msra.mxu0 %v931
    %1994 = vmatprep.subr.bf16.mxu0 0
    %1995 = vmatpush2.bf16.msra.mxu0 %v930
    %1996 = vmatprep.subr.bf16.mxu0 0
    %1997 = vmatpush2.bf16.msra.mxu0 %v929
    %1998 = vmatprep.subr.bf16.mxu0 0
    %1999 = vmatpush2.bf16.msra.mxu0 %v928
    %2000 = vmatprep.subr.bf16.mxu0 0
    %2001 = vmatpush2.bf16.msra.mxu0 %v927
    %2002 = vmatprep.subr.bf16.mxu0 0
    %2003 = vmatpush2.bf16.msra.mxu0 %v926
    %2004 = vmatprep.mubr.bf16.mxu0 %v1830
    %2005 = vmatmul.mubr.bf16.gmra.mxu0 %v1806
    %v2006 = vpop.f32.mrf.mxu0
    %v2007 = vadd.f32 %v1942, %v2006
    %v2008 = vpop.f32.mrf.mxu0
    %v2009 = vpop.f32.mrf.mxu0
    %v2010 = vadd.f32 %v1945, %v2009
    %v2011 = vpop.f32.mrf.mxu0
    %2012 = vmatprep.mubr.bf16.mxu0 %v1831
    %2013 = vmatmul.mubr.bf16.gmra.mxu0 %v1807
    %v2014 = vpop.f32.mrf.mxu0
    %v2015 = vadd.f32 %v1950, %v2014
    %v2016 = vpop.f32.mrf.mxu0
    %v2017 = vpop.f32.mrf.mxu0
    %v2018 = vadd.f32 %v1953, %v2017
    %v2019 = vpop.f32.mrf.mxu0
    %2020 = vmatprep.mubr.bf16.mxu0 %v1832
    %2021 = vmatmul.mubr.bf16.gmra.mxu0 %v1808
    %v2022 = vpop.f32.mrf.mxu0
    %v2023 = vadd.f32 %v1958, %v2022
    %v2024 = vpop.f32.mrf.mxu0
    %v2025 = vpop.f32.mrf.mxu0
    %v2026 = vadd.f32 %v1961, %v2025
    %v2027 = vpop.f32.mrf.mxu0
    %2028 = vmatprep.mubr.bf16.mxu0 %v1833
    %2029 = vmatmul.mubr.bf16.gmra.mxu0 %v1809
    %v2030 = vpop.f32.mrf.mxu0
    %v2031 = vadd.f32 %v1966, %v2030
    %v2032 = vpop.f32.mrf.mxu0
    %v2033 = vpop.f32.mrf.mxu0
    %v2034 = vadd.f32 %v1969, %v2033
    %v2035 = vpop.f32.mrf.mxu0
    %2036 = vdwg.mxu0
    %2037 = vmatprep.subr.bf16.mxu0 0
    %2038 = vmatpush1.bf16.msra.mxu0 %v941
    %2039 = vmatprep.subr.bf16.mxu0 0
    %2040 = vmatpush1.bf16.msra.mxu0 %v940
    %2041 = vmatprep.subr.bf16.mxu0 0
    %2042 = vmatpush1.bf16.msra.mxu0 %v939
    %2043 = vmatprep.subr.bf16.mxu0 0
    %2044 = vmatpush1.bf16.msra.mxu0 %v938
    %2045 = vmatprep.subr.bf16.mxu0 0
    %2046 = vmatpush1.bf16.msra.mxu0 %v937
    %2047 = vmatprep.subr.bf16.mxu0 0
    %2048 = vmatpush1.bf16.msra.mxu0 %v936
    %2049 = vmatprep.subr.bf16.mxu0 0
    %2050 = vmatpush1.bf16.msra.mxu0 %v935
    %2051 = vmatprep.subr.bf16.mxu0 0
    %2052 = vmatpush1.bf16.msra.mxu0 %v934
    %2053 = vmatprep.subr.bf16.mxu0 0
    %2054 = vmatpush2.bf16.msra.mxu0 %v949
    %2055 = vmatprep.subr.bf16.mxu0 0
    %2056 = vmatpush2.bf16.msra.mxu0 %v948
    %2057 = vmatprep.subr.bf16.mxu0 0
    %2058 = vmatpush2.bf16.msra.mxu0 %v947
    %2059 = vmatprep.subr.bf16.mxu0 0
    %2060 = vmatpush2.bf16.msra.mxu0 %v946
    %2061 = vmatprep.subr.bf16.mxu0 0
    %2062 = vmatpush2.bf16.msra.mxu0 %v945
    %2063 = vmatprep.subr.bf16.mxu0 0
    %2064 = vmatpush2.bf16.msra.mxu0 %v944
    %2065 = vmatprep.subr.bf16.mxu0 0
    %2066 = vmatpush2.bf16.msra.mxu0 %v943
    %2067 = vmatprep.subr.bf16.mxu0 0
    %2068 = vmatpush2.bf16.msra.mxu0 %v942
    %2069 = vmatprep.mubr.bf16.mxu0 %v1870
    %2070 = vmatmul.mubr.bf16.gmra.mxu0 %v1854
    %v2071 = vpop.f32.mrf.mxu0
    %v2072 = vadd.f32 %v2007, %v2071
    %v2073 = vpop.f32.mrf.mxu0
    %v2074 = vpop.f32.mrf.mxu0
    %v2075 = vadd.f32 %v2010, %v2074
    %v2076 = vpop.f32.mrf.mxu0
    %2077 = vmatprep.mubr.bf16.mxu0 %v1871
    %2078 = vmatmul.mubr.bf16.gmra.mxu0 %v1855
    %v2079 = vpop.f32.mrf.mxu0
    %v2080 = vadd.f32 %v2015, %v2079
    %v2081 = vpop.f32.mrf.mxu0
    %v2082 = vpop.f32.mrf.mxu0
    %v2083 = vadd.f32 %v2018, %v2082
    %v2084 = vpop.f32.mrf.mxu0
    %2085 = vmatprep.mubr.bf16.mxu0 %v1872
    %2086 = vmatmul.mubr.bf16.gmra.mxu0 %v1856
    %v2087 = vpop.f32.mrf.mxu0
    %v2088 = vadd.f32 %v2023, %v2087
    %v2089 = vpop.f32.mrf.mxu0
    %v2090 = vpop.f32.mrf.mxu0
    %v2091 = vadd.f32 %v2026, %v2090
    %v2092 = vpop.f32.mrf.mxu0
    %2093 = vmatprep.mubr.bf16.mxu0 %v1873
    %2094 = vmatmul.mubr.bf16.gmra.mxu0 %v1857
    %v2095 = vpop.f32.mrf.mxu0
    %v2096 = vadd.f32 %v2031, %v2095
    %v2097 = vpop.f32.mrf.mxu0
    %v2098 = vpop.f32.mrf.mxu0
    %v2099 = vadd.f32 %v2034, %v2098
    %v2100 = vpop.f32.mrf.mxu0
    %2101 = vdwg.mxu0
    %2102 = vmatprep.subr.bf16.mxu0 0
    %2103 = vmatpush1.bf16.msra.mxu0 %v957
    %2104 = vmatprep.subr.bf16.mxu0 0
    %2105 = vmatpush1.bf16.msra.mxu0 %v956
    %2106 = vmatprep.subr.bf16.mxu0 0
    %2107 = vmatpush1.bf16.msra.mxu0 %v955
    %2108 = vmatprep.subr.bf16.mxu0 0
    %2109 = vmatpush1.bf16.msra.mxu0 %v954
    %2110 = vmatprep.subr.bf16.mxu0 0
    %2111 = vmatpush1.bf16.msra.mxu0 %v953
    %2112 = vmatprep.subr.bf16.mxu0 0
    %2113 = vmatpush1.bf16.msra.mxu0 %v952
    %2114 = vmatprep.subr.bf16.mxu0 0
    %2115 = vmatpush1.bf16.msra.mxu0 %v951
    %2116 = vmatprep.subr.bf16.mxu0 0
    %2117 = vmatpush1.bf16.msra.mxu0 %v950
    %2118 = vmatprep.subr.bf16.mxu0 0
    %2119 = vmatpush2.bf16.msra.mxu0 %v965
    %2120 = vmatprep.subr.bf16.mxu0 0
    %2121 = vmatpush2.bf16.msra.mxu0 %v964
    %2122 = vmatprep.subr.bf16.mxu0 0
    %2123 = vmatpush2.bf16.msra.mxu0 %v963
    %2124 = vmatprep.subr.bf16.mxu0 0
    %2125 = vmatpush2.bf16.msra.mxu0 %v962
    %2126 = vmatprep.subr.bf16.mxu0 0
    %2127 = vmatpush2.bf16.msra.mxu0 %v961
    %2128 = vmatprep.subr.bf16.mxu0 0
    %2129 = vmatpush2.bf16.msra.mxu0 %v960
    %2130 = vmatprep.subr.bf16.mxu0 0
    %2131 = vmatpush2.bf16.msra.mxu0 %v959
    %2132 = vmatprep.subr.bf16.mxu0 0
    %2133 = vmatpush2.bf16.msra.mxu0 %v958
    %2134 = vmatprep.mubr.bf16.mxu0 %v1890
    %2135 = vmatmul.mubr.bf16.gmra.mxu0 %v1880
    %v2136 = vpop.f32.mrf.mxu0
    %v2137 = vadd.f32 %v2072, %v2136
    %v2138 = vpop.f32.mrf.mxu0
    %v2139 = vpop.f32.mrf.mxu0
    %v2140 = vadd.f32 %v2075, %v2139
    %v2141 = vpop.f32.mrf.mxu0
    %2142 = vmatprep.mubr.bf16.mxu0 %v1891
    %2143 = vmatmul.mubr.bf16.gmra.mxu0 %v1881
    %v2144 = vpop.f32.mrf.mxu0
    %v2145 = vadd.f32 %v2080, %v2144
    %v2146 = vpop.f32.mrf.mxu0
    %v2147 = vpop.f32.mrf.mxu0
    %v2148 = vadd.f32 %v2083, %v2147
    %v2149 = vpop.f32.mrf.mxu0
    %2150 = vmatprep.mubr.bf16.mxu0 %v1892
    %2151 = vmatmul.mubr.bf16.gmra.mxu0 %v1882
    %v2152 = vpop.f32.mrf.mxu0
    %v2153 = vadd.f32 %v2088, %v2152
    %v2154 = vpop.f32.mrf.mxu0
    %v2155 = vpop.f32.mrf.mxu0
    %v2156 = vadd.f32 %v2091, %v2155
    %v2157 = vpop.f32.mrf.mxu0
    %2158 = vmatprep.mubr.bf16.mxu0 %v1893
    %2159 = vmatmul.mubr.bf16.gmra.mxu0 %v1883
    %v2160 = vpop.f32.mrf.mxu0
    %v2161 = vadd.f32 %v2096, %v2160
    %v2162 = vpop.f32.mrf.mxu0
    %v2163 = vpop.f32.mrf.mxu0
    %v2164 = vadd.f32 %v2099, %v2163
    %v2165 = vpop.f32.mrf.mxu0
    %2166 = vdwg.mxu0
    %2167 = vmatprep.subr.bf16.mxu0 0
    %2168 = vmatpush1.bf16.msra.mxu0 %v973
    %2169 = vmatprep.subr.bf16.mxu0 0
    %2170 = vmatpush1.bf16.msra.mxu0 %v972
    %2171 = vmatprep.subr.bf16.mxu0 0
    %2172 = vmatpush1.bf16.msra.mxu0 %v971
    %2173 = vmatprep.subr.bf16.mxu0 0
    %2174 = vmatpush1.bf16.msra.mxu0 %v970
    %2175 = vmatprep.subr.bf16.mxu0 0
    %2176 = vmatpush1.bf16.msra.mxu0 %v969
    %2177 = vmatprep.subr.bf16.mxu0 0
    %2178 = vmatpush1.bf16.msra.mxu0 %v968
    %2179 = vmatprep.subr.bf16.mxu0 0
    %2180 = vmatpush1.bf16.msra.mxu0 %v967
    %2181 = vmatprep.subr.bf16.mxu0 0
    %2182 = vmatpush1.bf16.msra.mxu0 %v966
    %2183 = vmatprep.subr.bf16.mxu0 0
    %2184 = vmatpush2.bf16.msra.mxu0 0
    %2185 = vmatprep.subr.bf16.mxu0 0
    %2186 = vmatpush2.bf16.msra.mxu0 0
    %2187 = vmatprep.subr.bf16.mxu0 0
    %2188 = vmatpush2.bf16.msra.mxu0 0
    %2189 = vmatprep.subr.bf16.mxu0 0
    %2190 = vmatpush2.bf16.msra.mxu0 0
    %2191 = vmatprep.subr.bf16.mxu0 0
    %2192 = vmatpush2.bf16.msra.mxu0 0
    %2193 = vmatprep.subr.bf16.mxu0 0
    %2194 = vmatpush2.bf16.msra.mxu0 0
    %2195 = vmatprep.subr.bf16.mxu0 0
    %2196 = vmatpush2.bf16.msra.mxu0 0
    %2197 = vmatprep.subr.bf16.mxu0 0
    %2198 = vmatpush2.bf16.msra.mxu0 0
    %2199 = vmatprep.mubr.bf16.mxu0 0
    %2200 = vmatmul.mubr.bf16.gmra.mxu0 %v1899
    %v2201 = vpop.f32.mrf.mxu0
    %v2202 = vadd.f32 %v2137, %v2201
    %v2203 = vpop.f32.mrf.mxu0
    %v2204 = vpop.f32.mrf.mxu0
    %v2205 = vadd.f32 %v2140, %v2204
    %v2206 = vpop.f32.mrf.mxu0
    %2207 = vmatprep.mubr.bf16.mxu0 0
    %2208 = vmatmul.mubr.bf16.gmra.mxu0 %v1900
    %v2209 = vpop.f32.mrf.mxu0
    %v2210 = vadd.f32 %v2145, %v2209
    %v2211 = vpop.f32.mrf.mxu0
    %v2212 = vpop.f32.mrf.mxu0
    %v2213 = vadd.f32 %v2148, %v2212
    %v2214 = vpop.f32.mrf.mxu0
    %2215 = vmatprep.mubr.bf16.mxu0 0
    %2216 = vmatmul.mubr.bf16.gmra.mxu0 %v1901
    %v2217 = vpop.f32.mrf.mxu0
    %v2218 = vadd.f32 %v2153, %v2217
    %v2219 = vpop.f32.mrf.mxu0
    %v2220 = vpop.f32.mrf.mxu0
    %v2221 = vadd.f32 %v2156, %v2220
    %v2222 = vpop.f32.mrf.mxu0
    %2223 = vmatprep.mubr.bf16.mxu0 0
    %2224 = vmatmul.mubr.bf16.gmra.mxu0 %v1902
    %v2225 = vpop.f32.mrf.mxu0
    %v2226 = vadd.f32 %v2161, %v2225
    %v2227 = vpop.f32.mrf.mxu0
    %v2228 = vpop.f32.mrf.mxu0
    %v2229 = vadd.f32 %v2164, %v2228
    %v2230 = vpop.f32.mrf.mxu0
    %2231 = vdwg.mxu0
    %v2232 = vadd.f32 %v2202, %v2205
    %v2233 = vadd.f32 %v2232, %v2210
    %v2234 = vadd.f32 %v2233, %v2213
    %v2235 = vadd.f32 %v2234, %v2218
    %v2236 = vadd.f32 %v2235, %v2221
    %v2237 = vadd.f32 %v2236, %v2226
    %v2238 = vadd.f32 %v2237, %v2229
    %2239 = vadd.xlane.f32.xlu0 %v2238
    %v2240 = vpop.xlane.xlu0 %2239
    %v2241 = vrot.slane %v2240, 4
    %v2242 = vadd.f32 %v2240, %v2241
    %v2243 = vrot.slane %v2242, 2
    %v2244 = vadd.f32 %v2242, %v2243
    %v2245 = vrot.slane %v2244, 1
    %v2246 = vadd.f32 %v2244, %v2245
    %s2247 = vtos %v2246
    %v2248 = vmul.f32 %v2202, %v2202
    %v2249 = vmul.f32 %v2205, %v2205
    %v2250 = vmul.f32 %v2210, %v2210
    %v2251 = vmul.f32 %v2213, %v2213
    %v2252 = vmul.f32 %v2218, %v2218
    %v2253 = vmul.f32 %v2221, %v2221
    %v2254 = vmul.f32 %v2226, %v2226
    %v2255 = vmul.f32 %v2229, %v2229
    %v2256 = vadd.f32 %v2248, %v2249
    %v2257 = vadd.f32 %v2256, %v2250
    %v2258 = vadd.f32 %v2257, %v2251
    %v2259 = vadd.f32 %v2258, %v2252
    %v2260 = vadd.f32 %v2259, %v2253
    %v2261 = vadd.f32 %v2260, %v2254
    %v2262 = vadd.f32 %v2261, %v2255
    %2263 = vadd.xlane.f32.xlu0 %v2262
    %v2264 = vpop.xlane.xlu0 %2263
    %v2265 = vrot.slane %v2264, 4
    %v2266 = vadd.f32 %v2264, %v2265
    %v2267 = vrot.slane %v2266, 2
    %v2268 = vadd.f32 %v2266, %v2267
    %v2269 = vrot.slane %v2268, 1
    %v2270 = vadd.f32 %v2268, %v2269
    %s2271 = vtos %v2270
    %s2272 = smul.f32 %s2247, 0.001953125
    %s2273 = smul.f32 %s2271, 0.001953125
    %s2274 = smul.f32 %s2272, %s2272
    %s2275 = ssub.f32 %s2273, %s2274
    %s2276 = sadd.f32 %s2275, 1e-05
    %v2277 = vstv %s2276
    %v2278 = vrsqrt.pop %v2277
    %s2279 = vtos %v2278
    %v2280 = vstv %s2279
    %v2281 = vmul.f32 %v163, %v2280
    %v2282 = vstv %s2272
    %v2283 = vmul.f32 %v2282, %v2281
    %v2284 = vsub.f32 %v164, %v2283
    %v2286 = vlaneseq
    %v2287 = vshrl.u32 %v2286, 7
    %v2288 = vsub.s32 0, %v2287
    %v2289 = vrot.slane %v2281, %v2288
    %v2291 = vmul.f32 %v2202, %v2289
    %v2292 = vmul.f32 %v2205, %v2289
    %v2293 = vmul.f32 %v2210, %v2289
    %v2294 = vmul.f32 %v2213, %v2289
    %v2295 = vmul.f32 %v2218, %v2289
    %v2296 = vmul.f32 %v2221, %v2289
    %v2297 = vmul.f32 %v2226, %v2289
    %v2298 = vmul.f32 %v2229, %v2289
    %v2300 = vlaneseq
    %v2301 = vshrl.u32 %v2300, 7
    %v2302 = vsub.s32 0, %v2301
    %v2303 = vrot.slane %v2284, %v2302
    %v2305 = vadd.f32 %v2291, %v2303
    %v2306 = vadd.f32 %v2292, %v2303
    %v2307 = vadd.f32 %v2293, %v2303
    %v2308 = vadd.f32 %v2294, %v2303
    %v2309 = vadd.f32 %v2295, %v2303
    %v2310 = vadd.f32 %v2296, %v2303
    %v2311 = vadd.f32 %v2297, %v2303
    %v2312 = vadd.f32 %v2298, %v2303
    %s2313 = scalar_lea.vmem [#allocation2], 64
    %2314 = vst [vmem:[%s2313] sm:$0xff] %v2305
    %2315 = vst [vmem:[%s2313 + $0x8] sm:$0xff] %v2306
    %2316 = vst [vmem:[%s2313 + $0x10] sm:$0xff] %v2307
    %2317 = vst [vmem:[%s2313 + $0x18] sm:$0xff] %v2308
    %2318 = vst [vmem:[%s2313 + $0x20] sm:$0xff] %v2309
    %2319 = vst [vmem:[%s2313 + $0x28] sm:$0xff] %v2310
    %2320 = vst [vmem:[%s2313 + $0x30] sm:$0xff] %v2311
    %2321 = vst [vmem:[%s2313 + $0x38] sm:$0xff] %v2312
    // Predicated region
    $region18: #{tpu_custom_call.1} parent=1 // pred_check
      _
    $region19: #{tpu_custom_call.1} parent=1 // pred_check_branch
      %2323 = sbr.rel (0) target = $region21
    $region20: #{tpu_custom_call.1} parent=1 // pred_region
      %s2325 = ssub.s32 2048, 2048
      %2326 = vsyncadd [#allocation3], %s2325
      %s2327 = sshll.u32 [#allocation2], 4
      %s2328 = int_to_ptr.vmem [resolvable:$true] %s2327
      %2333 = dma.vmem_to_hbm [thread:$0]  %s2328, 2048, %s4, [#allocation3], 128, 128, 8
    $region21: #{tpu_custom_call.1} parent=1 // pred_fallthru
      _
    // Predicated region
    $region22: #{tpu_custom_call.1} parent=1 // pred_check
      _
    $region23: #{tpu_custom_call.1} parent=1 // pred_check_branch
      %2335 = sbr.rel (0) target = $region25
    $region24: #{tpu_custom_call.1} parent=1 // pred_region
      %2336 = dma.done [#allocation3], 2048
    $region25: #{tpu_custom_call.1} parent=1 // pred_fallthru
      _
    %2337 = vsyncpa [#allocation3], 1

// kernel: tpu_custom_call.1
$region0: #{tpu_custom_call.1}
  #allocation0 [shape = 'u32[]', space=smem, size = 0x4, offset = 0x4, fixed_abs, tag = 'smem constant byte address 0x4 - core index']
  #allocation1 [shape = 'u32[144,128]{1,0:T(1,128)}', space=vmem, size = 0x12000, scoped, tag = 'internal scratch']
  %s0 = inlined_call_operand.vmem [shape: bf16[2,4,9,9,128], index: 0, kind: input, shape index: {}]
  %s1 = inlined_call_operand.vmem [shape: bf16[1152,128], index: 1, kind: input, shape index: {}]
  %s2 = inlined_call_operand.vmem [shape: f32[1,128], index: 2, kind: input, shape index: {}]
  %s3 = inlined_call_operand.vmem [shape: f32[1,128], index: 3, kind: input, shape index: {}]
  %s4 = inlined_call_operand.hbm [shape: f32[2,64,128], index: 4, kind: output, shape index: {}]
  %s5 = sld [smem:[#allocation0]]
  $region26: #{tpu_custom_call.1} parent=0
    _
  %s7 = ssub.s32 1, %s5
  %s8 = scalar_select 0, %s7, %s5
  $region1: #{tpu_custom_call.1} parent=0
    #allocation2 [shape = 'u8[65536]{0}', space=vmem, size = 0x10000, scoped, tag = 'output window, operand 0, single buffered']
    #allocation3 [shape = 's32[1]{0}', space=sflag, size = 0x4, scoped, tag = 'scoped memory for tpu_custom_call.1']
    %9 = vsyncpa [#allocation3], 0
    // Predicated region
    $region2: #{tpu_custom_call.1} parent=1 // pred_check
      _
    $region3: #{tpu_custom_call.1} parent=1 // pred_check_branch
      %11 = sbr.rel (0) target = $region5
    $region4: #{tpu_custom_call.1} parent=1 // pred_region
      _
    $region5: #{tpu_custom_call.1} parent=1 // pred_fallthru
      _
    // Predicated region
    $region6: #{tpu_custom_call.1} parent=1 // pred_check
      _
    $region7: #{tpu_custom_call.1} parent=1 // pred_check_branch
      %13 = sbr.rel (0) target = $region9
    $region8: #{tpu_custom_call.1} parent=1 // pred_region
      _
    $region9: #{tpu_custom_call.1} parent=1 // pred_fallthru
      _
    // Predicated region
    $region10: #{tpu_custom_call.1} parent=1 // pred_check
      _
    $region11: #{tpu_custom_call.1} parent=1 // pred_check_branch
      %15 = sbr.rel (0) target = $region13
    $region12: #{tpu_custom_call.1} parent=1 // pred_region
      _
    $region13: #{tpu_custom_call.1} parent=1 // pred_fallthru
      _
    // Predicated region
    $region14: #{tpu_custom_call.1} parent=1 // pred_check
      _
    $region15: #{tpu_custom_call.1} parent=1 // pred_check_branch
      %17 = sbr.rel (0) target = $region17
    $region16: #{tpu_custom_call.1} parent=1 // pred_region
      _
    $region17: #{tpu_custom_call.1} parent=1 // pred_fallthru
      _
    %v19 = vld [vmem:[%s1] sm:$0xf]
    %v20 = vld [vmem:[%s1 + $0x4] sm:$0xf]
    %v21 = vld [vmem:[%s1 + $0x8] sm:$0xf]
    %v22 = vld [vmem:[%s1 + $0xc] sm:$0xf]
    %v23 = vld [vmem:[%s1 + $0x10] sm:$0xf]
    %v24 = vld [vmem:[%s1 + $0x14] sm:$0xf]
    %v25 = vld [vmem:[%s1 + $0x18] sm:$0xf]
    %v26 = vld [vmem:[%s1 + $0x1c] sm:$0xf]
    %v27 = vld [vmem:[%s1 + $0x20] sm:$0xf]
    %v28 = vld [vmem:[%s1 + $0x24] sm:$0xf]
    %v29 = vld [vmem:[%s1 + $0x28] sm:$0xf]
    %v30 = vld [vmem:[%s1 + $0x2c] sm:$0xf]
    %v31 = vld [vmem:[%s1 + $0x30] sm:$0xf]
    %v32 = vld [vmem:[%s1 + $0x34] sm:$0xf]
    %v33 = vld [vmem:[%s1 + $0x38] sm:$0xf]
    %v34 = vld [vmem:[%s1 + $0x3c] sm:$0xf]
    %v35 = vld [vmem:[%s1 + $0x40] sm:$0xf]
    %v36 = vld [vmem:[%s1 + $0x44] sm:$0xf]
    %v37 = vld [vmem:[%s1 + $0x48] sm:$0xf]
    %v38 = vld [vmem:[%s1 + $0x4c] sm:$0xf]
    %v39 = vld [vmem:[%s1 + $0x50] sm:$0xf]
    %v40 = vld [vmem:[%s1 + $0x54] sm:$0xf]
    %v41 = vld [vmem:[%s1 + $0x58] sm:$0xf]
    %v42 = vld [vmem:[%s1 + $0x5c] sm:$0xf]
    %v43 = vld [vmem:[%s1 + $0x60] sm:$0xf]
    %v44 = vld [vmem:[%s1 + $0x64] sm:$0xf]
    %v45 = vld [vmem:[%s1 + $0x68] sm:$0xf]
    %v46 = vld [vmem:[%s1 + $0x6c] sm:$0xf]
    %v47 = vld [vmem:[%s1 + $0x70] sm:$0xf]
    %v48 = vld [vmem:[%s1 + $0x74] sm:$0xf]
    %v49 = vld [vmem:[%s1 + $0x78] sm:$0xf]
    %v50 = vld [vmem:[%s1 + $0x7c] sm:$0xf]
    %v51 = vld [vmem:[%s1 + $0x80] sm:$0xf]
    %v52 = vld [vmem:[%s1 + $0x84] sm:$0xf]
    %v53 = vld [vmem:[%s1 + $0x88] sm:$0xf]
    %v54 = vld [vmem:[%s1 + $0x8c] sm:$0xf]
    %v55 = vld [vmem:[%s1 + $0x90] sm:$0xf]
    %v56 = vld [vmem:[%s1 + $0x94] sm:$0xf]
    %v57 = vld [vmem:[%s1 + $0x98] sm:$0xf]
    %v58 = vld [vmem:[%s1 + $0x9c] sm:$0xf]
    %v59 = vld [vmem:[%s1 + $0xa0] sm:$0xf]
    %v60 = vld [vmem:[%s1 + $0xa4] sm:$0xf]
    %v61 = vld [vmem:[%s1 + $0xa8] sm:$0xf]
    %v62 = vld [vmem:[%s1 + $0xac] sm:$0xf]
    %v63 = vld [vmem:[%s1 + $0xb0] sm:$0xf]
    %v64 = vld [vmem:[%s1 + $0xb4] sm:$0xf]
    %v65 = vld [vmem:[%s1 + $0xb8] sm:$0xf]
    %v66 = vld [vmem:[%s1 + $0xbc] sm:$0xf]
    %v67 = vld [vmem:[%s1 + $0xc0] sm:$0xf]
    %v68 = vld [vmem:[%s1 + $0xc4] sm:$0xf]
    %v69 = vld [vmem:[%s1 + $0xc8] sm:$0xf]
    %v70 = vld [vmem:[%s1 + $0xcc] sm:$0xf]
    %v71 = vld [vmem:[%s1 + $0xd0] sm:$0xf]
    %v72 = vld [vmem:[%s1 + $0xd4] sm:$0xf]
    %v73 = vld [vmem:[%s1 + $0xd8] sm:$0xf]
    %v74 = vld [vmem:[%s1 + $0xdc] sm:$0xf]
    %v75 = vld [vmem:[%s1 + $0xe0] sm:$0xf]
    %v76 = vld [vmem:[%s1 + $0xe4] sm:$0xf]
    %v77 = vld [vmem:[%s1 + $0xe8] sm:$0xf]
    %v78 = vld [vmem:[%s1 + $0xec] sm:$0xf]
    %v79 = vld [vmem:[%s1 + $0xf0] sm:$0xf]
    %v80 = vld [vmem:[%s1 + $0xf4] sm:$0xf]
    %v81 = vld [vmem:[%s1 + $0xf8] sm:$0xf]
    %v82 = vld [vmem:[%s1 + $0xfc] sm:$0xf]
    %v83 = vld [vmem:[%s1 + $0x100] sm:$0xf]
    %v84 = vld [vmem:[%s1 + $0x104] sm:$0xf]
    %v85 = vld [vmem:[%s1 + $0x108] sm:$0xf]
    %v86 = vld [vmem:[%s1 + $0x10c] sm:$0xf]
    %v87 = vld [vmem:[%s1 + $0x110] sm:$0xf]
    %v88 = vld [vmem:[%s1 + $0x114] sm:$0xf]
    %v89 = vld [vmem:[%s1 + $0x118] sm:$0xf]
    %v90 = vld [vmem:[%s1 + $0x11c] sm:$0xf]
    %v91 = vld [vmem:[%s1 + $0x120] sm:$0xf]
    %v92 = vld [vmem:[%s1 + $0x124] sm:$0xf]
    %v93 = vld [vmem:[%s1 + $0x128] sm:$0xf]
    %v94 = vld [vmem:[%s1 + $0x12c] sm:$0xf]
    %v95 = vld [vmem:[%s1 + $0x130] sm:$0xf]
    %v96 = vld [vmem:[%s1 + $0x134] sm:$0xf]
    %v97 = vld [vmem:[%s1 + $0x138] sm:$0xf]
    %v98 = vld [vmem:[%s1 + $0x13c] sm:$0xf]
    %v99 = vld [vmem:[%s1 + $0x140] sm:$0xf]
    %v100 = vld [vmem:[%s1 + $0x144] sm:$0xf]
    %v101 = vld [vmem:[%s1 + $0x148] sm:$0xf]
    %v102 = vld [vmem:[%s1 + $0x14c] sm:$0xf]
    %v103 = vld [vmem:[%s1 + $0x150] sm:$0xf]
    %v104 = vld [vmem:[%s1 + $0x154] sm:$0xf]
    %v105 = vld [vmem:[%s1 + $0x158] sm:$0xf]
    %v106 = vld [vmem:[%s1 + $0x15c] sm:$0xf]
    %v107 = vld [vmem:[%s1 + $0x160] sm:$0xf]
    %v108 = vld [vmem:[%s1 + $0x164] sm:$0xf]
    %v109 = vld [vmem:[%s1 + $0x168] sm:$0xf]
    %v110 = vld [vmem:[%s1 + $0x16c] sm:$0xf]
    %v111 = vld [vmem:[%s1 + $0x170] sm:$0xf]
    %v112 = vld [vmem:[%s1 + $0x174] sm:$0xf]
    %v113 = vld [vmem:[%s1 + $0x178] sm:$0xf]
    %v114 = vld [vmem:[%s1 + $0x17c] sm:$0xf]
    %v115 = vld [vmem:[%s1 + $0x180] sm:$0xf]
    %v116 = vld [vmem:[%s1 + $0x184] sm:$0xf]
    %v117 = vld [vmem:[%s1 + $0x188] sm:$0xf]
    %v118 = vld [vmem:[%s1 + $0x18c] sm:$0xf]
    %v119 = vld [vmem:[%s1 + $0x190] sm:$0xf]
    %v120 = vld [vmem:[%s1 + $0x194] sm:$0xf]
    %v121 = vld [vmem:[%s1 + $0x198] sm:$0xf]
    %v122 = vld [vmem:[%s1 + $0x19c] sm:$0xf]
    %v123 = vld [vmem:[%s1 + $0x1a0] sm:$0xf]
    %v124 = vld [vmem:[%s1 + $0x1a4] sm:$0xf]
    %v125 = vld [vmem:[%s1 + $0x1a8] sm:$0xf]
    %v126 = vld [vmem:[%s1 + $0x1ac] sm:$0xf]
    %v127 = vld [vmem:[%s1 + $0x1b0] sm:$0xf]
    %v128 = vld [vmem:[%s1 + $0x1b4] sm:$0xf]
    %v129 = vld [vmem:[%s1 + $0x1b8] sm:$0xf]
    %v130 = vld [vmem:[%s1 + $0x1bc] sm:$0xf]
    %v131 = vld [vmem:[%s1 + $0x1c0] sm:$0xf]
    %v132 = vld [vmem:[%s1 + $0x1c4] sm:$0xf]
    %v133 = vld [vmem:[%s1 + $0x1c8] sm:$0xf]
    %v134 = vld [vmem:[%s1 + $0x1cc] sm:$0xf]
    %v135 = vld [vmem:[%s1 + $0x1d0] sm:$0xf]
    %v136 = vld [vmem:[%s1 + $0x1d4] sm:$0xf]
    %v137 = vld [vmem:[%s1 + $0x1d8] sm:$0xf]
    %v138 = vld [vmem:[%s1 + $0x1dc] sm:$0xf]
    %v139 = vld [vmem:[%s1 + $0x1e0] sm:$0xf]
    %v140 = vld [vmem:[%s1 + $0x1e4] sm:$0xf]
    %v141 = vld [vmem:[%s1 + $0x1e8] sm:$0xf]
    %v142 = vld [vmem:[%s1 + $0x1ec] sm:$0xf]
    %v143 = vld [vmem:[%s1 + $0x1f0] sm:$0xf]
    %v144 = vld [vmem:[%s1 + $0x1f4] sm:$0xf]
    %v145 = vld [vmem:[%s1 + $0x1f8] sm:$0xf]
    %v146 = vld [vmem:[%s1 + $0x1fc] sm:$0xf]
    %v147 = vld [vmem:[%s1 + $0x200] sm:$0xf]
    %v148 = vld [vmem:[%s1 + $0x204] sm:$0xf]
    %v149 = vld [vmem:[%s1 + $0x208] sm:$0xf]
    %v150 = vld [vmem:[%s1 + $0x20c] sm:$0xf]
    %v151 = vld [vmem:[%s1 + $0x210] sm:$0xf]
    %v152 = vld [vmem:[%s1 + $0x214] sm:$0xf]
    %v153 = vld [vmem:[%s1 + $0x218] sm:$0xf]
    %v154 = vld [vmem:[%s1 + $0x21c] sm:$0xf]
    %v155 = vld [vmem:[%s1 + $0x220] sm:$0xf]
    %v156 = vld [vmem:[%s1 + $0x224] sm:$0xf]
    %v157 = vld [vmem:[%s1 + $0x228] sm:$0xf]
    %v158 = vld [vmem:[%s1 + $0x22c] sm:$0xf]
    %v159 = vld [vmem:[%s1 + $0x230] sm:$0xf]
    %v160 = vld [vmem:[%s1 + $0x234] sm:$0xf]
    %v161 = vld [vmem:[%s1 + $0x238] sm:$0xf]
    %v162 = vld [vmem:[%s1 + $0x23c] sm:$0xf]
    %v163 = vld [vmem:[%s2] sm:$0x1]
    %v164 = vld [vmem:[%s3] sm:$0x1]
    %v165 = vld [vmem:[%s0] sm:$0xf]
    %v166 = vld [vmem:[%s0 + $0x4] sm:$0x1]
    %v167 = vld [vmem:[%s0 + $0x8] sm:$0xf]
    %v168 = vld [vmem:[%s0 + $0xc] sm:$0x1]
    %v169 = vld [vmem:[%s0 + $0x10] sm:$0xf]
    %v170 = vld [vmem:[%s0 + $0x14] sm:$0x1]
    %v171 = vld [vmem:[%s0 + $0x18] sm:$0xf]
    %v172 = vld [vmem:[%s0 + $0x1c] sm:$0x1]
    %v173 = vld [vmem:[%s0 + $0x20] sm:$0xf]
    %v174 = vld [vmem:[%s0 + $0x24] sm:$0x1]
    %v175 = vld [vmem:[%s0 + $0x28] sm:$0xf]
    %v176 = vld [vmem:[%s0 + $0x2c] sm:$0x1]
    %v177 = vld [vmem:[%s0 + $0x30] sm:$0xf]
    %v178 = vld [vmem:[%s0 + $0x34] sm:$0x1]
    %v179 = vld [vmem:[%s0 + $0x38] sm:$0xf]
    %v180 = vld [vmem:[%s0 + $0x3c] sm:$0x1]
    %v181 = vld [vmem:[%s0 + $0x40] sm:$0xf]
    %v182 = vld [vmem:[%s0 + $0x44] sm:$0x1]
    %v183 = vld [vmem:[%s0 + $0x48] sm:$0xf]
    %v184 = vld [vmem:[%s0 + $0x50] sm:$0xf]
    %v185 = vld [vmem:[%s0 + $0x58] sm:$0xf]
    %v186 = vld [vmem:[%s0 + $0x60] sm:$0xf]
    %v187 = vld [vmem:[%s0 + $0x68] sm:$0xf]
    %v188 = vld [vmem:[%s0 + $0x70] sm:$0xf]
    %v189 = vld [vmem:[%s0 + $0x78] sm:$0xf]
    %v190 = vld [vmem:[%s0 + $0x80] sm:$0xf]
    %v191 = vld [vmem:[%s0 + $0x88] sm:$0xf]
    %v192 = vld [vmem:[%s0 + $0x90] sm:$0xf]
    %v193 = vld [vmem:[%s0 + $0x94] sm:$0x1]
    %v194 = vld [vmem:[%s0 + $0x98] sm:$0xf]
    %v195 = vld [vmem:[%s0 + $0x9c] sm:$0x1]
    %v196 = vld [vmem:[%s0 + $0xa0] sm:$0xf]
    %v197 = vld [vmem:[%s0 + $0xa4] sm:$0x1]
    %v198 = vld [vmem:[%s0 + $0xa8] sm:$0xf]
    %v199 = vld [vmem:[%s0 + $0xac] sm:$0x1]
    %v200 = vld [vmem:[%s0 + $0xb0] sm:$0xf]
    %v201 = vld [vmem:[%s0 + $0xb4] sm:$0x1]
    %v202 = vld [vmem:[%s0 + $0xb8] sm:$0xf]
    %v203 = vld [vmem:[%s0 + $0xbc] sm:$0x1]
    %v204 = vld [vmem:[%s0 + $0xc0] sm:$0xf]
    %v205 = vld [vmem:[%s0 + $0xc4] sm:$0x1]
    %v206 = vld [vmem:[%s0 + $0xc8] sm:$0xf]
    %v207 = vld [vmem:[%s0 + $0xcc] sm:$0x1]
    %v208 = vld [vmem:[%s0 + $0xd8] sm:$0xf]
    %v209 = vld [vmem:[%s0 + $0xe0] sm:$0xf]
    %v210 = vld [vmem:[%s0 + $0xe8] sm:$0xf]
    %v211 = vld [vmem:[%s0 + $0xf0] sm:$0xf]
    %v212 = vld [vmem:[%s0 + $0xf8] sm:$0xf]
    %v213 = vld [vmem:[%s0 + $0x100] sm:$0xf]
    %v214 = vld [vmem:[%s0 + $0x108] sm:$0xf]
    %v215 = vld [vmem:[%s0 + $0x110] sm:$0xf]
    %vm216 = vsmask.f32 3328
    %vm217 = vsmask.f32 7440
    %vm218 = vmor %vm216, %vm217
    %v220 = vshrl.u32 %v165, 16
    %v222 = vrot.slane %v220, 4
    %v223 = vshll.u32 %v165, 16
    %v225 = vrot.slane %v223, 5
    %v226 = vor.u32 %v222, %v225
    %v227 = vrot.slane %v226, 4
    %v229 = vshll.u32 %v166, 16
    %v231 = vrot.slane %v229, 5
    %v232 = vsel %vm218, %v227, %v231
    %v234 = vshrl.u32 %v167, 16
    %v236 = vrot.slane %v234, 4
    %v237 = vshll.u32 %v167, 16
    %v239 = vrot.slane %v237, 5
    %v240 = vor.u32 %v236, %v239
    %v241 = vrot.slane %v240, 4
    %v243 = vshll.u32 %v168, 16
    %v245 = vrot.slane %v243, 5
    %v246 = vsel %vm218, %v241, %v245
    %v248 = vshrl.u32 %v169, 16
    %v250 = vrot.slane %v248, 4
    %v251 = vshll.u32 %v169, 16
    %v253 = vrot.slane %v251, 5
    %v254 = vor.u32 %v250, %v253
    %v255 = vrot.slane %v254, 4
    %v257 = vshll.u32 %v170, 16
    %v259 = vrot.slane %v257, 5
    %v260 = vsel %vm218, %v255, %v259
    %v262 = vshrl.u32 %v171, 16
    %v264 = vrot.slane %v262, 4
    %v265 = vshll.u32 %v171, 16
    %v267 = vrot.slane %v265, 5
    %v268 = vor.u32 %v264, %v267
    %v269 = vrot.slane %v268, 4
    %v271 = vshll.u32 %v172, 16
    %v273 = vrot.slane %v271, 5
    %v274 = vsel %vm218, %v269, %v273
    %v276 = vshrl.u32 %v173, 16
    %v278 = vrot.slane %v276, 4
    %v279 = vshll.u32 %v173, 16
    %v281 = vrot.slane %v279, 5
    %v282 = vor.u32 %v278, %v281
    %v283 = vrot.slane %v282, 4
    %v285 = vshll.u32 %v174, 16
    %v287 = vrot.slane %v285, 5
    %v288 = vsel %vm218, %v283, %v287
    %v290 = vshrl.u32 %v175, 16
    %v292 = vrot.slane %v290, 4
    %v293 = vshll.u32 %v175, 16
    %v295 = vrot.slane %v293, 5
    %v296 = vor.u32 %v292, %v295
    %v297 = vrot.slane %v296, 4
    %v299 = vshll.u32 %v176, 16
    %v301 = vrot.slane %v299, 5
    %v302 = vsel %vm218, %v297, %v301
    %v304 = vshrl.u32 %v177, 16
    %v306 = vrot.slane %v304, 4
    %v307 = vshll.u32 %v177, 16
    %v309 = vrot.slane %v307, 5
    %v310 = vor.u32 %v306, %v309
    %v311 = vrot.slane %v310, 4
    %v313 = vshll.u32 %v178, 16
    %v315 = vrot.slane %v313, 5
    %v316 = vsel %vm218, %v311, %v315
    %v318 = vshrl.u32 %v179, 16
    %v320 = vrot.slane %v318, 4
    %v321 = vshll.u32 %v179, 16
    %v323 = vrot.slane %v321, 5
    %v324 = vor.u32 %v320, %v323
    %v325 = vrot.slane %v324, 4
    %v327 = vshll.u32 %v180, 16
    %v329 = vrot.slane %v327, 5
    %v330 = vsel %vm218, %v325, %v329
    %v332 = vshrl.u32 %v192, 16
    %v334 = vrot.slane %v332, 4
    %v335 = vshll.u32 %v192, 16
    %v337 = vrot.slane %v335, 5
    %v338 = vor.u32 %v334, %v337
    %v339 = vrot.slane %v338, 4
    %v341 = vshll.u32 %v193, 16
    %v343 = vrot.slane %v341, 5
    %v344 = vsel %vm218, %v339, %v343
    %v346 = vshrl.u32 %v194, 16
    %v348 = vrot.slane %v346, 4
    %v349 = vshll.u32 %v194, 16
    %v351 = vrot.slane %v349, 5
    %v352 = vor.u32 %v348, %v351
    %v353 = vrot.slane %v352, 4
    %v355 = vshll.u32 %v195, 16
    %v357 = vrot.slane %v355, 5
    %v358 = vsel %vm218, %v353, %v357
    %v360 = vshrl.u32 %v196, 16
    %v362 = vrot.slane %v360, 4
    %v363 = vshll.u32 %v196, 16
    %v365 = vrot.slane %v363, 5
    %v366 = vor.u32 %v362, %v365
    %v367 = vrot.slane %v366, 4
    %v369 = vshll.u32 %v197, 16
    %v371 = vrot.slane %v369, 5
    %v372 = vsel %vm218, %v367, %v371
    %v374 = vshrl.u32 %v198, 16
    %v376 = vrot.slane %v374, 4
    %v377 = vshll.u32 %v198, 16
    %v379 = vrot.slane %v377, 5
    %v380 = vor.u32 %v376, %v379
    %v381 = vrot.slane %v380, 4
    %v383 = vshll.u32 %v199, 16
    %v385 = vrot.slane %v383, 5
    %v386 = vsel %vm218, %v381, %v385
    %v388 = vshrl.u32 %v200, 16
    %v390 = vrot.slane %v388, 4
    %v391 = vshll.u32 %v200, 16
    %v393 = vrot.slane %v391, 5
    %v394 = vor.u32 %v390, %v393
    %v395 = vrot.slane %v394, 4
    %v397 = vshll.u32 %v201, 16
    %v399 = vrot.slane %v397, 5
    %v400 = vsel %vm218, %v395, %v399
    %v402 = vshrl.u32 %v202, 16
    %v404 = vrot.slane %v402, 4
    %v405 = vshll.u32 %v202, 16
    %v407 = vrot.slane %v405, 5
    %v408 = vor.u32 %v404, %v407
    %v409 = vrot.slane %v408, 4
    %v411 = vshll.u32 %v203, 16
    %v413 = vrot.slane %v411, 5
    %v414 = vsel %vm218, %v409, %v413
    %v416 = vshrl.u32 %v204, 16
    %v418 = vrot.slane %v416, 4
    %v419 = vshll.u32 %v204, 16
    %v421 = vrot.slane %v419, 5
    %v422 = vor.u32 %v418, %v421
    %v423 = vrot.slane %v422, 4
    %v425 = vshll.u32 %v205, 16
    %v427 = vrot.slane %v425, 5
    %v428 = vsel %vm218, %v423, %v427
    %v430 = vshrl.u32 %v206, 16
    %v432 = vrot.slane %v430, 4
    %v433 = vshll.u32 %v206, 16
    %v435 = vrot.slane %v433, 5
    %v436 = vor.u32 %v432, %v435
    %v437 = vrot.slane %v436, 4
    %v439 = vshll.u32 %v207, 16
    %v441 = vrot.slane %v439, 5
    %v442 = vsel %vm218, %v437, %v441
    %v444 = vshrl.u32 %v181, 16
    %v446 = vrot.slane %v444, 4
    %v447 = vshll.u32 %v181, 16
    %v449 = vrot.slane %v447, 5
    %v450 = vor.u32 %v446, %v449
    %v451 = vrot.slane %v450, 4
    %v453 = vshll.u32 %v182, 16
    %v455 = vrot.slane %v453, 5
    %v456 = vsel %vm218, %v451, %v455
    %v465 = vunpack.c.l.b16 %v165
    %v466 = vunpack.c.l.b16 %v167
    %v467 = vunpack.c.l.b16 %v169
    %v468 = vunpack.c.l.b16 %v171
    %v469 = vunpack.c.l.b16 %v173
    %v470 = vunpack.c.l.b16 %v175
    %v471 = vunpack.c.l.b16 %v177
    %v472 = vunpack.c.l.b16 %v179
    %v473 = vpack.c.b16 %v466, %v465
    %v474 = vpack.c.b16 %v468, %v467
    %v475 = vpack.c.b16 %v470, %v469
    %v476 = vpack.c.b16 %v472, %v471
    %v489 = vunpack.c.l.b16 %v183
    %v490 = vunpack.c.l.b16 %v184
    %v491 = vunpack.c.l.b16 %v185
    %v492 = vunpack.c.l.b16 %v186
    %v493 = vunpack.c.l.b16 %v187
    %v494 = vunpack.c.l.b16 %v188
    %v495 = vunpack.c.l.b16 %v189
    %v496 = vunpack.c.l.b16 %v190
    %v497 = vpack.c.b16 %v490, %v489
    %v498 = vpack.c.b16 %v492, %v491
    %v499 = vpack.c.b16 %v494, %v493
    %v500 = vpack.c.b16 %v496, %v495
    %v505 = vunpack.c.l.b16 %v232
    %v506 = vunpack.c.l.b16 %v246
    %v507 = vunpack.c.l.b16 %v260
    %v508 = vunpack.c.l.b16 %v274
    %v509 = vunpack.c.l.b16 %v288
    %v510 = vunpack.c.l.b16 %v302
    %v511 = vunpack.c.l.b16 %v316
    %v512 = vunpack.c.l.b16 %v330
    %v513 = vpack.c.b16 %v506, %v505
    %v514 = vpack.c.b16 %v508, %v507
    %v515 = vpack.c.b16 %v510, %v509
    %v516 = vpack.c.b16 %v512, %v511
    %v529 = vunpack.c.l.b16 %v192
    %v530 = vunpack.c.l.b16 %v194
    %v531 = vunpack.c.l.b16 %v196
    %v532 = vunpack.c.l.b16 %v198
    %v533 = vunpack.c.l.b16 %v200
    %v534 = vunpack.c.l.b16 %v202
    %v535 = vunpack.c.l.b16 %v204
    %v536 = vunpack.c.l.b16 %v206
    %v537 = vpack.c.b16 %v530, %v529
    %v538 = vpack.c.b16 %v532, %v531
    %v539 = vpack.c.b16 %v534, %v533
    %v540 = vpack.c.b16 %v536, %v535
    %v553 = vunpack.c.l.b16 %v208
    %v554 = vunpack.c.l.b16 %v209
    %v555 = vunpack.c.l.b16 %v210
    %v556 = vunpack.c.l.b16 %v211
    %v557 = vunpack.c.l.b16 %v212
    %v558 = vunpack.c.l.b16 %v213
    %v559 = vunpack.c.l.b16 %v214
    %v560 = vunpack.c.l.b16 %v215
    %v561 = vpack.c.b16 %v554, %v553
    %v562 = vpack.c.b16 %v556, %v555
    %v563 = vpack.c.b16 %v558, %v557
    %v564 = vpack.c.b16 %v560, %v559
    %v569 = vunpack.c.l.b16 %v344
    %v570 = vunpack.c.l.b16 %v358
    %v571 = vunpack.c.l.b16 %v372
    %v572 = vunpack.c.l.b16 %v386
    %v573 = vunpack.c.l.b16 %v400
    %v574 = vunpack.c.l.b16 %v414
    %v575 = vunpack.c.l.b16 %v428
    %v576 = vunpack.c.l.b16 %v442
    %v577 = vpack.c.b16 %v570, %v569
    %v578 = vpack.c.b16 %v572, %v571
    %v579 = vpack.c.b16 %v574, %v573
    %v580 = vpack.c.b16 %v576, %v575
    %v586 = vunpack.c.l.b16 %v181
    %v587 = vpack.c.b16 %v467, %v466
    %v588 = vpack.c.b16 %v469, %v468
    %v589 = vpack.c.b16 %v471, %v470
    %v590 = vpack.c.b16 %v586, %v472
    %v596 = vunpack.c.l.b16 %v191
    %v597 = vpack.c.b16 %v491, %v490
    %v598 = vpack.c.b16 %v493, %v492
    %v599 = vpack.c.b16 %v495, %v494
    %v600 = vpack.c.b16 %v596, %v496
    %v605 = vunpack.c.l.b16 %v456
    %v606 = vpack.c.b16 %v507, %v506
    %v607 = vpack.c.b16 %v509, %v508
    %v608 = vpack.c.b16 %v511, %v510
    %v609 = vpack.c.b16 %v605, %v512
    %v758 = vunpack.c.l.b16 %v19
    %v759 = vunpack.c.l.b16 %v20
    %v760 = vunpack.c.l.b16 %v21
    %v761 = vunpack.c.l.b16 %v22
    %v762 = vunpack.c.l.b16 %v23
    %v763 = vunpack.c.l.b16 %v24
    %v764 = vunpack.c.l.b16 %v25
    %v765 = vunpack.c.l.b16 %v26
    %v766 = vunpack.c.l.b16 %v27
    %v767 = vunpack.c.l.b16 %v28
    %v768 = vunpack.c.l.b16 %v29
    %v769 = vunpack.c.l.b16 %v30
    %v770 = vunpack.c.l.b16 %v31
    %v771 = vunpack.c.l.b16 %v32
    %v772 = vunpack.c.l.b16 %v33
    %v773 = vunpack.c.l.b16 %v34
    %v774 = vunpack.c.l.b16 %v35
    %v775 = vunpack.c.l.b16 %v36
    %v776 = vunpack.c.l.b16 %v37
    %v777 = vunpack.c.l.b16 %v38
    %v778 = vunpack.c.l.b16 %v39
    %v779 = vunpack.c.l.b16 %v40
    %v780 = vunpack.c.l.b16 %v41
    %v781 = vunpack.c.l.b16 %v42
    %v782 = vunpack.c.l.b16 %v43
    %v783 = vunpack.c.l.b16 %v44
    %v784 = vunpack.c.l.b16 %v45
    %v785 = vunpack.c.l.b16 %v46
    %v786 = vunpack.c.l.b16 %v47
    %v787 = vunpack.c.l.b16 %v48
    %v788 = vunpack.c.l.b16 %v49
    %v789 = vunpack.c.l.b16 %v50
    %v790 = vunpack.c.l.b16 %v51
    %v791 = vunpack.c.l.b16 %v52
    %v792 = vunpack.c.l.b16 %v53
    %v793 = vunpack.c.l.b16 %v54
    %v794 = vunpack.c.l.b16 %v55
    %v795 = vunpack.c.l.b16 %v56
    %v796 = vunpack.c.l.b16 %v57
    %v797 = vunpack.c.l.b16 %v58
    %v798 = vunpack.c.l.b16 %v59
    %v799 = vunpack.c.l.b16 %v60
    %v800 = vunpack.c.l.b16 %v61
    %v801 = vunpack.c.l.b16 %v62
    %v802 = vunpack.c.l.b16 %v63
    %v803 = vunpack.c.l.b16 %v64
    %v804 = vunpack.c.l.b16 %v65
    %v805 = vunpack.c.l.b16 %v66
    %v806 = vunpack.c.l.b16 %v67
    %v807 = vunpack.c.l.b16 %v68
    %v808 = vunpack.c.l.b16 %v69
    %v809 = vunpack.c.l.b16 %v70
    %v810 = vunpack.c.l.b16 %v71
    %v811 = vunpack.c.l.b16 %v72
    %v812 = vunpack.c.l.b16 %v73
    %v813 = vunpack.c.l.b16 %v74
    %v814 = vunpack.c.l.b16 %v75
    %v815 = vunpack.c.l.b16 %v76
    %v816 = vunpack.c.l.b16 %v77
    %v817 = vunpack.c.l.b16 %v78
    %v818 = vunpack.c.l.b16 %v79
    %v819 = vunpack.c.l.b16 %v80
    %v820 = vunpack.c.l.b16 %v81
    %v821 = vunpack.c.l.b16 %v82
    %v822 = vunpack.c.l.b16 %v83
    %v823 = vunpack.c.l.b16 %v84
    %v824 = vunpack.c.l.b16 %v85
    %v825 = vunpack.c.l.b16 %v86
    %v826 = vunpack.c.l.b16 %v87
    %v827 = vunpack.c.l.b16 %v88
    %v828 = vunpack.c.l.b16 %v89
    %v829 = vunpack.c.l.b16 %v90
    %v830 = vunpack.c.l.b16 %v91
    %v831 = vunpack.c.l.b16 %v92
    %v832 = vunpack.c.l.b16 %v93
    %v833 = vunpack.c.l.b16 %v94
    %v834 = vunpack.c.l.b16 %v95
    %v835 = vunpack.c.l.b16 %v96
    %v836 = vunpack.c.l.b16 %v97
    %v837 = vunpack.c.l.b16 %v98
    %v838 = vunpack.c.l.b16 %v99
    %v839 = vunpack.c.l.b16 %v100
    %v840 = vunpack.c.l.b16 %v101
    %v841 = vunpack.c.l.b16 %v102
    %v842 = vunpack.c.l.b16 %v103
    %v843 = vunpack.c.l.b16 %v104
    %v844 = vunpack.c.l.b16 %v105
    %v845 = vunpack.c.l.b16 %v106
    %v846 = vunpack.c.l.b16 %v107
    %v847 = vunpack.c.l.b16 %v108
    %v848 = vunpack.c.l.b16 %v109
    %v849 = vunpack.c.l.b16 %v110
    %v850 = vunpack.c.l.b16 %v111
    %v851 = vunpack.c.l.b16 %v112
    %v852 = vunpack.c.l.b16 %v113
    %v853 = vunpack.c.l.b16 %v114
    %v854 = vunpack.c.l.b16 %v115
    %v855 = vunpack.c.l.b16 %v116
    %v856 = vunpack.c.l.b16 %v117
    %v857 = vunpack.c.l.b16 %v118
    %v858 = vunpack.c.l.b16 %v119
    %v859 = vunpack.c.l.b16 %v120
    %v860 = vunpack.c.l.b16 %v121
    %v861 = vunpack.c.l.b16 %v122
    %v862 = vunpack.c.l.b16 %v123
    %v863 = vunpack.c.l.b16 %v124
    %v864 = vunpack.c.l.b16 %v125
    %v865 = vunpack.c.l.b16 %v126
    %v866 = vunpack.c.l.b16 %v127
    %v867 = vunpack.c.l.b16 %v128
    %v868 = vunpack.c.l.b16 %v129
    %v869 = vunpack.c.l.b16 %v130
    %v870 = vunpack.c.l.b16 %v131
    %v871 = vunpack.c.l.b16 %v132
    %v872 = vunpack.c.l.b16 %v133
    %v873 = vunpack.c.l.b16 %v134
    %v874 = vunpack.c.l.b16 %v135
    %v875 = vunpack.c.l.b16 %v136
    %v876 = vunpack.c.l.b16 %v137
    %v877 = vunpack.c.l.b16 %v138
    %v878 = vunpack.c.l.b16 %v139
    %v879 = vunpack.c.l.b16 %v140
    %v880 = vunpack.c.l.b16 %v141
    %v881 = vunpack.c.l.b16 %v142
    %v882 = vunpack.c.l.b16 %v143
    %v883 = vunpack.c.l.b16 %v144
    %v884 = vunpack.c.l.b16 %v145
    %v885 = vunpack.c.l.b16 %v146
    %v886 = vunpack.c.l.b16 %v147
    %v887 = vunpack.c.l.b16 %v148
    %v888 = vunpack.c.l.b16 %v149
    %v889 = vunpack.c.l.b16 %v150
    %v890 = vunpack.c.l.b16 %v151
    %v891 = vunpack.c.l.b16 %v152
    %v892 = vunpack.c.l.b16 %v153
    %v893 = vunpack.c.l.b16 %v154
    %v894 = vunpack.c.l.b16 %v155
    %v895 = vunpack.c.l.b16 %v156
    %v896 = vunpack.c.l.b16 %v157
    %v897 = vunpack.c.l.b16 %v158
    %v898 = vunpack.c.l.b16 %v159
    %v899 = vunpack.c.l.b16 %v160
    %v900 = vunpack.c.l.b16 %v161
    %v901 = vunpack.c.l.b16 %v162
    %v902 = vpack.c.b16 %v759, %v758
    %v903 = vpack.c.b16 %v761, %v760
    %v904 = vpack.c.b16 %v763, %v762
    %v905 = vpack.c.b16 %v765, %v764
    %v906 = vpack.c.b16 %v767, %v766
    %v907 = vpack.c.b16 %v769, %v768
    %v908 = vpack.c.b16 %v771, %v770
    %v909 = vpack.c.b16 %v773, %v772
    %v910 = vpack.c.b16 %v775, %v774
    %v911 = vpack.c.b16 %v777, %v776
    %v912 = vpack.c.b16 %v779, %v778
    %v913 = vpack.c.b16 %v781, %v780
    %v914 = vpack.c.b16 %v783, %v782
    %v915 = vpack.c.b16 %v785, %v784
    %v916 = vpack.c.b16 %v787, %v786
    %v917 = vpack.c.b16 %v789, %v788
    %v918 = vpack.c.b16 %v791, %v790
    %v919 = vpack.c.b16 %v793, %v792
    %v920 = vpack.c.b16 %v795, %v794
    %v921 = vpack.c.b16 %v797, %v796
    %v922 = vpack.c.b16 %v799, %v798
    %v923 = vpack.c.b16 %v801, %v800
    %v924 = vpack.c.b16 %v803, %v802
    %v925 = vpack.c.b16 %v805, %v804
    %v926 = vpack.c.b16 %v807, %v806
    %v927 = vpack.c.b16 %v809, %v808
    %v928 = vpack.c.b16 %v811, %v810
    %v929 = vpack.c.b16 %v813, %v812
    %v930 = vpack.c.b16 %v815, %v814
    %v931 = vpack.c.b16 %v817, %v816
    %v932 = vpack.c.b16 %v819, %v818
    %v933 = vpack.c.b16 %v821, %v820
    %v934 = vpack.c.b16 %v823, %v822
    %v935 = vpack.c.b16 %v825, %v824
    %v936 = vpack.c.b16 %v827, %v826
    %v937 = vpack.c.b16 %v829, %v828
    %v938 = vpack.c.b16 %v831, %v830
    %v939 = vpack.c.b16 %v833, %v832
    %v940 = vpack.c.b16 %v835, %v834
    %v941 = vpack.c.b16 %v837, %v836
    %v942 = vpack.c.b16 %v839, %v838
    %v943 = vpack.c.b16 %v841, %v840
    %v944 = vpack.c.b16 %v843, %v842
    %v945 = vpack.c.b16 %v845, %v844
    %v946 = vpack.c.b16 %v847, %v846
    %v947 = vpack.c.b16 %v849, %v848
    %v948 = vpack.c.b16 %v851, %v850
    %v949 = vpack.c.b16 %v853, %v852
    %v950 = vpack.c.b16 %v855, %v854
    %v951 = vpack.c.b16 %v857, %v856
    %v952 = vpack.c.b16 %v859, %v858
    %v953 = vpack.c.b16 %v861, %v860
    %v954 = vpack.c.b16 %v863, %v862
    %v955 = vpack.c.b16 %v865, %v864
    %v956 = vpack.c.b16 %v867, %v866
    %v957 = vpack.c.b16 %v869, %v868
    %v958 = vpack.c.b16 %v871, %v870
    %v959 = vpack.c.b16 %v873, %v872
    %v960 = vpack.c.b16 %v875, %v874
    %v961 = vpack.c.b16 %v877, %v876
    %v962 = vpack.c.b16 %v879, %v878
    %v963 = vpack.c.b16 %v881, %v880
    %v964 = vpack.c.b16 %v883, %v882
    %v965 = vpack.c.b16 %v885, %v884
    %v966 = vpack.c.b16 %v887, %v886
    %v967 = vpack.c.b16 %v889, %v888
    %v968 = vpack.c.b16 %v891, %v890
    %v969 = vpack.c.b16 %v893, %v892
    %v970 = vpack.c.b16 %v895, %v894
    %v971 = vpack.c.b16 %v897, %v896
    %v972 = vpack.c.b16 %v899, %v898
    %v973 = vpack.c.b16 %v901, %v900
    %1046 = vmatprep.subr.bf16.mxu0 0
    %1047 = vmatpush1.bf16.msra.mxu0 %v909
    %1048 = vmatprep.subr.bf16.mxu0 0
    %1049 = vmatpush1.bf16.msra.mxu0 %v908
    %1050 = vmatprep.subr.bf16.mxu0 0
    %1051 = vmatpush1.bf16.msra.mxu0 %v907
    %1052 = vmatprep.subr.bf16.mxu0 0
    %1053 = vmatpush1.bf16.msra.mxu0 %v906
    %1054 = vmatprep.subr.bf16.mxu0 0
    %1055 = vmatpush1.bf16.msra.mxu0 %v905
    %1056 = vmatprep.subr.bf16.mxu0 0
    %1057 = vmatpush1.bf16.msra.mxu0 %v904
    %1058 = vmatprep.subr.bf16.mxu0 0
    %1059 = vmatpush1.bf16.msra.mxu0 %v903
    %1060 = vmatprep.subr.bf16.mxu0 0
    %1061 = vmatpush1.bf16.msra.mxu0 %v902
    %1062 = vmatprep.subr.bf16.mxu0 0
    %1063 = vmatpush2.bf16.msra.mxu0 %v917
    %1064 = vmatprep.subr.bf16.mxu0 0
    %1065 = vmatpush2.bf16.msra.mxu0 %v916
    %1066 = vmatprep.subr.bf16.mxu0 0
    %1067 = vmatpush2.bf16.msra.mxu0 %v915
    %1068 = vmatprep.subr.bf16.mxu0 0
    %1069 = vmatpush2.bf16.msra.mxu0 %v914
    %1070 = vmatprep.subr.bf16.mxu0 0
    %1071 = vmatpush2.bf16.msra.mxu0 %v913
    %1072 = vmatprep.subr.bf16.mxu0 0
    %1073 = vmatpush2.bf16.msra.mxu0 %v912
    %1074 = vmatprep.subr.bf16.mxu0 0
    %1075 = vmatpush2.bf16.msra.mxu0 %v911
    %1076 = vmatprep.subr.bf16.mxu0 0
    %1077 = vmatpush2.bf16.msra.mxu0 %v910
    %1078 = vmatprep.mubr.bf16.mxu0 %v497
    %1079 = vmatmul.mubr.bf16.gmra.mxu0 %v473
    %v1080 = vpop.f32.mrf.mxu0
    %v1081 = vadd.f32 0.0, %v1080
    %v1082 = vpop.f32.mrf.mxu0
    %v1083 = vpop.f32.mrf.mxu0
    %v1084 = vadd.f32 0.0, %v1083
    %v1085 = vpop.f32.mrf.mxu0
    %1086 = vmatprep.mubr.bf16.mxu0 %v498
    %1087 = vmatmul.mubr.bf16.gmra.mxu0 %v474
    %v1088 = vpop.f32.mrf.mxu0
    %v1089 = vadd.f32 0.0, %v1088
    %v1090 = vpop.f32.mrf.mxu0
    %v1091 = vpop.f32.mrf.mxu0
    %v1092 = vadd.f32 0.0, %v1091
    %v1093 = vpop.f32.mrf.mxu0
    %1094 = vmatprep.mubr.bf16.mxu0 %v499
    %1095 = vmatmul.mubr.bf16.gmra.mxu0 %v475
    %v1096 = vpop.f32.mrf.mxu0
    %v1097 = vadd.f32 0.0, %v1096
    %v1098 = vpop.f32.mrf.mxu0
    %v1099 = vpop.f32.mrf.mxu0
    %v1100 = vadd.f32 0.0, %v1099
    %v1101 = vpop.f32.mrf.mxu0
    %1102 = vmatprep.mubr.bf16.mxu0 %v500
    %1103 = vmatmul.mubr.bf16.gmra.mxu0 %v476
    %v1104 = vpop.f32.mrf.mxu0
    %v1105 = vadd.f32 0.0, %v1104
    %v1106 = vpop.f32.mrf.mxu0
    %v1107 = vpop.f32.mrf.mxu0
    %v1108 = vadd.f32 0.0, %v1107
    %v1109 = vpop.f32.mrf.mxu0
    %1110 = vdwg.mxu0
    %1111 = vmatprep.subr.bf16.mxu0 0
    %1112 = vmatpush1.bf16.msra.mxu0 %v925
    %1113 = vmatprep.subr.bf16.mxu0 0
    %1114 = vmatpush1.bf16.msra.mxu0 %v924
    %1115 = vmatprep.subr.bf16.mxu0 0
    %1116 = vmatpush1.bf16.msra.mxu0 %v923
    %1117 = vmatprep.subr.bf16.mxu0 0
    %1118 = vmatpush1.bf16.msra.mxu0 %v922
    %1119 = vmatprep.subr.bf16.mxu0 0
    %1120 = vmatpush1.bf16.msra.mxu0 %v921
    %1121 = vmatprep.subr.bf16.mxu0 0
    %1122 = vmatpush1.bf16.msra.mxu0 %v920
    %1123 = vmatprep.subr.bf16.mxu0 0
    %1124 = vmatpush1.bf16.msra.mxu0 %v919
    %1125 = vmatprep.subr.bf16.mxu0 0
    %1126 = vmatpush1.bf16.msra.mxu0 %v918
    %1127 = vmatprep.subr.bf16.mxu0 0
    %1128 = vmatpush2.bf16.msra.mxu0 %v933
    %1129 = vmatprep.subr.bf16.mxu0 0
    %1130 = vmatpush2.bf16.msra.mxu0 %v932
    %1131 = vmatprep.subr.bf16.mxu0 0
    %1132 = vmatpush2.bf16.msra.mxu0 %v931
    %1133 = vmatprep.subr.bf16.mxu0 0
    %1134 = vmatpush2.bf16.msra.mxu0 %v930
    %1135 = vmatprep.subr.bf16.mxu0 0
    %1136 = vmatpush2.bf16.msra.mxu0 %v929
    %1137 = vmatprep.subr.bf16.mxu0 0
    %1138 = vmatpush2.bf16.msra.mxu0 %v928
    %1139 = vmatprep.subr.bf16.mxu0 0
    %1140 = vmatpush2.bf16.msra.mxu0 %v927
    %1141 = vmatprep.subr.bf16.mxu0 0
    %1142 = vmatpush2.bf16.msra.mxu0 %v926
    %1143 = vmatprep.mubr.bf16.mxu0 %v537
    %1144 = vmatmul.mubr.bf16.gmra.mxu0 %v513
    %v1145 = vpop.f32.mrf.mxu0
    %v1146 = vadd.f32 %v1081, %v1145
    %v1147 = vpop.f32.mrf.mxu0
    %v1148 = vpop.f32.mrf.mxu0
    %v1149 = vadd.f32 %v1084, %v1148
    %v1150 = vpop.f32.mrf.mxu0
    %1151 = vmatprep.mubr.bf16.mxu0 %v538
    %1152 = vmatmul.mubr.bf16.gmra.mxu0 %v514
    %v1153 = vpop.f32.mrf.mxu0
    %v1154 = vadd.f32 %v1089, %v1153
    %v1155 = vpop.f32.mrf.mxu0
    %v1156 = vpop.f32.mrf.mxu0
    %v1157 = vadd.f32 %v1092, %v1156
    %v1158 = vpop.f32.mrf.mxu0
    %1159 = vmatprep.mubr.bf16.mxu0 %v539
    %1160 = vmatmul.mubr.bf16.gmra.mxu0 %v515
    %v1161 = vpop.f32.mrf.mxu0
    %v1162 = vadd.f32 %v1097, %v1161
    %v1163 = vpop.f32.mrf.mxu0
    %v1164 = vpop.f32.mrf.mxu0
    %v1165 = vadd.f32 %v1100, %v1164
    %v1166 = vpop.f32.mrf.mxu0
    %1167 = vmatprep.mubr.bf16.mxu0 %v540
    %1168 = vmatmul.mubr.bf16.gmra.mxu0 %v516
    %v1169 = vpop.f32.mrf.mxu0
    %v1170 = vadd.f32 %v1105, %v1169
    %v1171 = vpop.f32.mrf.mxu0
    %v1172 = vpop.f32.mrf.mxu0
    %v1173 = vadd.f32 %v1108, %v1172
    %v1174 = vpop.f32.mrf.mxu0
    %1175 = vdwg.mxu0
    %1176 = vmatprep.subr.bf16.mxu0 0
    %1177 = vmatpush1.bf16.msra.mxu0 %v941
    %1178 = vmatprep.subr.bf16.mxu0 0
    %1179 = vmatpush1.bf16.msra.mxu0 %v940
    %1180 = vmatprep.subr.bf16.mxu0 0
    %1181 = vmatpush1.bf16.msra.mxu0 %v939
    %1182 = vmatprep.subr.bf16.mxu0 0
    %1183 = vmatpush1.bf16.msra.mxu0 %v938
    %1184 = vmatprep.subr.bf16.mxu0 0
    %1185 = vmatpush1.bf16.msra.mxu0 %v937
    %1186 = vmatprep.subr.bf16.mxu0 0
    %1187 = vmatpush1.bf16.msra.mxu0 %v936
    %1188 = vmatprep.subr.bf16.mxu0 0
    %1189 = vmatpush1.bf16.msra.mxu0 %v935
    %1190 = vmatprep.subr.bf16.mxu0 0
    %1191 = vmatpush1.bf16.msra.mxu0 %v934
    %1192 = vmatprep.subr.bf16.mxu0 0
    %1193 = vmatpush2.bf16.msra.mxu0 %v949
    %1194 = vmatprep.subr.bf16.mxu0 0
    %1195 = vmatpush2.bf16.msra.mxu0 %v948
    %1196 = vmatprep.subr.bf16.mxu0 0
    %1197 = vmatpush2.bf16.msra.mxu0 %v947
    %1198 = vmatprep.subr.bf16.mxu0 0
    %1199 = vmatpush2.bf16.msra.mxu0 %v946
    %1200 = vmatprep.subr.bf16.mxu0 0
    %1201 = vmatpush2.bf16.msra.mxu0 %v945
    %1202 = vmatprep.subr.bf16.mxu0 0
    %1203 = vmatpush2.bf16.msra.mxu0 %v944
    %1204 = vmatprep.subr.bf16.mxu0 0
    %1205 = vmatpush2.bf16.msra.mxu0 %v943
    %1206 = vmatprep.subr.bf16.mxu0 0
    %1207 = vmatpush2.bf16.msra.mxu0 %v942
    %1208 = vmatprep.mubr.bf16.mxu0 %v577
    %1209 = vmatmul.mubr.bf16.gmra.mxu0 %v561
    %v1210 = vpop.f32.mrf.mxu0
    %v1211 = vadd.f32 %v1146, %v1210
    %v1212 = vpop.f32.mrf.mxu0
    %v1213 = vpop.f32.mrf.mxu0
    %v1214 = vadd.f32 %v1149, %v1213
    %v1215 = vpop.f32.mrf.mxu0
    %1216 = vmatprep.mubr.bf16.mxu0 %v578
    %1217 = vmatmul.mubr.bf16.gmra.mxu0 %v562
    %v1218 = vpop.f32.mrf.mxu0
    %v1219 = vadd.f32 %v1154, %v1218
    %v1220 = vpop.f32.mrf.mxu0
    %v1221 = vpop.f32.mrf.mxu0
    %v1222 = vadd.f32 %v1157, %v1221
    %v1223 = vpop.f32.mrf.mxu0
    %1224 = vmatprep.mubr.bf16.mxu0 %v579
    %1225 = vmatmul.mubr.bf16.gmra.mxu0 %v563
    %v1226 = vpop.f32.mrf.mxu0
    %v1227 = vadd.f32 %v1162, %v1226
    %v1228 = vpop.f32.mrf.mxu0
    %v1229 = vpop.f32.mrf.mxu0
    %v1230 = vadd.f32 %v1165, %v1229
    %v1231 = vpop.f32.mrf.mxu0
    %1232 = vmatprep.mubr.bf16.mxu0 %v580
    %1233 = vmatmul.mubr.bf16.gmra.mxu0 %v564
    %v1234 = vpop.f32.mrf.mxu0
    %v1235 = vadd.f32 %v1170, %v1234
    %v1236 = vpop.f32.mrf.mxu0
    %v1237 = vpop.f32.mrf.mxu0
    %v1238 = vadd.f32 %v1173, %v1237
    %v1239 = vpop.f32.mrf.mxu0
    %1240 = vdwg.mxu0
    %1241 = vmatprep.subr.bf16.mxu0 0
    %1242 = vmatpush1.bf16.msra.mxu0 %v957
    %1243 = vmatprep.subr.bf16.mxu0 0
    %1244 = vmatpush1.bf16.msra.mxu0 %v956
    %1245 = vmatprep.subr.bf16.mxu0 0
    %1246 = vmatpush1.bf16.msra.mxu0 %v955
    %1247 = vmatprep.subr.bf16.mxu0 0
    %1248 = vmatpush1.bf16.msra.mxu0 %v954
    %1249 = vmatprep.subr.bf16.mxu0 0
    %1250 = vmatpush1.bf16.msra.mxu0 %v953
    %1251 = vmatprep.subr.bf16.mxu0 0
    %1252 = vmatpush1.bf16.msra.mxu0 %v952
    %1253 = vmatprep.subr.bf16.mxu0 0
    %1254 = vmatpush1.bf16.msra.mxu0 %v951
    %1255 = vmatprep.subr.bf16.mxu0 0
    %1256 = vmatpush1.bf16.msra.mxu0 %v950
    %1257 = vmatprep.subr.bf16.mxu0 0
    %1258 = vmatpush2.bf16.msra.mxu0 %v965
    %1259 = vmatprep.subr.bf16.mxu0 0
    %1260 = vmatpush2.bf16.msra.mxu0 %v964
    %1261 = vmatprep.subr.bf16.mxu0 0
    %1262 = vmatpush2.bf16.msra.mxu0 %v963
    %1263 = vmatprep.subr.bf16.mxu0 0
    %1264 = vmatpush2.bf16.msra.mxu0 %v962
    %1265 = vmatprep.subr.bf16.mxu0 0
    %1266 = vmatpush2.bf16.msra.mxu0 %v961
    %1267 = vmatprep.subr.bf16.mxu0 0
    %1268 = vmatpush2.bf16.msra.mxu0 %v960
    %1269 = vmatprep.subr.bf16.mxu0 0
    %1270 = vmatpush2.bf16.msra.mxu0 %v959
    %1271 = vmatprep.subr.bf16.mxu0 0
    %1272 = vmatpush2.bf16.msra.mxu0 %v958
    %1273 = vmatprep.mubr.bf16.mxu0 %v597
    %1274 = vmatmul.mubr.bf16.gmra.mxu0 %v587
    %v1275 = vpop.f32.mrf.mxu0
    %v1276 = vadd.f32 %v1211, %v1275
    %v1277 = vpop.f32.mrf.mxu0
    %v1278 = vpop.f32.mrf.mxu0
    %v1279 = vadd.f32 %v1214, %v1278
    %v1280 = vpop.f32.mrf.mxu0
    %1281 = vmatprep.mubr.bf16.mxu0 %v598
    %1282 = vmatmul.mubr.bf16.gmra.mxu0 %v588
    %v1283 = vpop.f32.mrf.mxu0
    %v1284 = vadd.f32 %v1219, %v1283
    %v1285 = vpop.f32.mrf.mxu0
    %v1286 = vpop.f32.mrf.mxu0
    %v1287 = vadd.f32 %v1222, %v1286
    %v1288 = vpop.f32.mrf.mxu0
    %1289 = vmatprep.mubr.bf16.mxu0 %v599
    %1290 = vmatmul.mubr.bf16.gmra.mxu0 %v589
    %v1291 = vpop.f32.mrf.mxu0
    %v1292 = vadd.f32 %v1227, %v1291
    %v1293 = vpop.f32.mrf.mxu0
    %v1294 = vpop.f32.mrf.mxu0
    %v1295 = vadd.f32 %v1230, %v1294
    %v1296 = vpop.f32.mrf.mxu0
    %1297 = vmatprep.mubr.bf16.mxu0 %v600
    %1298 = vmatmul.mubr.bf16.gmra.mxu0 %v590
    %v1299 = vpop.f32.mrf.mxu0
    %v1300 = vadd.f32 %v1235, %v1299
    %v1301 = vpop.f32.mrf.mxu0
    %v1302 = vpop.f32.mrf.mxu0
    %v1303 = vadd.f32 %v1238, %v1302
    %v1304 = vpop.f32.mrf.mxu0
    %1305 = vdwg.mxu0
    %1306 = vmatprep.subr.bf16.mxu0 0
    %1307 = vmatpush1.bf16.msra.mxu0 %v973
    %1308 = vmatprep.subr.bf16.mxu0 0
    %1309 = vmatpush1.bf16.msra.mxu0 %v972
    %1310 = vmatprep.subr.bf16.mxu0 0
    %1311 = vmatpush1.bf16.msra.mxu0 %v971
    %1312 = vmatprep.subr.bf16.mxu0 0
    %1313 = vmatpush1.bf16.msra.mxu0 %v970
    %1314 = vmatprep.subr.bf16.mxu0 0
    %1315 = vmatpush1.bf16.msra.mxu0 %v969
    %1316 = vmatprep.subr.bf16.mxu0 0
    %1317 = vmatpush1.bf16.msra.mxu0 %v968
    %1318 = vmatprep.subr.bf16.mxu0 0
    %1319 = vmatpush1.bf16.msra.mxu0 %v967
    %1320 = vmatprep.subr.bf16.mxu0 0
    %1321 = vmatpush1.bf16.msra.mxu0 %v966
    %1322 = vmatprep.subr.bf16.mxu0 0
    %1323 = vmatpush2.bf16.msra.mxu0 0
    %1324 = vmatprep.subr.bf16.mxu0 0
    %1325 = vmatpush2.bf16.msra.mxu0 0
    %1326 = vmatprep.subr.bf16.mxu0 0
    %1327 = vmatpush2.bf16.msra.mxu0 0
    %1328 = vmatprep.subr.bf16.mxu0 0
    %1329 = vmatpush2.bf16.msra.mxu0 0
    %1330 = vmatprep.subr.bf16.mxu0 0
    %1331 = vmatpush2.bf16.msra.mxu0 0
    %1332 = vmatprep.subr.bf16.mxu0 0
    %1333 = vmatpush2.bf16.msra.mxu0 0
    %1334 = vmatprep.subr.bf16.mxu0 0
    %1335 = vmatpush2.bf16.msra.mxu0 0
    %1336 = vmatprep.subr.bf16.mxu0 0
    %1337 = vmatpush2.bf16.msra.mxu0 0
    %1338 = vmatprep.mubr.bf16.mxu0 0
    %1339 = vmatmul.mubr.bf16.gmra.mxu0 %v606
    %v1340 = vpop.f32.mrf.mxu0
    %v1341 = vadd.f32 %v1276, %v1340
    %v1342 = vpop.f32.mrf.mxu0
    %v1343 = vpop.f32.mrf.mxu0
    %v1344 = vadd.f32 %v1279, %v1343
    %v1345 = vpop.f32.mrf.mxu0
    %1346 = vmatprep.mubr.bf16.mxu0 0
    %1347 = vmatmul.mubr.bf16.gmra.mxu0 %v607
    %v1348 = vpop.f32.mrf.mxu0
    %v1349 = vadd.f32 %v1284, %v1348
    %v1350 = vpop.f32.mrf.mxu0
    %v1351 = vpop.f32.mrf.mxu0
    %v1352 = vadd.f32 %v1287, %v1351
    %v1353 = vpop.f32.mrf.mxu0
    %1354 = vmatprep.mubr.bf16.mxu0 0
    %1355 = vmatmul.mubr.bf16.gmra.mxu0 %v608
    %v1356 = vpop.f32.mrf.mxu0
    %v1357 = vadd.f32 %v1292, %v1356
    %v1358 = vpop.f32.mrf.mxu0
    %v1359 = vpop.f32.mrf.mxu0
    %v1360 = vadd.f32 %v1295, %v1359
    %v1361 = vpop.f32.mrf.mxu0
    %1362 = vmatprep.mubr.bf16.mxu0 0
    %1363 = vmatmul.mubr.bf16.gmra.mxu0 %v609
    %v1364 = vpop.f32.mrf.mxu0
    %v1365 = vadd.f32 %v1300, %v1364
    %v1366 = vpop.f32.mrf.mxu0
    %v1367 = vpop.f32.mrf.mxu0
    %v1368 = vadd.f32 %v1303, %v1367
    %v1369 = vpop.f32.mrf.mxu0
    %1370 = vdwg.mxu0
    %v1371 = vadd.f32 %v1341, %v1344
    %v1372 = vadd.f32 %v1371, %v1349
    %v1373 = vadd.f32 %v1372, %v1352
    %v1374 = vadd.f32 %v1373, %v1357
    %v1375 = vadd.f32 %v1374, %v1360
    %v1376 = vadd.f32 %v1375, %v1365
    %v1377 = vadd.f32 %v1376, %v1368
    %1378 = vadd.xlane.f32.xlu0 %v1377
    %v1379 = vpop.xlane.xlu0 %1378
    %v1380 = vrot.slane %v1379, 4
    %v1381 = vadd.f32 %v1379, %v1380
    %v1382 = vrot.slane %v1381, 2
    %v1383 = vadd.f32 %v1381, %v1382
    %v1384 = vrot.slane %v1383, 1
    %v1385 = vadd.f32 %v1383, %v1384
    %s1386 = vtos %v1385
    %v1387 = vmul.f32 %v1341, %v1341
    %v1388 = vmul.f32 %v1344, %v1344
    %v1389 = vmul.f32 %v1349, %v1349
    %v1390 = vmul.f32 %v1352, %v1352
    %v1391 = vmul.f32 %v1357, %v1357
    %v1392 = vmul.f32 %v1360, %v1360
    %v1393 = vmul.f32 %v1365, %v1365
    %v1394 = vmul.f32 %v1368, %v1368
    %v1395 = vadd.f32 %v1387, %v1388
    %v1396 = vadd.f32 %v1395, %v1389
    %v1397 = vadd.f32 %v1396, %v1390
    %v1398 = vadd.f32 %v1397, %v1391
    %v1399 = vadd.f32 %v1398, %v1392
    %v1400 = vadd.f32 %v1399, %v1393
    %v1401 = vadd.f32 %v1400, %v1394
    %1402 = vadd.xlane.f32.xlu0 %v1401
    %v1403 = vpop.xlane.xlu0 %1402
    %v1404 = vrot.slane %v1403, 4
    %v1405 = vadd.f32 %v1403, %v1404
    %v1406 = vrot.slane %v1405, 2
    %v1407 = vadd.f32 %v1405, %v1406
    %v1408 = vrot.slane %v1407, 1
    %v1409 = vadd.f32 %v1407, %v1408
    %s1410 = vtos %v1409
    %s1411 = smul.f32 %s1386, 0.001953125
    %s1412 = smul.f32 %s1410, 0.001953125
    %s1413 = smul.f32 %s1411, %s1411
    %s1414 = ssub.f32 %s1412, %s1413
    %s1415 = sadd.f32 %s1414, 1e-05
    %v1416 = vstv %s1415
    %v1417 = vrsqrt.pop %v1416
    %s1418 = vtos %v1417
    %v1419 = vstv %s1418
    %v1420 = vmul.f32 %v163, %v1419
    %v1421 = vstv %s1411
    %v1422 = vmul.f32 %v1421, %v1420
    %v1423 = vsub.f32 %v164, %v1422
    %v1425 = vlaneseq
    %v1426 = vshrl.u32 %v1425, 7
    %v1427 = vsub.s32 0, %v1426
    %v1428 = vrot.slane %v1420, %v1427
    %v1430 = vmul.f32 %v1341, %v1428
    %v1431 = vmul.f32 %v1344, %v1428
    %v1432 = vmul.f32 %v1349, %v1428
    %v1433 = vmul.f32 %v1352, %v1428
    %v1434 = vmul.f32 %v1357, %v1428
    %v1435 = vmul.f32 %v1360, %v1428
    %v1436 = vmul.f32 %v1365, %v1428
    %v1437 = vmul.f32 %v1368, %v1428
    %v1439 = vlaneseq
    %v1440 = vshrl.u32 %v1439, 7
    %v1441 = vsub.s32 0, %v1440
    %v1442 = vrot.slane %v1423, %v1441
    %v1444 = vadd.f32 %v1430, %v1442
    %v1445 = vadd.f32 %v1431, %v1442
    %v1446 = vadd.f32 %v1432, %v1442
    %v1447 = vadd.f32 %v1433, %v1442
    %v1448 = vadd.f32 %v1434, %v1442
    %v1449 = vadd.f32 %v1435, %v1442
    %v1450 = vadd.f32 %v1436, %v1442
    %v1451 = vadd.f32 %v1437, %v1442
    %1452 = vst [vmem:[#allocation2] sm:$0xff] %v1444
    %1453 = vst [vmem:[#allocation2 + $0x8] sm:$0xff] %v1445
    %1454 = vst [vmem:[#allocation2 + $0x10] sm:$0xff] %v1446
    %1455 = vst [vmem:[#allocation2 + $0x18] sm:$0xff] %v1447
    %1456 = vst [vmem:[#allocation2 + $0x20] sm:$0xff] %v1448
    %1457 = vst [vmem:[#allocation2 + $0x28] sm:$0xff] %v1449
    %1458 = vst [vmem:[#allocation2 + $0x30] sm:$0xff] %v1450
    %1459 = vst [vmem:[#allocation2 + $0x38] sm:$0xff] %v1451
    %s1460 = scalar_lea.vmem %s0, 288
    %v1461 = vld [vmem:[%s1460] sm:$0xf]
    %v1462 = vld [vmem:[%s1460 + $0x4] sm:$0x1]
    %v1463 = vld [vmem:[%s1460 + $0x8] sm:$0xf]
    %v1464 = vld [vmem:[%s1460 + $0xc] sm:$0x1]
    %v1465 = vld [vmem:[%s1460 + $0x10] sm:$0xf]
    %v1466 = vld [vmem:[%s1460 + $0x14] sm:$0x1]
    %v1467 = vld [vmem:[%s1460 + $0x18] sm:$0xf]
    %v1468 = vld [vmem:[%s1460 + $0x1c] sm:$0x1]
    %v1469 = vld [vmem:[%s1460 + $0x20] sm:$0xf]
    %v1470 = vld [vmem:[%s1460 + $0x24] sm:$0x1]
    %v1471 = vld [vmem:[%s1460 + $0x28] sm:$0xf]
    %v1472 = vld [vmem:[%s1460 + $0x2c] sm:$0x1]
    %v1473 = vld [vmem:[%s1460 + $0x30] sm:$0xf]
    %v1474 = vld [vmem:[%s1460 + $0x34] sm:$0x1]
    %v1475 = vld [vmem:[%s1460 + $0x38] sm:$0xf]
    %v1476 = vld [vmem:[%s1460 + $0x3c] sm:$0x1]
    %v1477 = vld [vmem:[%s1460 + $0x40] sm:$0xf]
    %v1478 = vld [vmem:[%s1460 + $0x44] sm:$0x1]
    %v1479 = vld [vmem:[%s1460 + $0x48] sm:$0xf]
    %v1480 = vld [vmem:[%s1460 + $0x50] sm:$0xf]
    %v1481 = vld [vmem:[%s1460 + $0x58] sm:$0xf]
    %v1482 = vld [vmem:[%s1460 + $0x60] sm:$0xf]
    %v1483 = vld [vmem:[%s1460 + $0x68] sm:$0xf]
    %v1484 = vld [vmem:[%s1460 + $0x70] sm:$0xf]
    %v1485 = vld [vmem:[%s1460 + $0x78] sm:$0xf]
    %v1486 = vld [vmem:[%s1460 + $0x80] sm:$0xf]
    %v1487 = vld [vmem:[%s1460 + $0x88] sm:$0xf]
    %v1488 = vld [vmem:[%s1460 + $0x90] sm:$0xf]
    %v1489 = vld [vmem:[%s1460 + $0x94] sm:$0x1]
    %v1490 = vld [vmem:[%s1460 + $0x98] sm:$0xf]
    %v1491 = vld [vmem:[%s1460 + $0x9c] sm:$0x1]
    %v1492 = vld [vmem:[%s1460 + $0xa0] sm:$0xf]
    %v1493 = vld [vmem:[%s1460 + $0xa4] sm:$0x1]
    %v1494 = vld [vmem:[%s1460 + $0xa8] sm:$0xf]
    %v1495 = vld [vmem:[%s1460 + $0xac] sm:$0x1]
    %v1496 = vld [vmem:[%s1460 + $0xb0] sm:$0xf]
    %v1497 = vld [vmem:[%s1460 + $0xb4] sm:$0x1]
    %v1498 = vld [vmem:[%s1460 + $0xb8] sm:$0xf]
    %v1499 = vld [vmem:[%s1460 + $0xbc] sm:$0x1]
    %v1500 = vld [vmem:[%s1460 + $0xc0] sm:$0xf]
    %v1501 = vld [vmem:[%s1460 + $0xc4] sm:$0x1]
    %v1502 = vld [vmem:[%s1460 + $0xc8] sm:$0xf]
    %v1503 = vld [vmem:[%s1460 + $0xcc] sm:$0x1]
    %v1504 = vld [vmem:[%s1460 + $0xd8] sm:$0xf]
    %v1505 = vld [vmem:[%s1460 + $0xe0] sm:$0xf]
    %v1506 = vld [vmem:[%s1460 + $0xe8] sm:$0xf]
    %v1507 = vld [vmem:[%s1460 + $0xf0] sm:$0xf]
    %v1508 = vld [vmem:[%s1460 + $0xf8] sm:$0xf]
    %v1509 = vld [vmem:[%s1460 + $0x100] sm:$0xf]
    %v1510 = vld [vmem:[%s1460 + $0x108] sm:$0xf]
    %v1511 = vld [vmem:[%s1460 + $0x110] sm:$0xf]
    %v1513 = vshrl.u32 %v1461, 16
    %v1515 = vrot.slane %v1513, 4
    %v1516 = vshll.u32 %v1461, 16
    %v1518 = vrot.slane %v1516, 5
    %v1519 = vor.u32 %v1515, %v1518
    %v1520 = vrot.slane %v1519, 4
    %v1522 = vshll.u32 %v1462, 16
    %v1524 = vrot.slane %v1522, 5
    %v1525 = vsel %vm218, %v1520, %v1524
    %v1527 = vshrl.u32 %v1463, 16
    %v1529 = vrot.slane %v1527, 4
    %v1530 = vshll.u32 %v1463, 16
    %v1532 = vrot.slane %v1530, 5
    %v1533 = vor.u32 %v1529, %v1532
    %v1534 = vrot.slane %v1533, 4
    %v1536 = vshll.u32 %v1464, 16
    %v1538 = vrot.slane %v1536, 5
    %v1539 = vsel %vm218, %v1534, %v1538
    %v1541 = vshrl.u32 %v1465, 16
    %v1543 = vrot.slane %v1541, 4
    %v1544 = vshll.u32 %v1465, 16
    %v1546 = vrot.slane %v1544, 5
    %v1547 = vor.u32 %v1543, %v1546
    %v1548 = vrot.slane %v1547, 4
    %v1550 = vshll.u32 %v1466, 16
    %v1552 = vrot.slane %v1550, 5
    %v1553 = vsel %vm218, %v1548, %v1552
    %v1555 = vshrl.u32 %v1467, 16
    %v1557 = vrot.slane %v1555, 4
    %v1558 = vshll.u32 %v1467, 16
    %v1560 = vrot.slane %v1558, 5
    %v1561 = vor.u32 %v1557, %v1560
    %v1562 = vrot.slane %v1561, 4
    %v1564 = vshll.u32 %v1468, 16
    %v1566 = vrot.slane %v1564, 5
    %v1567 = vsel %vm218, %v1562, %v1566
    %v1569 = vshrl.u32 %v1469, 16
    %v1571 = vrot.slane %v1569, 4
    %v1572 = vshll.u32 %v1469, 16
    %v1574 = vrot.slane %v1572, 5
    %v1575 = vor.u32 %v1571, %v1574
    %v1576 = vrot.slane %v1575, 4
    %v1578 = vshll.u32 %v1470, 16
    %v1580 = vrot.slane %v1578, 5
    %v1581 = vsel %vm218, %v1576, %v1580
    %v1583 = vshrl.u32 %v1471, 16
    %v1585 = vrot.slane %v1583, 4
    %v1586 = vshll.u32 %v1471, 16
    %v1588 = vrot.slane %v1586, 5
    %v1589 = vor.u32 %v1585, %v1588
    %v1590 = vrot.slane %v1589, 4
    %v1592 = vshll.u32 %v1472, 16
    %v1594 = vrot.slane %v1592, 5
    %v1595 = vsel %vm218, %v1590, %v1594
    %v1597 = vshrl.u32 %v1473, 16
    %v1599 = vrot.slane %v1597, 4
    %v1600 = vshll.u32 %v1473, 16
    %v1602 = vrot.slane %v1600, 5
    %v1603 = vor.u32 %v1599, %v1602
    %v1604 = vrot.slane %v1603, 4
    %v1606 = vshll.u32 %v1474, 16
    %v1608 = vrot.slane %v1606, 5
    %v1609 = vsel %vm218, %v1604, %v1608
    %v1611 = vshrl.u32 %v1475, 16
    %v1613 = vrot.slane %v1611, 4
    %v1614 = vshll.u32 %v1475, 16
    %v1616 = vrot.slane %v1614, 5
    %v1617 = vor.u32 %v1613, %v1616
    %v1618 = vrot.slane %v1617, 4
    %v1620 = vshll.u32 %v1476, 16
    %v1622 = vrot.slane %v1620, 5
    %v1623 = vsel %vm218, %v1618, %v1622
    %v1625 = vshrl.u32 %v1488, 16
    %v1627 = vrot.slane %v1625, 4
    %v1628 = vshll.u32 %v1488, 16
    %v1630 = vrot.slane %v1628, 5
    %v1631 = vor.u32 %v1627, %v1630
    %v1632 = vrot.slane %v1631, 4
    %v1634 = vshll.u32 %v1489, 16
    %v1636 = vrot.slane %v1634, 5
    %v1637 = vsel %vm218, %v1632, %v1636
    %v1639 = vshrl.u32 %v1490, 16
    %v1641 = vrot.slane %v1639, 4
    %v1642 = vshll.u32 %v1490, 16
    %v1644 = vrot.slane %v1642, 5
    %v1645 = vor.u32 %v1641, %v1644
    %v1646 = vrot.slane %v1645, 4
    %v1648 = vshll.u32 %v1491, 16
    %v1650 = vrot.slane %v1648, 5
    %v1651 = vsel %vm218, %v1646, %v1650
    %v1653 = vshrl.u32 %v1492, 16
    %v1655 = vrot.slane %v1653, 4
    %v1656 = vshll.u32 %v1492, 16
    %v1658 = vrot.slane %v1656, 5
    %v1659 = vor.u32 %v1655, %v1658
    %v1660 = vrot.slane %v1659, 4
    %v1662 = vshll.u32 %v1493, 16
    %v1664 = vrot.slane %v1662, 5
    %v1665 = vsel %vm218, %v1660, %v1664
    %v1667 = vshrl.u32 %v1494, 16
    %v1669 = vrot.slane %v1667, 4
    %v1670 = vshll.u32 %v1494, 16
    %v1672 = vrot.slane %v1670, 5
    %v1673 = vor.u32 %v1669, %v1672
    %v1674 = vrot.slane %v1673, 4
    %v1676 = vshll.u32 %v1495, 16
    %v1678 = vrot.slane %v1676, 5
    %v1679 = vsel %vm218, %v1674, %v1678
    %v1681 = vshrl.u32 %v1496, 16
    %v1683 = vrot.slane %v1681, 4
    %v1684 = vshll.u32 %v1496, 16
    %v1686 = vrot.slane %v1684, 5
    %v1687 = vor.u32 %v1683, %v1686
    %v1688 = vrot.slane %v1687, 4
    %v1690 = vshll.u32 %v1497, 16
    %v1692 = vrot.slane %v1690, 5
    %v1693 = vsel %vm218, %v1688, %v1692
    %v1695 = vshrl.u32 %v1498, 16
    %v1697 = vrot.slane %v1695, 4
    %v1698 = vshll.u32 %v1498, 16
    %v1700 = vrot.slane %v1698, 5
    %v1701 = vor.u32 %v1697, %v1700
    %v1702 = vrot.slane %v1701, 4
    %v1704 = vshll.u32 %v1499, 16
    %v1706 = vrot.slane %v1704, 5
    %v1707 = vsel %vm218, %v1702, %v1706
    %v1709 = vshrl.u32 %v1500, 16
    %v1711 = vrot.slane %v1709, 4
    %v1712 = vshll.u32 %v1500, 16
    %v1714 = vrot.slane %v1712, 5
    %v1715 = vor.u32 %v1711, %v1714
    %v1716 = vrot.slane %v1715, 4
    %v1718 = vshll.u32 %v1501, 16
    %v1720 = vrot.slane %v1718, 5
    %v1721 = vsel %vm218, %v1716, %v1720
    %v1723 = vshrl.u32 %v1502, 16
    %v1725 = vrot.slane %v1723, 4
    %v1726 = vshll.u32 %v1502, 16
    %v1728 = vrot.slane %v1726, 5
    %v1729 = vor.u32 %v1725, %v1728
    %v1730 = vrot.slane %v1729, 4
    %v1732 = vshll.u32 %v1503, 16
    %v1734 = vrot.slane %v1732, 5
    %v1735 = vsel %vm218, %v1730, %v1734
    %v1737 = vshrl.u32 %v1477, 16
    %v1739 = vrot.slane %v1737, 4
    %v1740 = vshll.u32 %v1477, 16
    %v1742 = vrot.slane %v1740, 5
    %v1743 = vor.u32 %v1739, %v1742
    %v1744 = vrot.slane %v1743, 4
    %v1746 = vshll.u32 %v1478, 16
    %v1748 = vrot.slane %v1746, 5
    %v1749 = vsel %vm218, %v1744, %v1748
    %v1758 = vunpack.c.l.b16 %v1461
    %v1759 = vunpack.c.l.b16 %v1463
    %v1760 = vunpack.c.l.b16 %v1465
    %v1761 = vunpack.c.l.b16 %v1467
    %v1762 = vunpack.c.l.b16 %v1469
    %v1763 = vunpack.c.l.b16 %v1471
    %v1764 = vunpack.c.l.b16 %v1473
    %v1765 = vunpack.c.l.b16 %v1475
    %v1766 = vpack.c.b16 %v1759, %v1758
    %v1767 = vpack.c.b16 %v1761, %v1760
    %v1768 = vpack.c.b16 %v1763, %v1762
    %v1769 = vpack.c.b16 %v1765, %v1764
    %v1782 = vunpack.c.l.b16 %v1479
    %v1783 = vunpack.c.l.b16 %v1480
    %v1784 = vunpack.c.l.b16 %v1481
    %v1785 = vunpack.c.l.b16 %v1482
    %v1786 = vunpack.c.l.b16 %v1483
    %v1787 = vunpack.c.l.b16 %v1484
    %v1788 = vunpack.c.l.b16 %v1485
    %v1789 = vunpack.c.l.b16 %v1486
    %v1790 = vpack.c.b16 %v1783, %v1782
    %v1791 = vpack.c.b16 %v1785, %v1784
    %v1792 = vpack.c.b16 %v1787, %v1786
    %v1793 = vpack.c.b16 %v1789, %v1788
    %v1798 = vunpack.c.l.b16 %v1525
    %v1799 = vunpack.c.l.b16 %v1539
    %v1800 = vunpack.c.l.b16 %v1553
    %v1801 = vunpack.c.l.b16 %v1567
    %v1802 = vunpack.c.l.b16 %v1581
    %v1803 = vunpack.c.l.b16 %v1595
    %v1804 = vunpack.c.l.b16 %v1609
    %v1805 = vunpack.c.l.b16 %v1623
    %v1806 = vpack.c.b16 %v1799, %v1798
    %v1807 = vpack.c.b16 %v1801, %v1800
    %v1808 = vpack.c.b16 %v1803, %v1802
    %v1809 = vpack.c.b16 %v1805, %v1804
    %v1822 = vunpack.c.l.b16 %v1488
    %v1823 = vunpack.c.l.b16 %v1490
    %v1824 = vunpack.c.l.b16 %v1492
    %v1825 = vunpack.c.l.b16 %v1494
    %v1826 = vunpack.c.l.b16 %v1496
    %v1827 = vunpack.c.l.b16 %v1498
    %v1828 = vunpack.c.l.b16 %v1500
    %v1829 = vunpack.c.l.b16 %v1502
    %v1830 = vpack.c.b16 %v1823, %v1822
    %v1831 = vpack.c.b16 %v1825, %v1824
    %v1832 = vpack.c.b16 %v1827, %v1826
    %v1833 = vpack.c.b16 %v1829, %v1828
    %v1846 = vunpack.c.l.b16 %v1504
    %v1847 = vunpack.c.l.b16 %v1505
    %v1848 = vunpack.c.l.b16 %v1506
    %v1849 = vunpack.c.l.b16 %v1507
    %v1850 = vunpack.c.l.b16 %v1508
    %v1851 = vunpack.c.l.b16 %v1509
    %v1852 = vunpack.c.l.b16 %v1510
    %v1853 = vunpack.c.l.b16 %v1511
    %v1854 = vpack.c.b16 %v1847, %v1846
    %v1855 = vpack.c.b16 %v1849, %v1848
    %v1856 = vpack.c.b16 %v1851, %v1850
    %v1857 = vpack.c.b16 %v1853, %v1852
    %v1862 = vunpack.c.l.b16 %v1637
    %v1863 = vunpack.c.l.b16 %v1651
    %v1864 = vunpack.c.l.b16 %v1665
    %v1865 = vunpack.c.l.b16 %v1679
    %v1866 = vunpack.c.l.b16 %v1693
    %v1867 = vunpack.c.l.b16 %v1707
    %v1868 = vunpack.c.l.b16 %v1721
    %v1869 = vunpack.c.l.b16 %v1735
    %v1870 = vpack.c.b16 %v1863, %v1862
    %v1871 = vpack.c.b16 %v1865, %v1864
    %v1872 = vpack.c.b16 %v1867, %v1866
    %v1873 = vpack.c.b16 %v1869, %v1868
    %v1879 = vunpack.c.l.b16 %v1477
    %v1880 = vpack.c.b16 %v1760, %v1759
    %v1881 = vpack.c.b16 %v1762, %v1761
    %v1882 = vpack.c.b16 %v1764, %v1763
    %v1883 = vpack.c.b16 %v1879, %v1765
    %v1889 = vunpack.c.l.b16 %v1487
    %v1890 = vpack.c.b16 %v1784, %v1783
    %v1891 = vpack.c.b16 %v1786, %v1785
    %v1892 = vpack.c.b16 %v1788, %v1787
    %v1893 = vpack.c.b16 %v1889, %v1789
    %v1898 = vunpack.c.l.b16 %v1749
    %v1899 = vpack.c.b16 %v1800, %v1799
    %v1900 = vpack.c.b16 %v1802, %v1801
    %v1901 = vpack.c.b16 %v1804, %v1803
    %v1902 = vpack.c.b16 %v1898, %v1805
    %1907 = vmatprep.subr.bf16.mxu0 0
    %1908 = vmatpush1.bf16.msra.mxu0 %v909
    %1909 = vmatprep.subr.bf16.mxu0 0
    %1910 = vmatpush1.bf16.msra.mxu0 %v908
    %1911 = vmatprep.subr.bf16.mxu0 0
    %1912 = vmatpush1.bf16.msra.mxu0 %v907
    %1913 = vmatprep.subr.bf16.mxu0 0
    %1914 = vmatpush1.bf16.msra.mxu0 %v906
    %1915 = vmatprep.subr.bf16.mxu0 0
    %1916 = vmatpush1.bf16.msra.mxu0 %v905
    %1917 = vmatprep.subr.bf16.mxu0 0
    %1918 = vmatpush1.bf16.msra.mxu0 %v904
    %1919 = vmatprep.subr.bf16.mxu0 0
    %1920 = vmatpush1.bf16.msra.mxu0 %v903
    %1921 = vmatprep.subr.bf16.mxu0 0
    %1922 = vmatpush1.bf16.msra.mxu0 %v902
    %1923 = vmatprep.subr.bf16.mxu0 0
    %1924 = vmatpush2.bf16.msra.mxu0 %v917
    %1925 = vmatprep.subr.bf16.mxu0 0
    %1926 = vmatpush2.bf16.msra.mxu0 %v916
    %1927 = vmatprep.subr.bf16.mxu0 0
    %1928 = vmatpush2.bf16.msra.mxu0 %v915
    %1929 = vmatprep.subr.bf16.mxu0 0
    %1930 = vmatpush2.bf16.msra.mxu0 %v914
    %1931 = vmatprep.subr.bf16.mxu0 0
    %1932 = vmatpush2.bf16.msra.mxu0 %v913
    %1933 = vmatprep.subr.bf16.mxu0 0
    %1934 = vmatpush2.bf16.msra.mxu0 %v912
    %1935 = vmatprep.subr.bf16.mxu0 0
    %1936 = vmatpush2.bf16.msra.mxu0 %v911
    %1937 = vmatprep.subr.bf16.mxu0 0
    %1938 = vmatpush2.bf16.msra.mxu0 %v910
    %1939 = vmatprep.mubr.bf16.mxu0 %v1790
    %1940 = vmatmul.mubr.bf16.gmra.mxu0 %v1766
    %v1941 = vpop.f32.mrf.mxu0
    %v1942 = vadd.f32 0.0, %v1941
    %v1943 = vpop.f32.mrf.mxu0
    %v1944 = vpop.f32.mrf.mxu0
    %v1945 = vadd.f32 0.0, %v1944
    %v1946 = vpop.f32.mrf.mxu0
    %1947 = vmatprep.mubr.bf16.mxu0 %v1791
    %1948 = vmatmul.mubr.bf16.gmra.mxu0 %v1767
    %v1949 = vpop.f32.mrf.mxu0
    %v1950 = vadd.f32 0.0, %v1949
    %v1951 = vpop.f32.mrf.mxu0
    %v1952 = vpop.f32.mrf.mxu0
    %v1953 = vadd.f32 0.0, %v1952
    %v1954 = vpop.f32.mrf.mxu0
    %1955 = vmatprep.mubr.bf16.mxu0 %v1792
    %1956 = vmatmul.mubr.bf16.gmra.mxu0 %v1768
    %v1957 = vpop.f32.mrf.mxu0
    %v1958 = vadd.f32 0.0, %v1957
    %v1959 = vpop.f32.mrf.mxu0
    %v1960 = vpop.f32.mrf.mxu0
    %v1961 = vadd.f32 0.0, %v1960
    %v1962 = vpop.f32.mrf.mxu0
    %1963 = vmatprep.mubr.bf16.mxu0 %v1793
    %1964 = vmatmul.mubr.bf16.gmra.mxu0 %v1769
    %v1965 = vpop.f32.mrf.mxu0
    %v1966 = vadd.f32 0.0, %v1965
    %v1967 = vpop.f32.mrf.mxu0
    %v1968 = vpop.f32.mrf.mxu0
    %v1969 = vadd.f32 0.0, %v1968
    %v1970 = vpop.f32.mrf.mxu0
    %1971 = vdwg.mxu0
    %1972 = vmatprep.subr.bf16.mxu0 0
    %1973 = vmatpush1.bf16.msra.mxu0 %v925
    %1974 = vmatprep.subr.bf16.mxu0 0
    %1975 = vmatpush1.bf16.msra.mxu0 %v924
    %1976 = vmatprep.subr.bf16.mxu0 0
    %1977 = vmatpush1.bf16.msra.mxu0 %v923
    %1978 = vmatprep.subr.bf16.mxu0 0
    %1979 = vmatpush1.bf16.msra.mxu0 %v922
    %1980 = vmatprep.subr.bf16.mxu0 0
    %1981 = vmatpush1.bf16.msra.mxu0 %v921
    %1982 = vmatprep.subr.bf16.mxu0 0
    %1983 = vmatpush1.bf16.msra.mxu0 %v920
    %1984 = vmatprep.subr.bf16.mxu0 0
    %1985 = vmatpush1.bf16.msra.mxu0 %v919
    %1986 = vmatprep.subr.bf16.mxu0 0
    %1987 = vmatpush1.bf16.msra.mxu0 %v918
    %1988 = vmatprep.subr.bf16.mxu0 0
    %1989 = vmatpush2.bf16.msra.mxu0 %v933
    %1990 = vmatprep.subr.bf16.mxu0 0
    %1991 = vmatpush2.bf16.msra.mxu0 %v932
    %1992 = vmatprep.subr.bf16.mxu0 0
    %1993 = vmatpush2.bf16.msra.mxu0 %v931
    %1994 = vmatprep.subr.bf16.mxu0 0
    %1995 = vmatpush2.bf16.msra.mxu0 %v930
    %1996 = vmatprep.subr.bf16.mxu0 0
    %1997 = vmatpush2.bf16.msra.mxu0 %v929
    %1998 = vmatprep.subr.bf16.mxu0 0
    %1999 = vmatpush2.bf16.msra.mxu0 %v928
    %2000 = vmatprep.subr.bf16.mxu0 0
    %2001 = vmatpush2.bf16.msra.mxu0 %v927
    %2002 = vmatprep.subr.bf16.mxu0 0
    %2003 = vmatpush2.bf16.msra.mxu0 %v926
    %2004 = vmatprep.mubr.bf16.mxu0 %v1830
    %2005 = vmatmul.mubr.bf16.gmra.mxu0 %v1806
    %v2006 = vpop.f32.mrf.mxu0
    %v2007 = vadd.f32 %v1942, %v2006
    %v2008 = vpop.f32.mrf.mxu0
    %v2009 = vpop.f32.mrf.mxu0
    %v2010 = vadd.f32 %v1945, %v2009
    %v2011 = vpop.f32.mrf.mxu0
    %2012 = vmatprep.mubr.bf16.mxu0 %v1831
    %2013 = vmatmul.mubr.bf16.gmra.mxu0 %v1807
    %v2014 = vpop.f32.mrf.mxu0
    %v2015 = vadd.f32 %v1950, %v2014
    %v2016 = vpop.f32.mrf.mxu0
    %v2017 = vpop.f32.mrf.mxu0
    %v2018 = vadd.f32 %v1953, %v2017
    %v2019 = vpop.f32.mrf.mxu0
    %2020 = vmatprep.mubr.bf16.mxu0 %v1832
    %2021 = vmatmul.mubr.bf16.gmra.mxu0 %v1808
    %v2022 = vpop.f32.mrf.mxu0
    %v2023 = vadd.f32 %v1958, %v2022
    %v2024 = vpop.f32.mrf.mxu0
    %v2025 = vpop.f32.mrf.mxu0
    %v2026 = vadd.f32 %v1961, %v2025
    %v2027 = vpop.f32.mrf.mxu0
    %2028 = vmatprep.mubr.bf16.mxu0 %v1833
    %2029 = vmatmul.mubr.bf16.gmra.mxu0 %v1809
    %v2030 = vpop.f32.mrf.mxu0
    %v2031 = vadd.f32 %v1966, %v2030
    %v2032 = vpop.f32.mrf.mxu0
    %v2033 = vpop.f32.mrf.mxu0
    %v2034 = vadd.f32 %v1969, %v2033
    %v2035 = vpop.f32.mrf.mxu0
    %2036 = vdwg.mxu0
    %2037 = vmatprep.subr.bf16.mxu0 0
    %2038 = vmatpush1.bf16.msra.mxu0 %v941
    %2039 = vmatprep.subr.bf16.mxu0 0
    %2040 = vmatpush1.bf16.msra.mxu0 %v940
    %2041 = vmatprep.subr.bf16.mxu0 0
    %2042 = vmatpush1.bf16.msra.mxu0 %v939
    %2043 = vmatprep.subr.bf16.mxu0 0
    %2044 = vmatpush1.bf16.msra.mxu0 %v938
    %2045 = vmatprep.subr.bf16.mxu0 0
    %2046 = vmatpush1.bf16.msra.mxu0 %v937
    %2047 = vmatprep.subr.bf16.mxu0 0
    %2048 = vmatpush1.bf16.msra.mxu0 %v936
    %2049 = vmatprep.subr.bf16.mxu0 0
    %2050 = vmatpush1.bf16.msra.mxu0 %v935
    %2051 = vmatprep.subr.bf16.mxu0 0
    %2052 = vmatpush1.bf16.msra.mxu0 %v934
    %2053 = vmatprep.subr.bf16.mxu0 0
    %2054 = vmatpush2.bf16.msra.mxu0 %v949
    %2055 = vmatprep.subr.bf16.mxu0 0
    %2056 = vmatpush2.bf16.msra.mxu0 %v948
    %2057 = vmatprep.subr.bf16.mxu0 0
    %2058 = vmatpush2.bf16.msra.mxu0 %v947
    %2059 = vmatprep.subr.bf16.mxu0 0
    %2060 = vmatpush2.bf16.msra.mxu0 %v946
    %2061 = vmatprep.subr.bf16.mxu0 0
    %2062 = vmatpush2.bf16.msra.mxu0 %v945
    %2063 = vmatprep.subr.bf16.mxu0 0
    %2064 = vmatpush2.bf16.msra.mxu0 %v944
    %2065 = vmatprep.subr.bf16.mxu0 0
    %2066 = vmatpush2.bf16.msra.mxu0 %v943
    %2067 = vmatprep.subr.bf16.mxu0 0
    %2068 = vmatpush2.bf16.msra.mxu0 %v942
    %2069 = vmatprep.mubr.bf16.mxu0 %v1870
    %2070 = vmatmul.mubr.bf16.gmra.mxu0 %v1854
    %v2071 = vpop.f32.mrf.mxu0
    %v2072 = vadd.f32 %v2007, %v2071
    %v2073 = vpop.f32.mrf.mxu0
    %v2074 = vpop.f32.mrf.mxu0
    %v2075 = vadd.f32 %v2010, %v2074
    %v2076 = vpop.f32.mrf.mxu0
    %2077 = vmatprep.mubr.bf16.mxu0 %v1871
    %2078 = vmatmul.mubr.bf16.gmra.mxu0 %v1855
    %v2079 = vpop.f32.mrf.mxu0
    %v2080 = vadd.f32 %v2015, %v2079
    %v2081 = vpop.f32.mrf.mxu0
    %v2082 = vpop.f32.mrf.mxu0
    %v2083 = vadd.f32 %v2018, %v2082
    %v2084 = vpop.f32.mrf.mxu0
    %2085 = vmatprep.mubr.bf16.mxu0 %v1872
    %2086 = vmatmul.mubr.bf16.gmra.mxu0 %v1856
    %v2087 = vpop.f32.mrf.mxu0
    %v2088 = vadd.f32 %v2023, %v2087
    %v2089 = vpop.f32.mrf.mxu0
    %v2090 = vpop.f32.mrf.mxu0
    %v2091 = vadd.f32 %v2026, %v2090
    %v2092 = vpop.f32.mrf.mxu0
    %2093 = vmatprep.mubr.bf16.mxu0 %v1873
    %2094 = vmatmul.mubr.bf16.gmra.mxu0 %v1857
    %v2095 = vpop.f32.mrf.mxu0
    %v2096 = vadd.f32 %v2031, %v2095
    %v2097 = vpop.f32.mrf.mxu0
    %v2098 = vpop.f32.mrf.mxu0
    %v2099 = vadd.f32 %v2034, %v2098
    %v2100 = vpop.f32.mrf.mxu0
    %2101 = vdwg.mxu0
    %2102 = vmatprep.subr.bf16.mxu0 0
    %2103 = vmatpush1.bf16.msra.mxu0 %v957
    %2104 = vmatprep.subr.bf16.mxu0 0
    %2105 = vmatpush1.bf16.msra.mxu0 %v956
    %2106 = vmatprep.subr.bf16.mxu0 0
    %2107 = vmatpush1.bf16.msra.mxu0 %v955
    %2108 = vmatprep.subr.bf16.mxu0 0
    %2109 = vmatpush1.bf16.msra.mxu0 %v954
    %2110 = vmatprep.subr.bf16.mxu0 0
    %2111 = vmatpush1.bf16.msra.mxu0 %v953
    %2112 = vmatprep.subr.bf16.mxu0 0
    %2113 = vmatpush1.bf16.msra.mxu0 %v952
    %2114 = vmatprep.subr.bf16.mxu0 0
    %2115 = vmatpush1.bf16.msra.mxu0 %v951
    %2116 = vmatprep.subr.bf16.mxu0 0
    %2117 = vmatpush1.bf16.msra.mxu0 %v950
    %2118 = vmatprep.subr.bf16.mxu0 0
    %2119 = vmatpush2.bf16.msra.mxu0 %v965
    %2120 = vmatprep.subr.bf16.mxu0 0
    %2121 = vmatpush2.bf16.msra.mxu0 %v964
    %2122 = vmatprep.subr.bf16.mxu0 0
    %2123 = vmatpush2.bf16.msra.mxu0 %v963
    %2124 = vmatprep.subr.bf16.mxu0 0
    %2125 = vmatpush2.bf16.msra.mxu0 %v962
    %2126 = vmatprep.subr.bf16.mxu0 0
    %2127 = vmatpush2.bf16.msra.mxu0 %v961
    %2128 = vmatprep.subr.bf16.mxu0 0
    %2129 = vmatpush2.bf16.msra.mxu0 %v960
    %2130 = vmatprep.subr.bf16.mxu0 0
    %2131 = vmatpush2.bf16.msra.mxu0 %v959
    %2132 = vmatprep.subr.bf16.mxu0 0
    %2133 = vmatpush2.bf16.msra.mxu0 %v958
    %2134 = vmatprep.mubr.bf16.mxu0 %v1890
    %2135 = vmatmul.mubr.bf16.gmra.mxu0 %v1880
    %v2136 = vpop.f32.mrf.mxu0
    %v2137 = vadd.f32 %v2072, %v2136
    %v2138 = vpop.f32.mrf.mxu0
    %v2139 = vpop.f32.mrf.mxu0
    %v2140 = vadd.f32 %v2075, %v2139
    %v2141 = vpop.f32.mrf.mxu0
    %2142 = vmatprep.mubr.bf16.mxu0 %v1891
    %2143 = vmatmul.mubr.bf16.gmra.mxu0 %v1881
    %v2144 = vpop.f32.mrf.mxu0
    %v2145 = vadd.f32 %v2080, %v2144
    %v2146 = vpop.f32.mrf.mxu0
    %v2147 = vpop.f32.mrf.mxu0
    %v2148 = vadd.f32 %v2083, %v2147
    %v2149 = vpop.f32.mrf.mxu0
    %2150 = vmatprep.mubr.bf16.mxu0 %v1892
    %2151 = vmatmul.mubr.bf16.gmra.mxu0 %v1882
    %v2152 = vpop.f32.mrf.mxu0
    %v2153 = vadd.f32 %v2088, %v2152
    %v2154 = vpop.f32.mrf.mxu0
    %v2155 = vpop.f32.mrf.mxu0
    %v2156 = vadd.f32 %v2091, %v2155
    %v2157 = vpop.f32.mrf.mxu0
    %2158 = vmatprep.mubr.bf16.mxu0 %v1893
    %2159 = vmatmul.mubr.bf16.gmra.mxu0 %v1883
    %v2160 = vpop.f32.mrf.mxu0
    %v2161 = vadd.f32 %v2096, %v2160
    %v2162 = vpop.f32.mrf.mxu0
    %v2163 = vpop.f32.mrf.mxu0
    %v2164 = vadd.f32 %v2099, %v2163
    %v2165 = vpop.f32.mrf.mxu0
    %2166 = vdwg.mxu0
    %2167 = vmatprep.subr.bf16.mxu0 0
    %2168 = vmatpush1.bf16.msra.mxu0 %v973
    %2169 = vmatprep.subr.bf16.mxu0 0
    %2170 = vmatpush1.bf16.msra.mxu0 %v972
    %2171 = vmatprep.subr.bf16.mxu0 0
    %2172 = vmatpush1.bf16.msra.mxu0 %v971
    %2173 = vmatprep.subr.bf16.mxu0 0
    %2174 = vmatpush1.bf16.msra.mxu0 %v970
    %2175 = vmatprep.subr.bf16.mxu0 0
    %2176 = vmatpush1.bf16.msra.mxu0 %v969
    %2177 = vmatprep.subr.bf16.mxu0 0
    %2178 = vmatpush1.bf16.msra.mxu0 %v968
    %2179 = vmatprep.subr.bf16.mxu0 0
    %2180 = vmatpush1.bf16.msra.mxu0 %v967
    %2181 = vmatprep.subr.bf16.mxu0 0
    %2182 = vmatpush1.bf16.msra.mxu0 %v966
    %2183 = vmatprep.subr.bf16.mxu0 0
    %2184 = vmatpush2.bf16.msra.mxu0 0
    %2185 = vmatprep.subr.bf16.mxu0 0
    %2186 = vmatpush2.bf16.msra.mxu0 0
    %2187 = vmatprep.subr.bf16.mxu0 0
    %2188 = vmatpush2.bf16.msra.mxu0 0
    %2189 = vmatprep.subr.bf16.mxu0 0
    %2190 = vmatpush2.bf16.msra.mxu0 0
    %2191 = vmatprep.subr.bf16.mxu0 0
    %2192 = vmatpush2.bf16.msra.mxu0 0
    %2193 = vmatprep.subr.bf16.mxu0 0
    %2194 = vmatpush2.bf16.msra.mxu0 0
    %2195 = vmatprep.subr.bf16.mxu0 0
    %2196 = vmatpush2.bf16.msra.mxu0 0
    %2197 = vmatprep.subr.bf16.mxu0 0
    %2198 = vmatpush2.bf16.msra.mxu0 0
    %2199 = vmatprep.mubr.bf16.mxu0 0
    %2200 = vmatmul.mubr.bf16.gmra.mxu0 %v1899
    %v2201 = vpop.f32.mrf.mxu0
    %v2202 = vadd.f32 %v2137, %v2201
    %v2203 = vpop.f32.mrf.mxu0
    %v2204 = vpop.f32.mrf.mxu0
    %v2205 = vadd.f32 %v2140, %v2204
    %v2206 = vpop.f32.mrf.mxu0
    %2207 = vmatprep.mubr.bf16.mxu0 0
    %2208 = vmatmul.mubr.bf16.gmra.mxu0 %v1900
    %v2209 = vpop.f32.mrf.mxu0
    %v2210 = vadd.f32 %v2145, %v2209
    %v2211 = vpop.f32.mrf.mxu0
    %v2212 = vpop.f32.mrf.mxu0
    %v2213 = vadd.f32 %v2148, %v2212
    %v2214 = vpop.f32.mrf.mxu0
    %2215 = vmatprep.mubr.bf16.mxu0 0
    %2216 = vmatmul.mubr.bf16.gmra.mxu0 %v1901
    %v2217 = vpop.f32.mrf.mxu0
    %v2218 = vadd.f32 %v2153, %v2217
    %v2219 = vpop.f32.mrf.mxu0
    %v2220 = vpop.f32.mrf.mxu0
    %v2221 = vadd.f32 %v2156, %v2220
    %v2222 = vpop.f32.mrf.mxu0
    %2223 = vmatprep.mubr.bf16.mxu0 0
    %2224 = vmatmul.mubr.bf16.gmra.mxu0 %v1902
    %v2225 = vpop.f32.mrf.mxu0
    %v2226 = vadd.f32 %v2161, %v2225
    %v2227 = vpop.f32.mrf.mxu0
    %v2228 = vpop.f32.mrf.mxu0
    %v2229 = vadd.f32 %v2164, %v2228
    %v2230 = vpop.f32.mrf.mxu0
    %2231 = vdwg.mxu0
    %v2232 = vadd.f32 %v2202, %v2205
    %v2233 = vadd.f32 %v2232, %v2210
    %v2234 = vadd.f32 %v2233, %v2213
    %v2235 = vadd.f32 %v2234, %v2218
    %v2236 = vadd.f32 %v2235, %v2221
    %v2237 = vadd.f32 %v2236, %v2226
    %v2238 = vadd.f32 %v2237, %v2229
    %2239 = vadd.xlane.f32.xlu0 %v2238
    %v2240 = vpop.xlane.xlu0 %2239
    %v2241 = vrot.slane %v2240, 4
    %v2242 = vadd.f32 %v2240, %v2241
    %v2243 = vrot.slane %v2242, 2
    %v2244 = vadd.f32 %v2242, %v2243
    %v2245 = vrot.slane %v2244, 1
    %v2246 = vadd.f32 %v2244, %v2245
    %s2247 = vtos %v2246
    %v2248 = vmul.f32 %v2202, %v2202
    %v2249 = vmul.f32 %v2205, %v2205
    %v2250 = vmul.f32 %v2210, %v2210
    %v2251 = vmul.f32 %v2213, %v2213
    %v2252 = vmul.f32 %v2218, %v2218
    %v2253 = vmul.f32 %v2221, %v2221
    %v2254 = vmul.f32 %v2226, %v2226
    %v2255 = vmul.f32 %v2229, %v2229
    %v2256 = vadd.f32 %v2248, %v2249
    %v2257 = vadd.f32 %v2256, %v2250
    %v2258 = vadd.f32 %v2257, %v2251
    %v2259 = vadd.f32 %v2258, %v2252
    %v2260 = vadd.f32 %v2259, %v2253
    %v2261 = vadd.f32 %v2260, %v2254
    %v2262 = vadd.f32 %v2261, %v2255
    %2263 = vadd.xlane.f32.xlu0 %v2262
    %v2264 = vpop.xlane.xlu0 %2263
    %v2265 = vrot.slane %v2264, 4
    %v2266 = vadd.f32 %v2264, %v2265
    %v2267 = vrot.slane %v2266, 2
    %v2268 = vadd.f32 %v2266, %v2267
    %v2269 = vrot.slane %v2268, 1
    %v2270 = vadd.f32 %v2268, %v2269
    %s2271 = vtos %v2270
    %s2272 = smul.f32 %s2247, 0.001953125
    %s2273 = smul.f32 %s2271, 0.001953125
    %s2274 = smul.f32 %s2272, %s2272
    %s2275 = ssub.f32 %s2273, %s2274
    %s2276 = sadd.f32 %s2275, 1e-05
    %v2277 = vstv %s2276
    %v2278 = vrsqrt.pop %v2277
    %s2279 = vtos %v2278
    %v2280 = vstv %s2279
    %v2281 = vmul.f32 %v163, %v2280
    %v2282 = vstv %s2272
    %v2283 = vmul.f32 %v2282, %v2281
    %v2284 = vsub.f32 %v164, %v2283
    %v2286 = vlaneseq
    %v2287 = vshrl.u32 %v2286, 7
    %v2288 = vsub.s32 0, %v2287
    %v2289 = vrot.slane %v2281, %v2288
    %v2291 = vmul.f32 %v2202, %v2289
    %v2292 = vmul.f32 %v2205, %v2289
    %v2293 = vmul.f32 %v2210, %v2289
    %v2294 = vmul.f32 %v2213, %v2289
    %v2295 = vmul.f32 %v2218, %v2289
    %v2296 = vmul.f32 %v2221, %v2289
    %v2297 = vmul.f32 %v2226, %v2289
    %v2298 = vmul.f32 %v2229, %v2289
    %v2300 = vlaneseq
    %v2301 = vshrl.u32 %v2300, 7
    %v2302 = vsub.s32 0, %v2301
    %v2303 = vrot.slane %v2284, %v2302
    %v2305 = vadd.f32 %v2291, %v2303
    %v2306 = vadd.f32 %v2292, %v2303
    %v2307 = vadd.f32 %v2293, %v2303
    %v2308 = vadd.f32 %v2294, %v2303
    %v2309 = vadd.f32 %v2295, %v2303
    %v2310 = vadd.f32 %v2296, %v2303
    %v2311 = vadd.f32 %v2297, %v2303
    %v2312 = vadd.f32 %v2298, %v2303
    %s2313 = scalar_lea.vmem [#allocation2], 64
    %2314 = vst [vmem:[%s2313] sm:$0xff] %v2305
    %2315 = vst [vmem:[%s2313 + $0x8] sm:$0xff] %v2306
    %2316 = vst [vmem:[%s2313 + $0x10] sm:$0xff] %v2307
    %2317 = vst [vmem:[%s2313 + $0x18] sm:$0xff] %v2308
    %2318 = vst [vmem:[%s2313 + $0x20] sm:$0xff] %v2309
    %2319 = vst [vmem:[%s2313 + $0x28] sm:$0xff] %v2310
    %2320 = vst [vmem:[%s2313 + $0x30] sm:$0xff] %v2311
    %2321 = vst [vmem:[%s2313 + $0x38] sm:$0xff] %v2312
    // Predicated region
    $region18: #{tpu_custom_call.1} parent=1 // pred_check
      _
    $region19: #{tpu_custom_call.1} parent=1 // pred_check_branch
      %2323 = sbr.rel (0) target = $region21
    $region20: #{tpu_custom_call.1} parent=1 // pred_region
      %s2325 = ssub.s32 2048, 2048
      %2326 = vsyncadd [#allocation3], %s2325
      %s2327 = sshll.u32 [#allocation2], 4
      %s2328 = int_to_ptr.vmem [resolvable:$true] %s2327
      %2333 = dma.vmem_to_hbm [thread:$0]  %s2328, 2048, %s4, [#allocation3], 128, 128, 8
    $region21: #{tpu_custom_call.1} parent=1 // pred_fallthru
      _
    // Predicated region
    $region22: #{tpu_custom_call.1} parent=1 // pred_check
      _
    $region23: #{tpu_custom_call.1} parent=1 // pred_check_branch
      %2335 = sbr.rel (0) target = $region25
    $region24: #{tpu_custom_call.1} parent=1 // pred_region
      %2336 = dma.done [#allocation3], 2048
    $region25: #{tpu_custom_call.1} parent=1 // pred_fallthru
      _
    %2337 = vsyncpa [#allocation3], 1

</llo_original>
